<compile_context>
chip_gen: v5e
topology: v5e:2x2
jax: 0.10.0
libtpu: 0.0.40
codegen_flags: <defaults>
</compile_context>

<pallas_src>
import functools
import math

import jax
import jax.numpy as jnp
from jax.experimental import pallas as pl
from jax.experimental.pallas import tpu as pltpu

NEG_SLOPE = 0.01     # F.leaky_relu default negative_slope
NORM_EPS = 1e-12     # F.normalize default eps


def _leaky_relu(x):
    return jnp.where(x >= 0, x, NEG_SLOPE * x)


def ngcf_layer_kernel(adj_ref, ego_rhs_ref, ego_row_ref,
                      wgc_ref, bgc_ref, wbi_ref, bbi_ref,
                      ego_out_ref, norm_out_ref, side_acc_ref):
    """One (row-block, reduction-block) grid step of an NGCF layer."""
    k = pl.program_id(1)

    @pl.when(k == 0)
    def _():
        side_acc_ref[...] = jnp.zeros_like(side_acc_ref)

    # side += adj_tile @ ego_tile     (bf16 operands, f32 accumulation on MXU)
    side_acc_ref[...] += jnp.dot(adj_ref[...], ego_rhs_ref[...],
                                 preferred_element_type=jnp.float32)

    @pl.when(k == pl.num_programs(1) - 1)
    def _():
        side = side_acc_ref[...]                       # (TM, Din) f32
        ego_row = ego_row_ref[...]                     # (TM, Din) f32

        # sum_embeddings = leaky_relu(GC_Linear(side))
        sum_emb = _leaky_relu(
            jnp.dot(side.astype(jnp.bfloat16), wgc_ref[...],
                    preferred_element_type=jnp.float32) + bgc_ref[...])

        # bi_embeddings = leaky_relu(Bi_Linear(ego * side))
        bi = (ego_row * side).astype(jnp.bfloat16)
        bi_emb = _leaky_relu(
            jnp.dot(bi, wbi_ref[...],
                    preferred_element_type=jnp.float32) + bbi_ref[...])

        new_ego = sum_emb + bi_emb
        # TODO(synk): nn.Dropout is active only in training mode; eval-mode
        # (identity) is implemented here.

        # norm_embeddings = F.normalize(new_ego, p=2, dim=1)
        # rsqrt(max(sq, eps^2)) == 1 / max(||x||, eps), runs on the EUP slot.
        sq = jnp.sum(new_ego * new_ego, axis=1, keepdims=True)
        inv_norm = jax.lax.rsqrt(jnp.maximum(sq, NORM_EPS * NORM_EPS))

        ego_out_ref[...] = new_ego
        norm_out_ref[...] = new_ego * inv_norm


def _pick_tile(n, target, align):
    """Largest t <= target with t % align == 0 and n % t == 0; else full n."""
    if n <= align or n % align != 0:
        return n
    t = min(target, n)
    t -= t % align
    while t >= align and n % t != 0:
        t -= align
    return t if t >= align else n


def ngcf_layer(adj_bf16, ego_f32, ego_bf16, w_gc_bf16, b_gc, w_bi_bf16, b_bi,
               *, tm_target=256, tk_target=512):
    """One NGCF layer.

    adj_bf16: (N,N) bf16   ego_f32/ego_bf16: (N,Din)
    w_*_bf16: (Din,Dout) bf16   b_*: (1,Dout) f32
    Returns (ego_new_f32, norm_f32), both (N, Dout).
    """
    n, d_in = ego_f32.shape
    d_out = w_gc_bf16.shape[1]

    tm = _pick_tile(n, tm_target, 8)       # row tile (sublane-aligned)
    tk = _pick_tile(n, tk_target, 128)     # reduction tile (lane-aligned)
    grid = (n // tm, n // tk)

    # VMEM footprint estimate (double-buffered inputs + outputs + scratch).
    vmem_bytes = (
        2 * tm * tk * 2            # adj tile (bf16)
        + 2 * tk * d_in * 2        # ego RHS tile (bf16)
        + 2 * tm * d_in * 4        # ego row tile (f32)
        + 2 * 2 * d_in * d_out * 2  # W_gc, W_bi (bf16, resident)
        + 2 * 2 * d_out * 4        # biases (f32)
        + 2 * 2 * tm * d_out * 4   # two outputs (f32)
        + tm * d_in * 4            # side accumulator scratch (f32)
    )
    vmem_limit = int(min(max(2 * vmem_bytes, 32 * 1024 * 1024),
                         64 * 1024 * 1024))   # v7x-safe cap

    cost = pl.CostEstimate(
        flops=int(2 * n * n * d_in            # adj @ ego
                  + 4 * n * d_in * d_out      # two linear layers
                  + 8 * n * d_out),           # elementwise epilogue
        transcendentals=int(n),               # one rsqrt per row
        bytes_accessed=int(n * n * 2                      # adj (bf16)
                           + grid[0] * n * d_in * 2       # ego RHS re-streamed
                           + n * d_in * 4                 # ego rows
                           + 2 * d_in * d_out * 2 + 2 * d_out * 4
                           + 2 * n * d_out * 4),          # outputs
    )

    grid_spec = pltpu.PrefetchScalarGridSpec(
        num_scalar_prefetch=0,
        grid=grid,
        in_specs=[
            pl.BlockSpec((tm, tk), lambda i, k: (i, k)),       # adj (bf16)
            pl.BlockSpec((tk, d_in), lambda i, k: (k, 0)),     # ego RHS (bf16)
            pl.BlockSpec((tm, d_in), lambda i, k: (i, 0)),     # ego rows (f32)
            pl.BlockSpec((d_in, d_out), lambda i, k: (0, 0)),  # W_gc (resident)
            pl.BlockSpec((1, d_out), lambda i, k: (0, 0)),     # b_gc
            pl.BlockSpec((d_in, d_out), lambda i, k: (0, 0)),  # W_bi (resident)
            pl.BlockSpec((1, d_out), lambda i, k: (0, 0)),     # b_bi
        ],
        out_specs=(
            pl.BlockSpec((tm, d_out), lambda i, k: (i, 0)),    # new ego
            pl.BlockSpec((tm, d_out), lambda i, k: (i, 0)),    # normalized
        ),
        scratch_shapes=[pltpu.VMEM((tm, d_in), jnp.float32)],  # side accumulator
    )

    ego_out, norm_out = pl.pallas_call(
        ngcf_layer_kernel,
        out_shape=(
            jax.ShapeDtypeStruct((n, d_out), jnp.float32),
            jax.ShapeDtypeStruct((n, d_out), jnp.float32),
        ),
        grid_spec=grid_spec,
        compiler_params=pltpu.CompilerParams(
            dimension_semantics=("parallel", "arbitrary"),
            vmem_limit_bytes=vmem_limit),
        cost_estimate=cost,
    )(adj_bf16, ego_bf16, ego_f32, w_gc_bf16, b_gc, w_bi_bf16, b_bi)
    return ego_out, norm_out


def ngcf_forward(adj, user_emb, item_emb, params, *, tm_target=256, tk_target=512):
    """Full NGCFDL.forward. Returns (u_g_embeddings, i_g_embeddings)."""
    n_users = user_emb.shape[0]
    ego = jnp.concatenate([user_emb, item_emb], axis=0).astype(jnp.float32)

    # Cast MXU operands to bf16 once (f32 accumulation happens in-kernel).
    adj_bf16 = adj.astype(jnp.bfloat16)
    params_bf16 = [(w_gc.astype(jnp.bfloat16), b_gc.astype(jnp.float32),
                    w_bi.astype(jnp.bfloat16), b_bi.astype(jnp.float32))
                   for (w_gc, b_gc, w_bi, b_bi) in params]

    # TODO(synk): real NGCF adjacency is ~99.9% sparse; a scalar-prefetched
    # block-index list (PrefetchScalarGridSpec) could skip all-zero adj tiles.
    # TODO(synk): each layer's norm output could be written straight into the
    # final concat slab via an offset out_spec; plain jnp.concatenate kept.

    all_embeddings = [ego]
    for (w_gc, b_gc, w_bi, b_bi) in params_bf16:
        ego_bf16 = ego.astype(jnp.bfloat16)
        ego, norm = ngcf_layer(adj_bf16, ego, ego_bf16, w_gc, b_gc, w_bi, b_bi,
                               tm_target=tm_target, tk_target=tk_target)
        all_embeddings.append(norm)
    all_embeddings = jnp.concatenate(all_embeddings, axis=1)
    return all_embeddings[:n_users], all_embeddings[n_users:]


def ngcf_reference(adj, user_emb, item_emb, params):
    """Pure-JAX f32 reference (mirrors the PyTorch forward, eval mode)."""
    ego = jnp.concatenate([user_emb, item_emb], axis=0)
    outs = [ego]
    for (w_gc, b_gc, w_bi, b_bi) in params:
        side = adj @ ego
        sum_emb = jax.nn.leaky_relu(side @ w_gc + b_gc, NEG_SLOPE)
        bi_emb = jax.nn.leaky_relu((ego * side) @ w_bi + b_bi, NEG_SLOPE)
        ego = sum_emb + bi_emb
        nrm = jnp.maximum(jnp.linalg.norm(ego, axis=1, keepdims=True), NORM_EPS)
        outs.append(ego / nrm)
    out = jnp.concatenate(outs, axis=1)
    return out[:user_emb.shape[0]], out[user_emb.shape[0]:]


def init_linear(key, d_in, d_out):
    """nn.Linear init U(-1/sqrt(d_in), 1/sqrt(d_in)); weight stored (d_in,d_out)."""
    kw, kb = jax.random.split(key)
    bound = 1.0 / math.sqrt(d_in)
    w = jax.random.uniform(kw, (d_in, d_out), jnp.float32, -bound, bound)
    b = jax.random.uniform(kb, (1, d_out), jnp.float32, -bound, bound)
    return w, b


if __name__ == "__main__":
    # Small shapes consistent with the module: embedding_dim is hard-coded to
    # 768 in NGCFDL.__init__; two NGCF layers of width 128.  N chosen so the
    # tiled grid path (accumulation + epilogue) is actually exercised.
    n_users, n_items = 256, 256
    embedding_dim = 768
    weight_size = [128, 128]
    n_total = n_users + n_items

    key = jax.random.PRNGKey(0)
    k_adj, k_u, k_i, k_layers = jax.random.split(key, 4)

    # u_name_emb / i_name_emb stand-ins (pretrained name embeddings).
    user_emb = jax.random.normal(k_u, (n_users, embedding_dim), jnp.float32)
    item_emb = jax.random.normal(k_i, (n_items, embedding_dim), jnp.float32)

    # Dense stand-in for the (normalized) sparse adjacency matrix.
    adj = jax.random.uniform(k_adj, (n_total, n_total), jnp.float32) / n_total

    dims = [embedding_dim] + weight_size
    params = []
    layer_keys = jax.random.split(k_layers, len(weight_size))
    for i in range(len(weight_size)):
        kgc, kbi = jax.random.split(layer_keys[i])
        w_gc, b_gc = init_linear(kgc, dims[i], dims[i + 1])
        w_bi, b_bi = init_linear(kbi, dims[i], dims[i + 1])
        params.append((w_gc, b_gc, w_bi, b_bi))

    fwd = jax.jit(functools.partial(ngcf_forward, tm_target=128, tk_target=128))
    u_g, i_g = fwd(adj, user_emb, item_emb, params)
    jax.block_until_ready((u_g, i_g))

    expected_dim = embedding_dim + sum(weight_size)
    assert u_g.shape == (n_users, expected_dim), u_g.shape
    assert i_g.shape == (n_items, expected_dim), i_g.shape
    assert jnp.all(jnp.isfinite(u_g)) and jnp.all(jnp.isfinite(i_g))

    # Numerical check vs. f32 reference (relaxed tolerance: bf16 MXU operands).
    u_ref, i_ref = jax.jit(ngcf_reference)(adj, user_emb, item_emb, params)
    max_err = float(jnp.maximum(jnp.max(jnp.abs(u_g - u_ref)),
                                jnp.max(jnp.abs(i_g - i_ref))))
    assert max_err < 5e-2, f"max abs error {max_err}"

    print("KERNEL_OK")
</pallas_src>

<mosaic_0001>
module attributes {stable_mosaic.version = 11 : i64} {
  func.func @ngcf_layer_kernel(%arg0: i32, %arg1: i32, %arg2: memref<128x128xbf16, #tpu.memory_space<vmem>>, %arg3: memref<128x768xbf16, #tpu.memory_space<vmem>>, %arg4: memref<128x768xf32, #tpu.memory_space<vmem>>, %arg5: memref<768x128xbf16, #tpu.memory_space<vmem>>, %arg6: memref<1x128xf32, #tpu.memory_space<vmem>>, %arg7: memref<768x128xbf16, #tpu.memory_space<vmem>>, %arg8: memref<1x128xf32, #tpu.memory_space<vmem>>, %arg9: memref<128x128xf32, #tpu.memory_space<vmem>>, %arg10: memref<128x128xf32, #tpu.memory_space<vmem>>, %arg11: memref<128x768xf32, #tpu.memory_space<vmem>>) attributes {dimension_semantics = [#tpu.dimension_semantics<parallel>, #tpu.dimension_semantics<arbitrary>], iteration_bounds = array<i64: 4, 4>, scalar_prefetch = 0 : i64, scratch_operands = 1 : i64, tpu.core_type = #tpu.core_type<tc>, window_params = [{transform_indices = @transform_0, window_bounds = array<i64: 128, 128>}, {transform_indices = @transform_1, window_bounds = array<i64: 128, 768>}, {transform_indices = @transform_2, window_bounds = array<i64: 128, 768>}, {pipeline_mode = #tpu.pipeline_mode<synchronous>, transform_indices = @transform_3, window_bounds = array<i64: 768, 128>}, {pipeline_mode = #tpu.pipeline_mode<synchronous>, transform_indices = @transform_4, window_bounds = array<i64: 1, 128>}, {pipeline_mode = #tpu.pipeline_mode<synchronous>, transform_indices = @transform_5, window_bounds = array<i64: 768, 128>}, {pipeline_mode = #tpu.pipeline_mode<synchronous>, transform_indices = @transform_6, window_bounds = array<i64: 1, 128>}, {transform_indices = @transform_7, window_bounds = array<i64: 128, 128>}, {transform_indices = @transform_8, window_bounds = array<i64: 128, 128>}]} {
    %c0_i32 = arith.constant 0 : i32
    %0 = arith.cmpi eq, %arg1, %c0_i32 : i32
    %1 = arith.extui %0 : i1 to i32
    %c0_i32_0 = arith.constant 0 : i32
    %2 = arith.cmpi ne, %1, %c0_i32_0 : i32
    scf.if %2 {
      %cst_9 = arith.constant 0.000000e+00 : f32
      %12 = vector.broadcast %cst_9 : f32 to vector<128x768xf32>
      %c0_10 = arith.constant 0 : index
      %c0_11 = arith.constant 0 : index
      %13 = vector.load %arg11[%c0_10, %c0_11] : memref<128x768xf32, #tpu.memory_space<vmem>>, vector<128x768xf32>
      tpu.vector_store %arg11[%c0_10, %c0_11], %12 {strides = array<i32>} : memref<128x768xf32, #tpu.memory_space<vmem>>, vector<128x768xf32>,
    } else {
    }
    %c0 = arith.constant 0 : index
    %c0_1 = arith.constant 0 : index
    %3 = vector.load %arg11[%c0, %c0_1] : memref<128x768xf32, #tpu.memory_space<vmem>>, vector<128x768xf32>
    %c0_2 = arith.constant 0 : index
    %c0_3 = arith.constant 0 : index
    %4 = vector.load %arg2[%c0_2, %c0_3] : memref<128x128xbf16, #tpu.memory_space<vmem>>, vector<128x128xbf16>
    %c0_4 = arith.constant 0 : index
    %c0_5 = arith.constant 0 : index
    %5 = vector.load %arg3[%c0_4, %c0_5] : memref<128x768xbf16, #tpu.memory_space<vmem>>, vector<128x768xbf16>
    %cst = arith.constant dense<0.000000e+00> : vector<128x768xf32>
    %6 = tpu.matmul %4, %5, %cst {dimension_numbers = #tpu.dot_dimension_numbers<[1], [0], [0], [1], [0, 0, 1, 1], [], []>} : vector<128x128xbf16>, vector<128x768xbf16>, vector<128x768xf32> -> vector<128x768xf32>
    %7 = arith.addf %3, %6 : vector<128x768xf32>
    %c0_6 = arith.constant 0 : index
    %c0_7 = arith.constant 0 : index
    %8 = vector.load %arg11[%c0_6, %c0_7] : memref<128x768xf32, #tpu.memory_space<vmem>>, vector<128x768xf32>
    tpu.vector_store %arg11[%c0_6, %c0_7], %7 {strides = array<i32>} : memref<128x768xf32, #tpu.memory_space<vmem>>, vector<128x768xf32>,
    %c3_i32 = arith.constant 3 : i32
    %9 = arith.cmpi eq, %arg1, %c3_i32 : i32
    %10 = arith.extui %9 : i1 to i32
    %c0_i32_8 = arith.constant 0 : i32
    %11 = arith.cmpi ne, %10, %c0_i32_8 : i32
    scf.if %11 {
      %c0_9 = arith.constant 0 : index
      %c0_10 = arith.constant 0 : index
      %12 = vector.load %arg11[%c0_9, %c0_10] : memref<128x768xf32, #tpu.memory_space<vmem>>, vector<128x768xf32>
      %c0_11 = arith.constant 0 : index
      %c0_12 = arith.constant 0 : index
      %13 = vector.load %arg4[%c0_11, %c0_12] : memref<128x768xf32, #tpu.memory_space<vmem>>, vector<128x768xf32>
      %14 = arith.truncf %12 : vector<128x768xf32> to vector<128x768xbf16>
      %c0_13 = arith.constant 0 : index
      %c0_14 = arith.constant 0 : index
      %15 = vector.load %arg5[%c0_13, %c0_14] : memref<768x128xbf16, #tpu.memory_space<vmem>>, vector<768x128xbf16>
      %cst_15 = arith.constant dense<0.000000e+00> : vector<128x128xf32>
      %16 = tpu.matmul %14, %15, %cst_15 {dimension_numbers = #tpu.dot_dimension_numbers<[1], [0], [0], [1], [0, 0, 1, 1], [], []>} : vector<128x768xbf16>, vector<768x128xbf16>, vector<128x128xf32> -> vector<128x128xf32>
      %c0_16 = arith.constant 0 : index
      %c0_17 = arith.constant 0 : index
      %17 = vector.load %arg6[%c0_16, %c0_17] : memref<1x128xf32, #tpu.memory_space<vmem>>, vector<1x128xf32>
      %18 = vector.broadcast %17 : vector<1x128xf32> to vector<128x128xf32>
      %19 = arith.addf %16, %18 : vector<128x128xf32>
      %cst_18 = arith.constant 0.000000e+00 : f32
      %20 = vector.broadcast %cst_18 : f32 to vector<128x128xf32>
      %21 = arith.cmpf oge, %19, %20 : vector<128x128xf32>
      %cst_19 = arith.constant 0.00999999977 : f32
      %22 = vector.broadcast %cst_19 : f32 to vector<128x128xf32>
      %23 = arith.mulf %22, %19 : vector<128x128xf32>
      %24 = arith.select %21, %19, %23 : vector<128x128xi1>, vector<128x128xf32>
      %25 = arith.mulf %13, %12 : vector<128x768xf32>
      %26 = arith.truncf %25 : vector<128x768xf32> to vector<128x768xbf16>
      %c0_20 = arith.constant 0 : index
      %c0_21 = arith.constant 0 : index
      %27 = vector.load %arg7[%c0_20, %c0_21] : memref<768x128xbf16, #tpu.memory_space<vmem>>, vector<768x128xbf16>
      %cst_22 = arith.constant dense<0.000000e+00> : vector<128x128xf32>
      %28 = tpu.matmul %26, %27, %cst_22 {dimension_numbers = #tpu.dot_dimension_numbers<[1], [0], [0], [1], [0, 0, 1, 1], [], []>} : vector<128x768xbf16>, vector<768x128xbf16>, vector<128x128xf32> -> vector<128x128xf32>
      %c0_23 = arith.constant 0 : index
      %c0_24 = arith.constant 0 : index
      %29 = vector.load %arg8[%c0_23, %c0_24] : memref<1x128xf32, #tpu.memory_space<vmem>>, vector<1x128xf32>
      %30 = vector.broadcast %29 : vector<1x128xf32> to vector<128x128xf32>
      %31 = arith.addf %28, %30 : vector<128x128xf32>
      %cst_25 = arith.constant 0.000000e+00 : f32
      %32 = vector.broadcast %cst_25 : f32 to vector<128x128xf32>
      %33 = arith.cmpf oge, %31, %32 : vector<128x128xf32>
      %cst_26 = arith.constant 0.00999999977 : f32
      %34 = vector.broadcast %cst_26 : f32 to vector<128x128xf32>
      %35 = arith.mulf %34, %31 : vector<128x128xf32>
      %36 = arith.select %33, %31, %35 : vector<128x128xi1>, vector<128x128xf32>
      %37 = arith.addf %24, %36 : vector<128x128xf32>
      %38 = arith.mulf %37, %37 : vector<128x128xf32>
      %cst_27 = arith.constant dense<0.000000e+00> : vector<128xf32>
      %39 = vector.multi_reduction <add>, %38, %cst_27 [1] : vector<128x128xf32> to vector<128xf32>
      %40 = vector.shape_cast %39 : vector<128xf32> to vector<128x1xf32>
      %cst_28 = arith.constant 1.000000e-24 : f32
      %41 = vector.broadcast %cst_28 : f32 to vector<128x1xf32>
      %42 = arith.maximumf %40, %41 : vector<128x1xf32>
      %43 = math.rsqrt %42 : vector<128x1xf32>
      %c0_29 = arith.constant 0 : index
      %c0_30 = arith.constant 0 : index
      %44 = vector.load %arg9[%c0_29, %c0_30] : memref<128x128xf32, #tpu.memory_space<vmem>>, vector<128x128xf32>
      tpu.vector_store %arg9[%c0_29, %c0_30], %37 {strides = array<i32>} : memref<128x128xf32, #tpu.memory_space<vmem>>, vector<128x128xf32>,
      %45 = vector.broadcast %43 : vector<128x1xf32> to vector<128x128xf32>
      %46 = arith.mulf %37, %45 : vector<128x128xf32>
      %c0_31 = arith.constant 0 : index
      %c0_32 = arith.constant 0 : index
      %47 = vector.load %arg10[%c0_31, %c0_32] : memref<128x128xf32, #tpu.memory_space<vmem>>, vector<128x128xf32>
      tpu.vector_store %arg10[%c0_31, %c0_32], %46 {strides = array<i32>} : memref<128x128xf32, #tpu.memory_space<vmem>>, vector<128x128xf32>,
    } else {
    }
    return
  }
  func.func @transform_0(%arg0: i32, %arg1: i32) -> (i32, i32) {
    %c0_i32 = arith.constant 0 : i32
    return %arg0, %arg1 : i32, i32
  }
  func.func @transform_1(%arg0: i32, %arg1: i32) -> (i32, i32) {
    %c0_i32 = arith.constant 0 : i32
    %c0_i32_0 = arith.constant 0 : i32
    return %arg1, %c0_i32 : i32, i32
  }
  func.func @transform_2(%arg0: i32, %arg1: i32) -> (i32, i32) {
    %c0_i32 = arith.constant 0 : i32
    %c0_i32_0 = arith.constant 0 : i32
    return %arg0, %c0_i32 : i32, i32
  }
  func.func @transform_3(%arg0: i32, %arg1: i32) -> (i32, i32) {
    %c0_i32 = arith.constant 0 : i32
    %c0_i32_0 = arith.constant 0 : i32
    %c0_i32_1 = arith.constant 0 : i32
    return %c0_i32, %c0_i32_0 : i32, i32
  }
  func.func @transform_4(%arg0: i32, %arg1: i32) -> (i32, i32) {
    %c0_i32 = arith.constant 0 : i32
    %c0_i32_0 = arith.constant 0 : i32
    %c0_i32_1 = arith.constant 0 : i32
    return %c0_i32, %c0_i32_0 : i32, i32
  }
  func.func @transform_5(%arg0: i32, %arg1: i32) -> (i32, i32) {
    %c0_i32 = arith.constant 0 : i32
    %c0_i32_0 = arith.constant 0 : i32
    %c0_i32_1 = arith.constant 0 : i32
    return %c0_i32, %c0_i32_0 : i32, i32
  }
  func.func @transform_6(%arg0: i32, %arg1: i32) -> (i32, i32) {
    %c0_i32 = arith.constant 0 : i32
    %c0_i32_0 = arith.constant 0 : i32
    %c0_i32_1 = arith.constant 0 : i32
    return %c0_i32, %c0_i32_0 : i32, i32
  }
  func.func @transform_7(%arg0: i32, %arg1: i32) -> (i32, i32) {
    %c0_i32 = arith.constant 0 : i32
    %c0_i32_0 = arith.constant 0 : i32
    return %arg0, %c0_i32 : i32, i32
  }
  func.func @transform_8(%arg0: i32, %arg1: i32) -> (i32, i32) {
    %c0_i32 = arith.constant 0 : i32
    %c0_i32_0 = arith.constant 0 : i32
    return %arg0, %c0_i32 : i32, i32
  }
}

module attributes {stable_mosaic.version = 11 : i64} {
  func.func @ngcf_layer_kernel(%arg0: i32, %arg1: i32, %arg2: memref<128x128xbf16, #tpu.memory_space<vmem>>, %arg3: memref<128x128xbf16, #tpu.memory_space<vmem>>, %arg4: memref<128x128xf32, #tpu.memory_space<vmem>>, %arg5: memref<128x128xbf16, #tpu.memory_space<vmem>>, %arg6: memref<1x128xf32, #tpu.memory_space<vmem>>, %arg7: memref<128x128xbf16, #tpu.memory_space<vmem>>, %arg8: memref<1x128xf32, #tpu.memory_space<vmem>>, %arg9: memref<128x128xf32, #tpu.memory_space<vmem>>, %arg10: memref<128x128xf32, #tpu.memory_space<vmem>>, %arg11: memref<128x128xf32, #tpu.memory_space<vmem>>) attributes {dimension_semantics = [#tpu.dimension_semantics<parallel>, #tpu.dimension_semantics<arbitrary>], iteration_bounds = array<i64: 4, 4>, scalar_prefetch = 0 : i64, scratch_operands = 1 : i64, tpu.core_type = #tpu.core_type<tc>, window_params = [{transform_indices = @transform_0, window_bounds = array<i64: 128, 128>}, {transform_indices = @transform_1, window_bounds = array<i64: 128, 128>}, {transform_indices = @transform_2, window_bounds = array<i64: 128, 128>}, {pipeline_mode = #tpu.pipeline_mode<synchronous>, transform_indices = @transform_3, window_bounds = array<i64: 128, 128>}, {pipeline_mode = #tpu.pipeline_mode<synchronous>, transform_indices = @transform_4, window_bounds = array<i64: 1, 128>}, {pipeline_mode = #tpu.pipeline_mode<synchronous>, transform_indices = @transform_5, window_bounds = array<i64: 128, 128>}, {pipeline_mode = #tpu.pipeline_mode<synchronous>, transform_indices = @transform_6, window_bounds = array<i64: 1, 128>}, {transform_indices = @transform_7, window_bounds = array<i64: 128, 128>}, {transform_indices = @transform_8, window_bounds = array<i64: 128, 128>}]} {
    %c0_i32 = arith.constant 0 : i32
    %0 = arith.cmpi eq, %arg1, %c0_i32 : i32
    %1 = arith.extui %0 : i1 to i32
    %c0_i32_0 = arith.constant 0 : i32
    %2 = arith.cmpi ne, %1, %c0_i32_0 : i32
    scf.if %2 {
      %cst_9 = arith.constant 0.000000e+00 : f32
      %12 = vector.broadcast %cst_9 : f32 to vector<128x128xf32>
      %c0_10 = arith.constant 0 : index
      %c0_11 = arith.constant 0 : index
      %13 = vector.load %arg11[%c0_10, %c0_11] : memref<128x128xf32, #tpu.memory_space<vmem>>, vector<128x128xf32>
      tpu.vector_store %arg11[%c0_10, %c0_11], %12 {strides = array<i32>} : memref<128x128xf32, #tpu.memory_space<vmem>>, vector<128x128xf32>,
    } else {
    }
    %c0 = arith.constant 0 : index
    %c0_1 = arith.constant 0 : index
    %3 = vector.load %arg11[%c0, %c0_1] : memref<128x128xf32, #tpu.memory_space<vmem>>, vector<128x128xf32>
    %c0_2 = arith.constant 0 : index
    %c0_3 = arith.constant 0 : index
    %4 = vector.load %arg2[%c0_2, %c0_3] : memref<128x128xbf16, #tpu.memory_space<vmem>>, vector<128x128xbf16>
    %c0_4 = arith.constant 0 : index
    %c0_5 = arith.constant 0 : index
    %5 = vector.load %arg3[%c0_4, %c0_5] : memref<128x128xbf16, #tpu.memory_space<vmem>>, vector<128x128xbf16>
    %cst = arith.constant dense<0.000000e+00> : vector<128x128xf32>
    %6 = tpu.matmul %4, %5, %cst {dimension_numbers = #tpu.dot_dimension_numbers<[1], [0], [0], [1], [0, 0, 1, 1], [], []>} : vector<128x128xbf16>, vector<128x128xbf16>, vector<128x128xf32> -> vector<128x128xf32>
    %7 = arith.addf %3, %6 : vector<128x128xf32>
    %c0_6 = arith.constant 0 : index
    %c0_7 = arith.constant 0 : index
    %8 = vector.load %arg11[%c0_6, %c0_7] : memref<128x128xf32, #tpu.memory_space<vmem>>, vector<128x128xf32>
    tpu.vector_store %arg11[%c0_6, %c0_7], %7 {strides = array<i32>} : memref<128x128xf32, #tpu.memory_space<vmem>>, vector<128x128xf32>,
    %c3_i32 = arith.constant 3 : i32
    %9 = arith.cmpi eq, %arg1, %c3_i32 : i32
    %10 = arith.extui %9 : i1 to i32
    %c0_i32_8 = arith.constant 0 : i32
    %11 = arith.cmpi ne, %10, %c0_i32_8 : i32
    scf.if %11 {
      %c0_9 = arith.constant 0 : index
      %c0_10 = arith.constant 0 : index
      %12 = vector.load %arg11[%c0_9, %c0_10] : memref<128x128xf32, #tpu.memory_space<vmem>>, vector<128x128xf32>
      %c0_11 = arith.constant 0 : index
      %c0_12 = arith.constant 0 : index
      %13 = vector.load %arg4[%c0_11, %c0_12] : memref<128x128xf32, #tpu.memory_space<vmem>>, vector<128x128xf32>
      %14 = arith.truncf %12 : vector<128x128xf32> to vector<128x128xbf16>
      %c0_13 = arith.constant 0 : index
      %c0_14 = arith.constant 0 : index
      %15 = vector.load %arg5[%c0_13, %c0_14] : memref<128x128xbf16, #tpu.memory_space<vmem>>, vector<128x128xbf16>
      %cst_15 = arith.constant dense<0.000000e+00> : vector<128x128xf32>
      %16 = tpu.matmul %14, %15, %cst_15 {dimension_numbers = #tpu.dot_dimension_numbers<[1], [0], [0], [1], [0, 0, 1, 1], [], []>} : vector<128x128xbf16>, vector<128x128xbf16>, vector<128x128xf32> -> vector<128x128xf32>
      %c0_16 = arith.constant 0 : index
      %c0_17 = arith.constant 0 : index
      %17 = vector.load %arg6[%c0_16, %c0_17] : memref<1x128xf32, #tpu.memory_space<vmem>>, vector<1x128xf32>
      %18 = vector.broadcast %17 : vector<1x128xf32> to vector<128x128xf32>
      %19 = arith.addf %16, %18 : vector<128x128xf32>
      %cst_18 = arith.constant 0.000000e+00 : f32
      %20 = vector.broadcast %cst_18 : f32 to vector<128x128xf32>
      %21 = arith.cmpf oge, %19, %20 : vector<128x128xf32>
      %cst_19 = arith.constant 0.00999999977 : f32
      %22 = vector.broadcast %cst_19 : f32 to vector<128x128xf32>
      %23 = arith.mulf %22, %19 : vector<128x128xf32>
      %24 = arith.select %21, %19, %23 : vector<128x128xi1>, vector<128x128xf32>
      %25 = arith.mulf %13, %12 : vector<128x128xf32>
      %26 = arith.truncf %25 : vector<128x128xf32> to vector<128x128xbf16>
      %c0_20 = arith.constant 0 : index
      %c0_21 = arith.constant 0 : index
      %27 = vector.load %arg7[%c0_20, %c0_21] : memref<128x128xbf16, #tpu.memory_space<vmem>>, vector<128x128xbf16>
      %cst_22 = arith.constant dense<0.000000e+00> : vector<128x128xf32>
      %28 = tpu.matmul %26, %27, %cst_22 {dimension_numbers = #tpu.dot_dimension_numbers<[1], [0], [0], [1], [0, 0, 1, 1], [], []>} : vector<128x128xbf16>, vector<128x128xbf16>, vector<128x128xf32> -> vector<128x128xf32>
      %c0_23 = arith.constant 0 : index
      %c0_24 = arith.constant 0 : index
      %29 = vector.load %arg8[%c0_23, %c0_24] : memref<1x128xf32, #tpu.memory_space<vmem>>, vector<1x128xf32>
      %30 = vector.broadcast %29 : vector<1x128xf32> to vector<128x128xf32>
      %31 = arith.addf %28, %30 : vector<128x128xf32>
      %cst_25 = arith.constant 0.000000e+00 : f32
      %32 = vector.broadcast %cst_25 : f32 to vector<128x128xf32>
      %33 = arith.cmpf oge, %31, %32 : vector<128x128xf32>
      %cst_26 = arith.constant 0.00999999977 : f32
      %34 = vector.broadcast %cst_26 : f32 to vector<128x128xf32>
      %35 = arith.mulf %34, %31 : vector<128x128xf32>
      %36 = arith.select %33, %31, %35 : vector<128x128xi1>, vector<128x128xf32>
      %37 = arith.addf %24, %36 : vector<128x128xf32>
      %38 = arith.mulf %37, %37 : vector<128x128xf32>
      %cst_27 = arith.constant dense<0.000000e+00> : vector<128xf32>
      %39 = vector.multi_reduction <add>, %38, %cst_27 [1] : vector<128x128xf32> to vector<128xf32>
      %40 = vector.shape_cast %39 : vector<128xf32> to vector<128x1xf32>
      %cst_28 = arith.constant 1.000000e-24 : f32
      %41 = vector.broadcast %cst_28 : f32 to vector<128x1xf32>
      %42 = arith.maximumf %40, %41 : vector<128x1xf32>
      %43 = math.rsqrt %42 : vector<128x1xf32>
      %c0_29 = arith.constant 0 : index
      %c0_30 = arith.constant 0 : index
      %44 = vector.load %arg9[%c0_29, %c0_30] : memref<128x128xf32, #tpu.memory_space<vmem>>, vector<128x128xf32>
      tpu.vector_store %arg9[%c0_29, %c0_30], %37 {strides = array<i32>} : memref<128x128xf32, #tpu.memory_space<vmem>>, vector<128x128xf32>,
      %45 = vector.broadcast %43 : vector<128x1xf32> to vector<128x128xf32>
      %46 = arith.mulf %37, %45 : vector<128x128xf32>
      %c0_31 = arith.constant 0 : index
      %c0_32 = arith.constant 0 : index
      %47 = vector.load %arg10[%c0_31, %c0_32] : memref<128x128xf32, #tpu.memory_space<vmem>>, vector<128x128xf32>
      tpu.vector_store %arg10[%c0_31, %c0_32], %46 {strides = array<i32>} : memref<128x128xf32, #tpu.memory_space<vmem>>, vector<128x128xf32>,
    } else {
    }
    return
  }
  func.func @transform_0(%arg0: i32, %arg1: i32) -> (i32, i32) {
    %c0_i32 = arith.constant 0 : i32
    return %arg0, %arg1 : i32, i32
  }
  func.func @transform_1(%arg0: i32, %arg1: i32) -> (i32, i32) {
    %c0_i32 = arith.constant 0 : i32
    %c0_i32_0 = arith.constant 0 : i32
    return %arg1, %c0_i32 : i32, i32
  }
  func.func @transform_2(%arg0: i32, %arg1: i32) -> (i32, i32) {
    %c0_i32 = arith.constant 0 : i32
    %c0_i32_0 = arith.constant 0 : i32
    return %arg0, %c0_i32 : i32, i32
  }
  func.func @transform_3(%arg0: i32, %arg1: i32) -> (i32, i32) {
    %c0_i32 = arith.constant 0 : i32
    %c0_i32_0 = arith.constant 0 : i32
    %c0_i32_1 = arith.constant 0 : i32
    return %c0_i32, %c0_i32_0 : i32, i32
  }
  func.func @transform_4(%arg0: i32, %arg1: i32) -> (i32, i32) {
    %c0_i32 = arith.constant 0 : i32
    %c0_i32_0 = arith.constant 0 : i32
    %c0_i32_1 = arith.constant 0 : i32
    return %c0_i32, %c0_i32_0 : i32, i32
  }
  func.func @transform_5(%arg0: i32, %arg1: i32) -> (i32, i32) {
    %c0_i32 = arith.constant 0 : i32
    %c0_i32_0 = arith.constant 0 : i32
    %c0_i32_1 = arith.constant 0 : i32
    return %c0_i32, %c0_i32_0 : i32, i32
  }
  func.func @transform_6(%arg0: i32, %arg1: i32) -> (i32, i32) {
    %c0_i32 = arith.constant 0 : i32
    %c0_i32_0 = arith.constant 0 : i32
    %c0_i32_1 = arith.constant 0 : i32
    return %c0_i32, %c0_i32_0 : i32, i32
  }
  func.func @transform_7(%arg0: i32, %arg1: i32) -> (i32, i32) {
    %c0_i32 = arith.constant 0 : i32
    %c0_i32_0 = arith.constant 0 : i32
    return %arg0, %c0_i32 : i32, i32
  }
  func.func @transform_8(%arg0: i32, %arg1: i32) -> (i32, i32) {
    %c0_i32 = arith.constant 0 : i32
    %c0_i32_0 = arith.constant 0 : i32
    return %arg0, %c0_i32 : i32, i32
  }
}

</mosaic_0001>

<llo_original>
// kernel: ngcf_forward.3
$region0: #{ngcf_forward.3}
  #allocation0 [shape = 'u32[]', space=smem, size = 0x4, offset = 0x4, fixed_abs, tag = 'smem constant byte address 0x4 - core index']
  #allocation1 [shape = 'u32[72,128]{1,0:T(1,128)}', space=vmem, size = 0x9000, scoped, tag = 'internal scratch']
  #allocation2 [shape = 'f32[128,128]{1,0:T(8,128)}', space=vmem, size = 0x10000, scoped, tag = 'scratch operand']
  %s0 = inlined_call_operand.vmem [shape: bf16[512,512], index: 0, kind: input, shape index: {}]
  %s1 = inlined_call_operand.vmem [shape: bf16[512,128], index: 1, kind: input, shape index: {}]
  %s2 = inlined_call_operand.vmem [shape: f32[512,128], index: 2, kind: input, shape index: {}]
  %s3 = inlined_call_operand.vmem [shape: bf16[128,128], index: 3, kind: input, shape index: {}]
  %s4 = inlined_call_operand.vmem [shape: f32[1,128], index: 4, kind: input, shape index: {}]
  %s5 = inlined_call_operand.vmem [shape: bf16[128,128], index: 5, kind: input, shape index: {}]
  %s6 = inlined_call_operand.vmem [shape: f32[1,128], index: 6, kind: input, shape index: {}]
  %s7 = inlined_call_operand.hbm [shape: f32[512,128], index: 7, kind: output, shape index: {0}]
  %s8 = inlined_call_operand.vmem [shape: f32[512,128], index: 8, kind: output, shape index: {1}]
  %9 = xla_tuple %s7, %s8
  %s10 = sld [smem:[#allocation0]]
  $region118: #{ngcf_forward.3} parent=0
    _
  %s12 = ssub.s32 1, %s10
  %s13 = scalar_select 0, %s12, %s10
  $region1: #{ngcf_forward.3} parent=0
    #allocation3 [shape = 'u8[65536]{0}', space=vmem, size = 0x10000, scoped, tag = 'input window, operand 0']
    #allocation4 [shape = 'u8[131072]{0}', space=vmem, size = 0x20000, scoped, tag = 'output window, operand 0']
    #allocation5 [shape = 's32[2]{0}', space=sflag, size = 0x8, scoped, tag = 'scoped memory for ngcf_forward.3']
    %14 = vsyncpa [#allocation5], 0
    %s15 = scalar_lea.sflag [#allocation5], 1
    %16 = vsyncpa %s15, 0
    loop: start=0, step=1, limit=18
    $region2: #{ngcf_forward.3} parent=1 // loop_pre_header
      _
    $region3: #{ngcf_forward.3} parent=1 // loop_header
      %s18 = sphi 0, %s22
      %p19 = scmp.ge.s32.totalorder %s18, 18
      %s25 = sphi 0, %s37
      %s26 = sphi 0, %s33
      %s27 = sphi 0, %s25
      %s28 = sphi 0, %s26
      %s29 = sphi 0, %s27
      %s30 = sphi 0, %s28
      %s42 = sphi 0, %s44
      %s45 = sphi 0, %s42
      %s46 = sphi 0, %s45
      %s62 = sphi 0, %s46
      %s68 = sphi 0, %s70
      %s71 = sphi 0, %s68
      %s72 = sphi 0, %s71
      %s88 = sphi 0, %s72
      %s94 = sphi 0, %s96
      %s97 = sphi 0, %s94
      %s98 = sphi 0, %s97
      %s114 = sphi 0, %s98
      %s118 = sphi 0, %s118
      %s120 = sphi 0, %s118
      %s121 = sphi 0, %s120
      %s135 = sphi 0, %s121
      %s139 = sphi 0, %s139
      %s141 = sphi 0, %s139
      %s142 = sphi 0, %s141
      %s156 = sphi 0, %s142
      %s160 = sphi 0, %s160
      %s162 = sphi 0, %s160
      %s163 = sphi 0, %s162
      %s177 = sphi 0, %s163
      %s181 = sphi 0, %s181
      %s183 = sphi 0, %s181
      %s184 = sphi 0, %s183
      %s198 = sphi 0, %s184
      %s204 = sphi 0, %s206
      %s207 = sphi 0, %s204
      %s208 = sphi 0, %s207
      %s224 = sphi 0, %s208
      %s230 = sphi 0, %s232
      %s233 = sphi 0, %s230
      %s234 = sphi 0, %s233
      %s250 = sphi 0, %s234
    $region4: #{ngcf_forward.3} parent=1 // loop_header_branch
      %21 = sbr.rel (%p19) target = $region8
    $region5: #{ngcf_forward.3} parent=1 // loop_body
      %s23 = ssub.s32 %s18, 1
      %s24 = ssub.s32 %s18, 2
      %s31 = sadd.s32 1, %s26
      %p32 = scmp.ge.s32.totalorder %s31, 4
      %s33 = scalar_select %p32, 0, %s31
      %s34 = sadd.s32 1, %s25
      %s35 = scalar_select %p32, %s34, %s25
      %p36 = scmp.ge.s32.totalorder %s35, 4
      %s37 = scalar_select %p36, 0, %s35
      %s38 = ssub.s32 %s25, %s37
      %s39 = ssub.s32 %s26, %s33
      %s40 = sor.u32 %s38, %s39
      %p41 = scmp.eq.s32.totalorder %s40, 0
      %s43 = sadd.s32 %s42, 1
      %s44 = scalar_select %p41, %s42, %s43
      %p47 = pneg %p41
      %p48 = scmp.eq.s32.totalorder %s18, 15
      %p49 = por %p47, %p48
      %p50 = scmp.ne.s32.totalorder %s42, %s45
      %p51 = scmp.eq.s32.totalorder %s18, 0
      %p52 = por %p50, %p51
      %p53 = scmp.ne.s32.totalorder %s42, %s45
      %p54 = scmp.eq.s32.totalorder %s23, 15
      %p55 = por %p53, %p54
      %p56 = scmp.ne.s32.totalorder %s45, %s46
      %p57 = scmp.eq.s32.totalorder %s23, 0
      %p58 = por %p56, %p57
      %p59 = scmp.ne.s32.totalorder %s45, %s46
      %p60 = scmp.eq.s32.totalorder %s24, 15
      %p61 = por %p59, %p60
      %p63 = scmp.ne.s32.totalorder %s46, %s62
      %p64 = scmp.eq.s32.totalorder %s24, 0
      %p65 = por %p63, %p64
      %s66 = ssub.s32 %s26, %s33
      %p67 = scmp.eq.s32.totalorder %s66, 0
      %s69 = sadd.s32 %s68, 1
      %s70 = scalar_select %p67, %s68, %s69
      %p73 = pneg %p67
      %p74 = scmp.eq.s32.totalorder %s18, 15
      %p75 = por %p73, %p74
      %p76 = scmp.ne.s32.totalorder %s68, %s71
      %p77 = scmp.eq.s32.totalorder %s18, 0
      %p78 = por %p76, %p77
      %p79 = scmp.ne.s32.totalorder %s68, %s71
      %p80 = scmp.eq.s32.totalorder %s23, 15
      %p81 = por %p79, %p80
      %p82 = scmp.ne.s32.totalorder %s71, %s72
      %p83 = scmp.eq.s32.totalorder %s23, 0
      %p84 = por %p82, %p83
      %p85 = scmp.ne.s32.totalorder %s71, %s72
      %p86 = scmp.eq.s32.totalorder %s24, 15
      %p87 = por %p85, %p86
      %p89 = scmp.ne.s32.totalorder %s72, %s88
      %p90 = scmp.eq.s32.totalorder %s24, 0
      %p91 = por %p89, %p90
      %s92 = ssub.s32 %s25, %s37
      %p93 = scmp.eq.s32.totalorder %s92, 0
      %s95 = sadd.s32 %s94, 1
      %s96 = scalar_select %p93, %s94, %s95
      %p99 = pneg %p93
      %p100 = scmp.eq.s32.totalorder %s18, 15
      %p101 = por %p99, %p100
      %p102 = scmp.ne.s32.totalorder %s94, %s97
      %p103 = scmp.eq.s32.totalorder %s18, 0
      %p104 = por %p102, %p103
      %p105 = scmp.ne.s32.totalorder %s94, %s97
      %p106 = scmp.eq.s32.totalorder %s23, 15
      %p107 = por %p105, %p106
      %p108 = scmp.ne.s32.totalorder %s97, %s98
      %p109 = scmp.eq.s32.totalorder %s23, 0
      %p110 = por %p108, %p109
      %p111 = scmp.ne.s32.totalorder %s97, %s98
      %p112 = scmp.eq.s32.totalorder %s24, 15
      %p113 = por %p111, %p112
      %p115 = scmp.ne.s32.totalorder %s98, %s114
      %p116 = scmp.eq.s32.totalorder %s24, 0
      %p117 = por %p115, %p116
      %s119 = sadd.s32 %s118, 1
      %p122 = scmp.eq.s32.totalorder %s18, 15
      %p123 = scmp.ne.s32.totalorder %s118, %s120
      %p124 = scmp.eq.s32.totalorder %s18, 0
      %p125 = por %p123, %p124
      %p126 = scmp.ne.s32.totalorder %s118, %s120
      %p127 = scmp.eq.s32.totalorder %s23, 15
      %p128 = por %p126, %p127
      %p129 = scmp.ne.s32.totalorder %s120, %s121
      %p130 = scmp.eq.s32.totalorder %s23, 0
      %p131 = por %p129, %p130
      %p132 = scmp.ne.s32.totalorder %s120, %s121
      %p133 = scmp.eq.s32.totalorder %s24, 15
      %p134 = por %p132, %p133
      %p136 = scmp.ne.s32.totalorder %s121, %s135
      %p137 = scmp.eq.s32.totalorder %s24, 0
      %p138 = por %p136, %p137
      %s140 = sadd.s32 %s139, 1
      %p143 = scmp.eq.s32.totalorder %s18, 15
      %p144 = scmp.ne.s32.totalorder %s139, %s141
      %p145 = scmp.eq.s32.totalorder %s18, 0
      %p146 = por %p144, %p145
      %p147 = scmp.ne.s32.totalorder %s139, %s141
      %p148 = scmp.eq.s32.totalorder %s23, 15
      %p149 = por %p147, %p148
      %p150 = scmp.ne.s32.totalorder %s141, %s142
      %p151 = scmp.eq.s32.totalorder %s23, 0
      %p152 = por %p150, %p151
      %p153 = scmp.ne.s32.totalorder %s141, %s142
      %p154 = scmp.eq.s32.totalorder %s24, 15
      %p155 = por %p153, %p154
      %p157 = scmp.ne.s32.totalorder %s142, %s156
      %p158 = scmp.eq.s32.totalorder %s24, 0
      %p159 = por %p157, %p158
      %s161 = sadd.s32 %s160, 1
      %p164 = scmp.eq.s32.totalorder %s18, 15
      %p165 = scmp.ne.s32.totalorder %s160, %s162
      %p166 = scmp.eq.s32.totalorder %s18, 0
      %p167 = por %p165, %p166
      %p168 = scmp.ne.s32.totalorder %s160, %s162
      %p169 = scmp.eq.s32.totalorder %s23, 15
      %p170 = por %p168, %p169
      %p171 = scmp.ne.s32.totalorder %s162, %s163
      %p172 = scmp.eq.s32.totalorder %s23, 0
      %p173 = por %p171, %p172
      %p174 = scmp.ne.s32.totalorder %s162, %s163
      %p175 = scmp.eq.s32.totalorder %s24, 15
      %p176 = por %p174, %p175
      %p178 = scmp.ne.s32.totalorder %s163, %s177
      %p179 = scmp.eq.s32.totalorder %s24, 0
      %p180 = por %p178, %p179
      %s182 = sadd.s32 %s181, 1
      %p185 = scmp.eq.s32.totalorder %s18, 15
      %p186 = scmp.ne.s32.totalorder %s181, %s183
      %p187 = scmp.eq.s32.totalorder %s18, 0
      %p188 = por %p186, %p187
      %p189 = scmp.ne.s32.totalorder %s181, %s183
      %p190 = scmp.eq.s32.totalorder %s23, 15
      %p191 = por %p189, %p190
      %p192 = scmp.ne.s32.totalorder %s183, %s184
      %p193 = scmp.eq.s32.totalorder %s23, 0
      %p194 = por %p192, %p193
      %p195 = scmp.ne.s32.totalorder %s183, %s184
      %p196 = scmp.eq.s32.totalorder %s24, 15
      %p197 = por %p195, %p196
      %p199 = scmp.ne.s32.totalorder %s184, %s198
      %p200 = scmp.eq.s32.totalorder %s24, 0
      %p201 = por %p199, %p200
      %s202 = ssub.s32 %s25, %s37
      %p203 = scmp.eq.s32.totalorder %s202, 0
      %s205 = sadd.s32 %s204, 1
      %s206 = scalar_select %p203, %s204, %s205
      %p209 = pneg %p203
      %p210 = scmp.eq.s32.totalorder %s18, 15
      %p211 = por %p209, %p210
      %p212 = scmp.ne.s32.totalorder %s204, %s207
      %p213 = scmp.eq.s32.totalorder %s18, 0
      %p214 = por %p212, %p213
      %p215 = scmp.ne.s32.totalorder %s204, %s207
      %p216 = scmp.eq.s32.totalorder %s23, 15
      %p217 = por %p215, %p216
      %p218 = scmp.ne.s32.totalorder %s207, %s208
      %p219 = scmp.eq.s32.totalorder %s23, 0
      %p220 = por %p218, %p219
      %p221 = scmp.ne.s32.totalorder %s207, %s208
      %p222 = scmp.eq.s32.totalorder %s24, 15
      %p223 = por %p221, %p222
      %p225 = scmp.ne.s32.totalorder %s208, %s224
      %p226 = scmp.eq.s32.totalorder %s24, 0
      %p227 = por %p225, %p226
      %s228 = ssub.s32 %s25, %s37
      %p229 = scmp.eq.s32.totalorder %s228, 0
      %s231 = sadd.s32 %s230, 1
      %s232 = scalar_select %p229, %s230, %s231
      %p235 = pneg %p229
      %p236 = scmp.eq.s32.totalorder %s18, 15
      %p237 = por %p235, %p236
      %p238 = scmp.ne.s32.totalorder %s230, %s233
      %p239 = scmp.eq.s32.totalorder %s18, 0
      %p240 = por %p238, %p239
      %p241 = scmp.ne.s32.totalorder %s230, %s233
      %p242 = scmp.eq.s32.totalorder %s23, 15
      %p243 = por %p241, %p242
      %p244 = scmp.ne.s32.totalorder %s233, %s234
      %p245 = scmp.eq.s32.totalorder %s23, 0
      %p246 = por %p244, %p245
      %p247 = scmp.ne.s32.totalorder %s233, %s234
      %p248 = scmp.eq.s32.totalorder %s24, 15
      %p249 = por %p247, %p248
      %p251 = scmp.ne.s32.totalorder %s234, %s250
      %p252 = scmp.eq.s32.totalorder %s24, 0
      %p253 = por %p251, %p252
      %p254 = scmp.le.s32.totalorder 1, %s18
      %p255 = scmp.lt.s32.totalorder %s18, 17
      %p256 = pnand %p254, %p255
      %p257 = pneg %p256
      // Predicated region
      $region9: #{ngcf_forward.3} parent=5 // pred_check
        _
      $region10: #{ngcf_forward.3} parent=5 // pred_check_branch
        %259 = sbr.rel (%p256) target = $region12
      $region11: #{ngcf_forward.3} parent=5 // pred_region
        %s260 = ssub.s32 %s18, 1
        // Predicated region
        $region13: #{ngcf_forward.3} parent=11 // pred_check
          %p261 = pneg %p131
        $region14: #{ngcf_forward.3} parent=11 // pred_check_branch
          %263 = sbr.rel (%p261) target = $region16
        $region15: #{ngcf_forward.3} parent=11 // pred_region
          _
        $region16: #{ngcf_forward.3} parent=11 // pred_fallthru
          _
        // Predicated region
        $region17: #{ngcf_forward.3} parent=11 // pred_check
          %p264 = pneg %p152
        $region18: #{ngcf_forward.3} parent=11 // pred_check_branch
          %266 = sbr.rel (%p264) target = $region20
        $region19: #{ngcf_forward.3} parent=11 // pred_region
          _
        $region20: #{ngcf_forward.3} parent=11 // pred_fallthru
          _
        // Predicated region
        $region21: #{ngcf_forward.3} parent=11 // pred_check
          %p267 = pneg %p173
        $region22: #{ngcf_forward.3} parent=11 // pred_check_branch
          %269 = sbr.rel (%p267) target = $region24
        $region23: #{ngcf_forward.3} parent=11 // pred_region
          _
        $region24: #{ngcf_forward.3} parent=11 // pred_fallthru
          _
        // Predicated region
        $region25: #{ngcf_forward.3} parent=11 // pred_check
          %p270 = pneg %p194
        $region26: #{ngcf_forward.3} parent=11 // pred_check_branch
          %272 = sbr.rel (%p270) target = $region28
        $region27: #{ngcf_forward.3} parent=11 // pred_region
          _
        $region28: #{ngcf_forward.3} parent=11 // pred_fallthru
          _
      $region12: #{ngcf_forward.3} parent=5 // pred_fallthru
        _
      %p273 = scmp.lt.s32.totalorder %s18, 16
      // Predicated region
      $region29: #{ngcf_forward.3} parent=5 // pred_check
        %p274 = pneg %p273
      $region30: #{ngcf_forward.3} parent=5 // pred_check_branch
        %276 = sbr.rel (%p274) target = $region32
      $region31: #{ngcf_forward.3} parent=5 // pred_region
        // Predicated region
        $region33: #{ngcf_forward.3} parent=31 // pred_check
          %p277 = pneg %p52
        $region34: #{ngcf_forward.3} parent=31 // pred_check_branch
          %279 = sbr.rel (%p277) target = $region36
        $region35: #{ngcf_forward.3} parent=31 // pred_region
          %s280 = sand.u32 %s42, 1
          %s281 = sand.u32 %s42, 1
          %s282 = smul.addr %s281, 64
          %s283 = scalar_lea.vmem [#allocation3], %s282
          %s284 = smul.u32 16, %s25
          %s285 = smul.addr %s284, 4
          %s286 = sadd.s32 %s26, %s285
          %s287 = smul.addr %s286, 4
          %s288 = scalar_lea.vmem %s0, %s287
          // Predicated region
          $region37: #{ngcf_forward.3} parent=35 // pred_check
            _
          $region38: #{ngcf_forward.3} parent=35 // pred_check_branch
            %290 = sbr.rel (0) target = $region40
          $region39: #{ngcf_forward.3} parent=35 // pred_region
            // Predicated region
            $region41: #{ngcf_forward.3} parent=39 // pred_check
              _
            $region42: #{ngcf_forward.3} parent=39 // pred_check_branch
              %292 = sbr.rel target = $region44
            $region43: #{ngcf_forward.3} parent=39 // pred_region
              // Predicated region
              $region56: #{ngcf_forward.3} parent=43 // pred_check
                _
              $region57: #{ngcf_forward.3} parent=43 // pred_check_branch
                %338 = sbr.rel (0) target = $region59
              $region58: #{ngcf_forward.3} parent=43 // pred_region
                loop: start=0, step=1, limit=1
                $region60: #{ngcf_forward.3} parent=58 // loop_pre_header
                  _
                $region61: #{ngcf_forward.3} parent=58 // loop_header
                  %s340 = sphi 0, %s344
                  %p341 = scmp.ge.s32.totalorder %s340, 1
                  %s345 = sphi %s288, %s288
                  %s346 = sphi %s283, %s283
                $region62: #{ngcf_forward.3} parent=58 // loop_header_branch
                  %343 = sbr.rel (%p341) target = $region66
                $region63: #{ngcf_forward.3} parent=58 // loop_body
                  _
                $region64: #{ngcf_forward.3} parent=58 // loop_footer
                  %s344 = sadd.s32 1, %s340
                $region65: #{ngcf_forward.3} parent=58 // loop_footer_branch
                  %339 = sbr.rel target = $region61
                $region66: #{ngcf_forward.3} parent=58 // loop_exit
                  _
                %s348 = ssub.s32 16, 1
                loop: start=0, step=1, limit=1
                $region67: #{ngcf_forward.3} parent=58 // loop_pre_header
                  _
                $region68: #{ngcf_forward.3} parent=58 // loop_header
                  %s350 = sphi 0, %s354
                  %p351 = scmp.ge.s32.totalorder %s350, 1
                  %s355 = sphi %s288, %s288
                  %s356 = sphi %s283, %s283
                $region69: #{ngcf_forward.3} parent=58 // loop_header_branch
                  %353 = sbr.rel (%p351) target = $region73
                $region70: #{ngcf_forward.3} parent=58 // loop_body
                  %v357 = vld [vmem:[%s355] sm:%s348]
                  %358 = vst [vmem:[%s356] sm:%s348] %v357
                  %v359 = vld [vmem:[%s355 + $0x10] sm:%s348]
                  %360 = vst [vmem:[%s356 + $0x4] sm:%s348] %v359
                  %v361 = vld [vmem:[%s355 + $0x20] sm:%s348]
                  %362 = vst [vmem:[%s356 + $0x8] sm:%s348] %v361
                  %v363 = vld [vmem:[%s355 + $0x30] sm:%s348]
                  %364 = vst [vmem:[%s356 + $0xc] sm:%s348] %v363
                  %v365 = vld [vmem:[%s355 + $0x40] sm:%s348]
                  %366 = vst [vmem:[%s356 + $0x10] sm:%s348] %v365
                  %v367 = vld [vmem:[%s355 + $0x50] sm:%s348]
                  %368 = vst [vmem:[%s356 + $0x14] sm:%s348] %v367
                  %v369 = vld [vmem:[%s355 + $0x60] sm:%s348]
                  %370 = vst [vmem:[%s356 + $0x18] sm:%s348] %v369
                  %v371 = vld [vmem:[%s355 + $0x70] sm:%s348]
                  %372 = vst [vmem:[%s356 + $0x1c] sm:%s348] %v371
                  %v373 = vld [vmem:[%s355 + $0x80] sm:%s348]
                  %374 = vst [vmem:[%s356 + $0x20] sm:%s348] %v373
                  %v375 = vld [vmem:[%s355 + $0x90] sm:%s348]
                  %376 = vst [vmem:[%s356 + $0x24] sm:%s348] %v375
                  %v377 = vld [vmem:[%s355 + $0xa0] sm:%s348]
                  %378 = vst [vmem:[%s356 + $0x28] sm:%s348] %v377
                  %v379 = vld [vmem:[%s355 + $0xb0] sm:%s348]
                  %380 = vst [vmem:[%s356 + $0x2c] sm:%s348] %v379
                  %v381 = vld [vmem:[%s355 + $0xc0] sm:%s348]
                  %382 = vst [vmem:[%s356 + $0x30] sm:%s348] %v381
                  %v383 = vld [vmem:[%s355 + $0xd0] sm:%s348]
                  %384 = vst [vmem:[%s356 + $0x34] sm:%s348] %v383
                  %v385 = vld [vmem:[%s355 + $0xe0] sm:%s348]
                  %386 = vst [vmem:[%s356 + $0x38] sm:%s348] %v385
                  %v387 = vld [vmem:[%s355 + $0xf0] sm:%s348]
                  %388 = vst [vmem:[%s356 + $0x3c] sm:%s348] %v387
                $region71: #{ngcf_forward.3} parent=58 // loop_footer
                  %s354 = sadd.s32 1, %s350
                $region72: #{ngcf_forward.3} parent=58 // loop_footer_branch
                  %349 = sbr.rel target = $region68
                $region73: #{ngcf_forward.3} parent=58 // loop_exit
                  _
              $region59: #{ngcf_forward.3} parent=43 // pred_fallthru
                _
            $region44: #{ngcf_forward.3} parent=39 // pred_fallthru
              _
            // Predicated region
            $region45: #{ngcf_forward.3} parent=39 // pred_check
              _
            $region46: #{ngcf_forward.3} parent=39 // pred_check_branch
              %294 = sbr.rel (0) target = $region48
            $region47: #{ngcf_forward.3} parent=39 // pred_region
              %s296 = ssub.s32 16, 1
              loop: start=0, step=1, limit=1
              $region49: #{ngcf_forward.3} parent=47 // loop_pre_header
                _
              $region50: #{ngcf_forward.3} parent=47 // loop_header
                %s298 = sphi 0, %s302
                %p299 = scmp.ge.s32.totalorder %s298, 1
                %s303 = sphi %s288, %s288
                %s304 = sphi %s283, %s283
              $region51: #{ngcf_forward.3} parent=47 // loop_header_branch
                %301 = sbr.rel (%p299) target = $region55
              $region52: #{ngcf_forward.3} parent=47 // loop_body
                %v305 = vld [vmem:[%s303] sm:%s296]
                %306 = vst [vmem:[%s304] sm:%s296] %v305
                %v307 = vld [vmem:[%s303 + $0x10] sm:%s296]
                %308 = vst [vmem:[%s304 + $0x4] sm:%s296] %v307
                %v309 = vld [vmem:[%s303 + $0x20] sm:%s296]
                %310 = vst [vmem:[%s304 + $0x8] sm:%s296] %v309
                %v311 = vld [vmem:[%s303 + $0x30] sm:%s296]
                %312 = vst [vmem:[%s304 + $0xc] sm:%s296] %v311
                %v313 = vld [vmem:[%s303 + $0x40] sm:%s296]
                %314 = vst [vmem:[%s304 + $0x10] sm:%s296] %v313
                %v315 = vld [vmem:[%s303 + $0x50] sm:%s296]
                %316 = vst [vmem:[%s304 + $0x14] sm:%s296] %v315
                %v317 = vld [vmem:[%s303 + $0x60] sm:%s296]
                %318 = vst [vmem:[%s304 + $0x18] sm:%s296] %v317
                %v319 = vld [vmem:[%s303 + $0x70] sm:%s296]
                %320 = vst [vmem:[%s304 + $0x1c] sm:%s296] %v319
                %v321 = vld [vmem:[%s303 + $0x80] sm:%s296]
                %322 = vst [vmem:[%s304 + $0x20] sm:%s296] %v321
                %v323 = vld [vmem:[%s303 + $0x90] sm:%s296]
                %324 = vst [vmem:[%s304 + $0x24] sm:%s296] %v323
                %v325 = vld [vmem:[%s303 + $0xa0] sm:%s296]
                %326 = vst [vmem:[%s304 + $0x28] sm:%s296] %v325
                %v327 = vld [vmem:[%s303 + $0xb0] sm:%s296]
                %328 = vst [vmem:[%s304 + $0x2c] sm:%s296] %v327
                %v329 = vld [vmem:[%s303 + $0xc0] sm:%s296]
                %330 = vst [vmem:[%s304 + $0x30] sm:%s296] %v329
                %v331 = vld [vmem:[%s303 + $0xd0] sm:%s296]
                %332 = vst [vmem:[%s304 + $0x34] sm:%s296] %v331
                %v333 = vld [vmem:[%s303 + $0xe0] sm:%s296]
                %334 = vst [vmem:[%s304 + $0x38] sm:%s296] %v333
                %v335 = vld [vmem:[%s303 + $0xf0] sm:%s296]
                %336 = vst [vmem:[%s304 + $0x3c] sm:%s296] %v335
              $region53: #{ngcf_forward.3} parent=47 // loop_footer
                %s302 = sadd.s32 1, %s298
              $region54: #{ngcf_forward.3} parent=47 // loop_footer_branch
                %297 = sbr.rel target = $region50
              $region55: #{ngcf_forward.3} parent=47 // loop_exit
                _
            $region48: #{ngcf_forward.3} parent=39 // pred_fallthru
              _
          $region40: #{ngcf_forward.3} parent=35 // pred_fallthru
            _
          %389 = vnop
        $region36: #{ngcf_forward.3} parent=31 // pred_fallthru
          _
        // Predicated region
        $region74: #{ngcf_forward.3} parent=31 // pred_check
          %p390 = pneg %p78
        $region75: #{ngcf_forward.3} parent=31 // pred_check_branch
          %392 = sbr.rel (%p390) target = $region77
        $region76: #{ngcf_forward.3} parent=31 // pred_region
          %s393 = smul.u32 16, %s26
          %p394 = scmp.lt.s32.totalorder %s393, 63
          %s395 = scalar_select %p394, %s393, 63
          %s396 = smul.addr %s395, 4
          %s397 = scalar_lea.vmem %s1, %s396
          %s398 = smul.u32 16, %s26
        $region77: #{ngcf_forward.3} parent=31 // pred_fallthru
          _
        // Predicated region
        $region78: #{ngcf_forward.3} parent=31 // pred_check
          %p399 = pneg %p104
        $region79: #{ngcf_forward.3} parent=31 // pred_check_branch
          %401 = sbr.rel (%p399) target = $region81
        $region80: #{ngcf_forward.3} parent=31 // pred_region
          %s402 = smul.u32 16, %s25
          %p403 = scmp.lt.s32.totalorder %s402, 63
          %s404 = scalar_select %p403, %s402, 63
          %s405 = smul.addr %s404, 8
          %s406 = scalar_lea.vmem %s2, %s405
          %s407 = smul.u32 16, %s25
        $region81: #{ngcf_forward.3} parent=31 // pred_fallthru
          _
      $region32: #{ngcf_forward.3} parent=5 // pred_fallthru
        _
      %p408 = scmp.le.s32.totalorder 1, %s18
      %p409 = scmp.lt.s32.totalorder %s18, 17
      %p410 = pnand %p408, %p409
      %p411 = pneg %p410
      // Predicated region
      $region82: #{ngcf_forward.3} parent=5 // pred_check
        _
      $region83: #{ngcf_forward.3} parent=5 // pred_check_branch
        %413 = sbr.rel (%p410) target = $region85
      $region84: #{ngcf_forward.3} parent=5 // pred_region
        %s414 = ssub.s32 %s18, 1
        %s415 = sand.u32 %s45, 1
        %s416 = sand.u32 %s45, 1
        %s417 = smul.addr %s416, 64
        %s418 = scalar_lea.vmem [#allocation3], %s417
        // Predicated region
        $region86: #{ngcf_forward.3} parent=84 // pred_check
          %p419 = pneg %p58
        $region87: #{ngcf_forward.3} parent=84 // pred_check_branch
          %421 = sbr.rel (%p419) target = $region89
        $region88: #{ngcf_forward.3} parent=84 // pred_region
          _
        $region89: #{ngcf_forward.3} parent=84 // pred_fallthru
          _
        %s422 = sand.u32 %s45, 1
        %s423 = sand.u32 %s45, 1
        %s424 = smul.addr %s423, 64
        %s425 = scalar_lea.vmem [#allocation3], %s424
        %p426 = pneg %p58
        %p427 = pneg %p55
        %s428 = smul.u32 16, %s28
        %p429 = scmp.lt.s32.totalorder %s428, 63
        %s430 = scalar_select %p429, %s428, 63
        %s431 = smul.addr %s430, 4
        %s432 = scalar_lea.vmem %s1, %s431
        %p433 = pneg %p84
        %p434 = pneg %p81
        %s435 = smul.u32 16, %s27
        %p436 = scmp.lt.s32.totalorder %s435, 63
        %s437 = scalar_select %p436, %s435, 63
        %s438 = smul.addr %s437, 8
        %s439 = scalar_lea.vmem %s2, %s438
        %p440 = pneg %p110
        %p441 = pneg %p107
        %p442 = pneg %p131
        %p443 = pneg %p128
        %p444 = pneg %p152
        %p445 = pneg %p149
        %p446 = pneg %p173
        %p447 = pneg %p170
        %p448 = pneg %p194
        %p449 = pneg %p191
        %p450 = pneg %p220
        %p451 = pneg %p217
        %s452 = sand.u32 %s207, 1
        %s453 = scalar_lea.sflag [#allocation5], %s452
        %s454 = sand.u32 %s207, 1
        %s455 = smul.addr %s454, 128
        %s456 = scalar_lea.vmem [#allocation4], %s455
        %p457 = pneg %p246
        %p458 = pneg %p243
        %s459 = smul.u32 16, %s27
        %p460 = scmp.lt.s32.totalorder %s459, 63
        %s461 = scalar_select %p460, %s459, 63
        %s462 = smul.addr %s461, 8
        %s463 = scalar_lea.vmem %s8, %s462
        %s464 = smul.u32 16, %s27
        %s465 = smul.u32 16, %s28
        %p466 = scmp.lt.s32.totalorder %s465, 63
        %s467 = scalar_select %p466, %s465, 63
        %s468 = smul.addr %s467, 4
        %s469 = scalar_lea.vmem %s1, %s468
        %s470 = smul.u32 16, %s28
        %s471 = smul.u32 16, %s27
        %p472 = scmp.lt.s32.totalorder %s471, 63
        %s473 = scalar_select %p472, %s471, 63
        %s474 = smul.addr %s473, 8
        %s475 = scalar_lea.vmem %s2, %s474
        %s476 = smul.u32 16, %s27
        %s477 = smul.u32 16, %s27
        %s478 = smul.u32 16, %s27
        %p479 = scmp.lt.s32.totalorder %s478, 63
        %s480 = scalar_select %p479, %s478, 63
        %s481 = smul.addr %s480, 8
        %s482 = scalar_lea.vmem %s8, %s481
        %s483 = smul.u32 16, %s27
        %p484 = scmp.eq.s32.totalorder %s28, 0
        // Predicated region
        $region90: #{ngcf_forward.3} parent=84 // pred_check
          %p485 = pneg %p484
        $region91: #{ngcf_forward.3} parent=84 // pred_check_branch
          %487 = sbr.rel (%p485) target = $region93
        $region92: #{ngcf_forward.3} parent=84 // pred_region
          %488 = vst [vmem:[#allocation2] sm:$0xff] 0.0
          %489 = vst [vmem:[#allocation2 + $0x8] sm:$0xff] 0.0
          %490 = vst [vmem:[#allocation2 + $0x10] sm:$0xff] 0.0
          %491 = vst [vmem:[#allocation2 + $0x18] sm:$0xff] 0.0
          %492 = vst [vmem:[#allocation2 + $0x20] sm:$0xff] 0.0
          %493 = vst [vmem:[#allocation2 + $0x28] sm:$0xff] 0.0
          %494 = vst [vmem:[#allocation2 + $0x30] sm:$0xff] 0.0
          %495 = vst [vmem:[#allocation2 + $0x38] sm:$0xff] 0.0
          %496 = vst [vmem:[#allocation2 + $0x40] sm:$0xff] 0.0
          %497 = vst [vmem:[#allocation2 + $0x48] sm:$0xff] 0.0
          %498 = vst [vmem:[#allocation2 + $0x50] sm:$0xff] 0.0
          %499 = vst [vmem:[#allocation2 + $0x58] sm:$0xff] 0.0
          %500 = vst [vmem:[#allocation2 + $0x60] sm:$0xff] 0.0
          %501 = vst [vmem:[#allocation2 + $0x68] sm:$0xff] 0.0
          %502 = vst [vmem:[#allocation2 + $0x70] sm:$0xff] 0.0
          %503 = vst [vmem:[#allocation2 + $0x78] sm:$0xff] 0.0
        $region93: #{ngcf_forward.3} parent=84 // pred_fallthru
          _
        %v504 = vld [vmem:[#allocation2] sm:$0xff]
        %v505 = vld [vmem:[#allocation2 + $0x8] sm:$0xff]
        %v506 = vld [vmem:[#allocation2 + $0x10] sm:$0xff]
        %v507 = vld [vmem:[#allocation2 + $0x18] sm:$0xff]
        %v508 = vld [vmem:[#allocation2 + $0x20] sm:$0xff]
        %v509 = vld [vmem:[#allocation2 + $0x28] sm:$0xff]
        %v510 = vld [vmem:[#allocation2 + $0x30] sm:$0xff]
        %v511 = vld [vmem:[#allocation2 + $0x38] sm:$0xff]
        %v512 = vld [vmem:[#allocation2 + $0x40] sm:$0xff]
        %v513 = vld [vmem:[#allocation2 + $0x48] sm:$0xff]
        %v514 = vld [vmem:[#allocation2 + $0x50] sm:$0xff]
        %v515 = vld [vmem:[#allocation2 + $0x58] sm:$0xff]
        %v516 = vld [vmem:[#allocation2 + $0x60] sm:$0xff]
        %v517 = vld [vmem:[#allocation2 + $0x68] sm:$0xff]
        %v518 = vld [vmem:[#allocation2 + $0x70] sm:$0xff]
        %v519 = vld [vmem:[#allocation2 + $0x78] sm:$0xff]
        %v520 = vld [vmem:[%s418] sm:$0xf]
        %v521 = vld [vmem:[%s418 + $0x4] sm:$0xf]
        %v522 = vld [vmem:[%s418 + $0x8] sm:$0xf]
        %v523 = vld [vmem:[%s418 + $0xc] sm:$0xf]
        %v524 = vld [vmem:[%s418 + $0x10] sm:$0xf]
        %v525 = vld [vmem:[%s418 + $0x14] sm:$0xf]
        %v526 = vld [vmem:[%s418 + $0x18] sm:$0xf]
        %v527 = vld [vmem:[%s418 + $0x1c] sm:$0xf]
        %v528 = vld [vmem:[%s418 + $0x20] sm:$0xf]
        %v529 = vld [vmem:[%s418 + $0x24] sm:$0xf]
        %v530 = vld [vmem:[%s418 + $0x28] sm:$0xf]
        %v531 = vld [vmem:[%s418 + $0x2c] sm:$0xf]
        %v532 = vld [vmem:[%s418 + $0x30] sm:$0xf]
        %v533 = vld [vmem:[%s418 + $0x34] sm:$0xf]
        %v534 = vld [vmem:[%s418 + $0x38] sm:$0xf]
        %v535 = vld [vmem:[%s418 + $0x3c] sm:$0xf]
        %v536 = vld [vmem:[%s469] sm:$0xf]
        %v537 = vld [vmem:[%s469 + $0x4] sm:$0xf]
        %v538 = vld [vmem:[%s469 + $0x8] sm:$0xf]
        %v539 = vld [vmem:[%s469 + $0xc] sm:$0xf]
        %v540 = vld [vmem:[%s469 + $0x10] sm:$0xf]
        %v541 = vld [vmem:[%s469 + $0x14] sm:$0xf]
        %v542 = vld [vmem:[%s469 + $0x18] sm:$0xf]
        %v543 = vld [vmem:[%s469 + $0x1c] sm:$0xf]
        %v544 = vld [vmem:[%s469 + $0x20] sm:$0xf]
        %v545 = vld [vmem:[%s469 + $0x24] sm:$0xf]
        %v546 = vld [vmem:[%s469 + $0x28] sm:$0xf]
        %v547 = vld [vmem:[%s469 + $0x2c] sm:$0xf]
        %v548 = vld [vmem:[%s469 + $0x30] sm:$0xf]
        %v549 = vld [vmem:[%s469 + $0x34] sm:$0xf]
        %v550 = vld [vmem:[%s469 + $0x38] sm:$0xf]
        %v551 = vld [vmem:[%s469 + $0x3c] sm:$0xf]
        %v568 = vunpack.c.l.b16 %v520
        %v569 = vunpack.c.l.b16 %v521
        %v570 = vunpack.c.l.b16 %v522
        %v571 = vunpack.c.l.b16 %v523
        %v572 = vunpack.c.l.b16 %v524
        %v573 = vunpack.c.l.b16 %v525
        %v574 = vunpack.c.l.b16 %v526
        %v575 = vunpack.c.l.b16 %v527
        %v576 = vunpack.c.l.b16 %v528
        %v577 = vunpack.c.l.b16 %v529
        %v578 = vunpack.c.l.b16 %v530
        %v579 = vunpack.c.l.b16 %v531
        %v580 = vunpack.c.l.b16 %v532
        %v581 = vunpack.c.l.b16 %v533
        %v582 = vunpack.c.l.b16 %v534
        %v583 = vunpack.c.l.b16 %v535
        %v584 = vpack.c.b16 %v569, %v568
        %v585 = vpack.c.b16 %v571, %v570
        %v586 = vpack.c.b16 %v573, %v572
        %v587 = vpack.c.b16 %v575, %v574
        %v588 = vpack.c.b16 %v577, %v576
        %v589 = vpack.c.b16 %v579, %v578
        %v590 = vpack.c.b16 %v581, %v580
        %v591 = vpack.c.b16 %v583, %v582
        %v616 = vunpack.c.l.b16 %v536
        %v617 = vunpack.c.l.b16 %v537
        %v618 = vunpack.c.l.b16 %v538
        %v619 = vunpack.c.l.b16 %v539
        %v620 = vunpack.c.l.b16 %v540
        %v621 = vunpack.c.l.b16 %v541
        %v622 = vunpack.c.l.b16 %v542
        %v623 = vunpack.c.l.b16 %v543
        %v624 = vunpack.c.l.b16 %v544
        %v625 = vunpack.c.l.b16 %v545
        %v626 = vunpack.c.l.b16 %v546
        %v627 = vunpack.c.l.b16 %v547
        %v628 = vunpack.c.l.b16 %v548
        %v629 = vunpack.c.l.b16 %v549
        %v630 = vunpack.c.l.b16 %v550
        %v631 = vunpack.c.l.b16 %v551
        %v632 = vpack.c.b16 %v617, %v616
        %v633 = vpack.c.b16 %v619, %v618
        %v634 = vpack.c.b16 %v621, %v620
        %v635 = vpack.c.b16 %v623, %v622
        %v636 = vpack.c.b16 %v625, %v624
        %v637 = vpack.c.b16 %v627, %v626
        %v638 = vpack.c.b16 %v629, %v628
        %v639 = vpack.c.b16 %v631, %v630
        %648 = vmatpush.bf16.msra.mxu0 %v639
        %649 = vmatpush.bf16.msra.mxu0 %v638
        %650 = vmatpush.bf16.msra.mxu0 %v637
        %651 = vmatpush.bf16.msra.mxu0 %v636
        %652 = vmatpush.bf16.msra.mxu0 %v635
        %653 = vmatpush.bf16.msra.mxu0 %v634
        %654 = vmatpush.bf16.msra.mxu0 %v633
        %655 = vmatpush.bf16.msra.mxu0 %v632
        %656 = vmatmul.bf16.gmra.mxu0 %v584
        %v657 = vpop.f32.mrf.mxu0
        %v658 = vadd.f32 0.0, %v657
        %v659 = vpop.f32.mrf.mxu0
        %v660 = vadd.f32 0.0, %v659
        %661 = vmatmul.bf16.gmra.mxu0 %v585
        %v662 = vpop.f32.mrf.mxu0
        %v663 = vadd.f32 0.0, %v662
        %v664 = vpop.f32.mrf.mxu0
        %v665 = vadd.f32 0.0, %v664
        %666 = vmatmul.bf16.gmra.mxu0 %v586
        %v667 = vpop.f32.mrf.mxu0
        %v668 = vadd.f32 0.0, %v667
        %v669 = vpop.f32.mrf.mxu0
        %v670 = vadd.f32 0.0, %v669
        %671 = vmatmul.bf16.gmra.mxu0 %v587
        %v672 = vpop.f32.mrf.mxu0
        %v673 = vadd.f32 0.0, %v672
        %v674 = vpop.f32.mrf.mxu0
        %v675 = vadd.f32 0.0, %v674
        %676 = vmatmul.bf16.gmra.mxu0 %v588
        %v677 = vpop.f32.mrf.mxu0
        %v678 = vadd.f32 0.0, %v677
        %v679 = vpop.f32.mrf.mxu0
        %v680 = vadd.f32 0.0, %v679
        %681 = vmatmul.bf16.gmra.mxu0 %v589
        %v682 = vpop.f32.mrf.mxu0
        %v683 = vadd.f32 0.0, %v682
        %v684 = vpop.f32.mrf.mxu0
        %v685 = vadd.f32 0.0, %v684
        %686 = vmatmul.bf16.gmra.mxu0 %v590
        %v687 = vpop.f32.mrf.mxu0
        %v688 = vadd.f32 0.0, %v687
        %v689 = vpop.f32.mrf.mxu0
        %v690 = vadd.f32 0.0, %v689
        %691 = vmatmul.bf16.gmra.mxu0 %v591
        %v692 = vpop.f32.mrf.mxu0
        %v693 = vadd.f32 0.0, %v692
        %v694 = vpop.f32.mrf.mxu0
        %v695 = vadd.f32 0.0, %v694
        %696 = vdwg.mxu0
        %v697 = vadd.f32 %v504, %v658
        %v698 = vadd.f32 %v505, %v660
        %v699 = vadd.f32 %v506, %v663
        %v700 = vadd.f32 %v507, %v665
        %v701 = vadd.f32 %v508, %v668
        %v702 = vadd.f32 %v509, %v670
        %v703 = vadd.f32 %v510, %v673
        %v704 = vadd.f32 %v511, %v675
        %v705 = vadd.f32 %v512, %v678
        %v706 = vadd.f32 %v513, %v680
        %v707 = vadd.f32 %v514, %v683
        %v708 = vadd.f32 %v515, %v685
        %v709 = vadd.f32 %v516, %v688
        %v710 = vadd.f32 %v517, %v690
        %v711 = vadd.f32 %v518, %v693
        %v712 = vadd.f32 %v519, %v695
        %713 = vst [vmem:[#allocation2] sm:$0xff] %v697
        %714 = vst [vmem:[#allocation2 + $0x8] sm:$0xff] %v698
        %715 = vst [vmem:[#allocation2 + $0x10] sm:$0xff] %v699
        %716 = vst [vmem:[#allocation2 + $0x18] sm:$0xff] %v700
        %717 = vst [vmem:[#allocation2 + $0x20] sm:$0xff] %v701
        %718 = vst [vmem:[#allocation2 + $0x28] sm:$0xff] %v702
        %719 = vst [vmem:[#allocation2 + $0x30] sm:$0xff] %v703
        %720 = vst [vmem:[#allocation2 + $0x38] sm:$0xff] %v704
        %721 = vst [vmem:[#allocation2 + $0x40] sm:$0xff] %v705
        %722 = vst [vmem:[#allocation2 + $0x48] sm:$0xff] %v706
        %723 = vst [vmem:[#allocation2 + $0x50] sm:$0xff] %v707
        %724 = vst [vmem:[#allocation2 + $0x58] sm:$0xff] %v708
        %725 = vst [vmem:[#allocation2 + $0x60] sm:$0xff] %v709
        %726 = vst [vmem:[#allocation2 + $0x68] sm:$0xff] %v710
        %727 = vst [vmem:[#allocation2 + $0x70] sm:$0xff] %v711
        %728 = vst [vmem:[#allocation2 + $0x78] sm:$0xff] %v712
        %p729 = scmp.eq.s32.totalorder %s28, 3
        // Predicated region
        $region94: #{ngcf_forward.3} parent=84 // pred_check
          %p730 = pneg %p729
        $region95: #{ngcf_forward.3} parent=84 // pred_check_branch
          %732 = sbr.rel (%p730) target = $region97
        $region96: #{ngcf_forward.3} parent=84 // pred_region
          %v733 = vld [vmem:[#allocation2] sm:$0xff]
          %v734 = vld [vmem:[#allocation2 + $0x8] sm:$0xff]
          %v735 = vld [vmem:[#allocation2 + $0x10] sm:$0xff]
          %v736 = vld [vmem:[#allocation2 + $0x18] sm:$0xff]
          %v737 = vld [vmem:[#allocation2 + $0x20] sm:$0xff]
          %v738 = vld [vmem:[#allocation2 + $0x28] sm:$0xff]
          %v739 = vld [vmem:[#allocation2 + $0x30] sm:$0xff]
          %v740 = vld [vmem:[#allocation2 + $0x38] sm:$0xff]
          %v741 = vld [vmem:[#allocation2 + $0x40] sm:$0xff]
          %v742 = vld [vmem:[#allocation2 + $0x48] sm:$0xff]
          %v743 = vld [vmem:[#allocation2 + $0x50] sm:$0xff]
          %v744 = vld [vmem:[#allocation2 + $0x58] sm:$0xff]
          %v745 = vld [vmem:[#allocation2 + $0x60] sm:$0xff]
          %v746 = vld [vmem:[#allocation2 + $0x68] sm:$0xff]
          %v747 = vld [vmem:[#allocation2 + $0x70] sm:$0xff]
          %v748 = vld [vmem:[#allocation2 + $0x78] sm:$0xff]
          %v749 = vld [vmem:[%s475] sm:$0xff]
          %v750 = vld [vmem:[%s475 + $0x8] sm:$0xff]
          %v751 = vld [vmem:[%s475 + $0x10] sm:$0xff]
          %v752 = vld [vmem:[%s475 + $0x18] sm:$0xff]
          %v753 = vld [vmem:[%s475 + $0x20] sm:$0xff]
          %v754 = vld [vmem:[%s475 + $0x28] sm:$0xff]
          %v755 = vld [vmem:[%s475 + $0x30] sm:$0xff]
          %v756 = vld [vmem:[%s475 + $0x38] sm:$0xff]
          %v757 = vld [vmem:[%s475 + $0x40] sm:$0xff]
          %v758 = vld [vmem:[%s475 + $0x48] sm:$0xff]
          %v759 = vld [vmem:[%s475 + $0x50] sm:$0xff]
          %v760 = vld [vmem:[%s475 + $0x58] sm:$0xff]
          %v761 = vld [vmem:[%s475 + $0x60] sm:$0xff]
          %v762 = vld [vmem:[%s475 + $0x68] sm:$0xff]
          %v763 = vld [vmem:[%s475 + $0x70] sm:$0xff]
          %v764 = vld [vmem:[%s475 + $0x78] sm:$0xff]
          %v765 = vpack.c.bf16 %v734, %v733
          %v766 = vpack.c.bf16 %v736, %v735
          %v767 = vpack.c.bf16 %v738, %v737
          %v768 = vpack.c.bf16 %v740, %v739
          %v769 = vpack.c.bf16 %v742, %v741
          %v770 = vpack.c.bf16 %v744, %v743
          %v771 = vpack.c.bf16 %v746, %v745
          %v772 = vpack.c.bf16 %v748, %v747
          %v773 = vld [vmem:[%s3] sm:$0xf]
          %v774 = vld [vmem:[%s3 + $0x4] sm:$0xf]
          %v775 = vld [vmem:[%s3 + $0x8] sm:$0xf]
          %v776 = vld [vmem:[%s3 + $0xc] sm:$0xf]
          %v777 = vld [vmem:[%s3 + $0x10] sm:$0xf]
          %v778 = vld [vmem:[%s3 + $0x14] sm:$0xf]
          %v779 = vld [vmem:[%s3 + $0x18] sm:$0xf]
          %v780 = vld [vmem:[%s3 + $0x1c] sm:$0xf]
          %v781 = vld [vmem:[%s3 + $0x20] sm:$0xf]
          %v782 = vld [vmem:[%s3 + $0x24] sm:$0xf]
          %v783 = vld [vmem:[%s3 + $0x28] sm:$0xf]
          %v784 = vld [vmem:[%s3 + $0x2c] sm:$0xf]
          %v785 = vld [vmem:[%s3 + $0x30] sm:$0xf]
          %v786 = vld [vmem:[%s3 + $0x34] sm:$0xf]
          %v787 = vld [vmem:[%s3 + $0x38] sm:$0xf]
          %v788 = vld [vmem:[%s3 + $0x3c] sm:$0xf]
          %v789 = vld [vmem:[%s4] sm:$0x1]
          %v791 = vperm.slane %v789, 0
          %v809 = vunpack.c.l.b16 %v773
          %v810 = vunpack.c.l.b16 %v774
          %v811 = vunpack.c.l.b16 %v775
          %v812 = vunpack.c.l.b16 %v776
          %v813 = vunpack.c.l.b16 %v777
          %v814 = vunpack.c.l.b16 %v778
          %v815 = vunpack.c.l.b16 %v779
          %v816 = vunpack.c.l.b16 %v780
          %v817 = vunpack.c.l.b16 %v781
          %v818 = vunpack.c.l.b16 %v782
          %v819 = vunpack.c.l.b16 %v783
          %v820 = vunpack.c.l.b16 %v784
          %v821 = vunpack.c.l.b16 %v785
          %v822 = vunpack.c.l.b16 %v786
          %v823 = vunpack.c.l.b16 %v787
          %v824 = vunpack.c.l.b16 %v788
          %v825 = vpack.c.b16 %v810, %v809
          %v826 = vpack.c.b16 %v812, %v811
          %v827 = vpack.c.b16 %v814, %v813
          %v828 = vpack.c.b16 %v816, %v815
          %v829 = vpack.c.b16 %v818, %v817
          %v830 = vpack.c.b16 %v820, %v819
          %v831 = vpack.c.b16 %v822, %v821
          %v832 = vpack.c.b16 %v824, %v823
          %841 = vmatpush.bf16.msra.mxu0 %v832
          %842 = vmatpush.bf16.msra.mxu0 %v831
          %843 = vmatpush.bf16.msra.mxu0 %v830
          %844 = vmatpush.bf16.msra.mxu0 %v829
          %845 = vmatpush.bf16.msra.mxu0 %v828
          %846 = vmatpush.bf16.msra.mxu0 %v827
          %847 = vmatpush.bf16.msra.mxu0 %v826
          %848 = vmatpush.bf16.msra.mxu0 %v825
          %849 = vmatmul.bf16.gmra.mxu0 %v765
          %v850 = vpop.f32.mrf.mxu0
          %v851 = vadd.f32 %v791, %v850
          %v852 = vpop.f32.mrf.mxu0
          %v853 = vadd.f32 %v791, %v852
          %854 = vmatmul.bf16.gmra.mxu0 %v766
          %v855 = vpop.f32.mrf.mxu0
          %v856 = vadd.f32 %v791, %v855
          %v857 = vpop.f32.mrf.mxu0
          %v858 = vadd.f32 %v791, %v857
          %859 = vmatmul.bf16.gmra.mxu0 %v767
          %v860 = vpop.f32.mrf.mxu0
          %v861 = vadd.f32 %v791, %v860
          %v862 = vpop.f32.mrf.mxu0
          %v863 = vadd.f32 %v791, %v862
          %864 = vmatmul.bf16.gmra.mxu0 %v768
          %v865 = vpop.f32.mrf.mxu0
          %v866 = vadd.f32 %v791, %v865
          %v867 = vpop.f32.mrf.mxu0
          %v868 = vadd.f32 %v791, %v867
          %869 = vmatmul.bf16.gmra.mxu0 %v769
          %v870 = vpop.f32.mrf.mxu0
          %v871 = vadd.f32 %v791, %v870
          %v872 = vpop.f32.mrf.mxu0
          %v873 = vadd.f32 %v791, %v872
          %874 = vmatmul.bf16.gmra.mxu0 %v770
          %v875 = vpop.f32.mrf.mxu0
          %v876 = vadd.f32 %v791, %v875
          %v877 = vpop.f32.mrf.mxu0
          %v878 = vadd.f32 %v791, %v877
          %879 = vmatmul.bf16.gmra.mxu0 %v771
          %v880 = vpop.f32.mrf.mxu0
          %v881 = vadd.f32 %v791, %v880
          %v882 = vpop.f32.mrf.mxu0
          %v883 = vadd.f32 %v791, %v882
          %884 = vmatmul.bf16.gmra.mxu0 %v772
          %v885 = vpop.f32.mrf.mxu0
          %v886 = vadd.f32 %v791, %v885
          %v887 = vpop.f32.mrf.mxu0
          %v888 = vadd.f32 %v791, %v887
          %889 = vdwg.mxu0
          %vm890 = vcmp.ge.f32.partialorder %v851, 0.0
          %vm891 = vcmp.ge.f32.partialorder %v853, 0.0
          %vm892 = vcmp.ge.f32.partialorder %v856, 0.0
          %vm893 = vcmp.ge.f32.partialorder %v858, 0.0
          %vm894 = vcmp.ge.f32.partialorder %v861, 0.0
          %vm895 = vcmp.ge.f32.partialorder %v863, 0.0
          %vm896 = vcmp.ge.f32.partialorder %v866, 0.0
          %vm897 = vcmp.ge.f32.partialorder %v868, 0.0
          %vm898 = vcmp.ge.f32.partialorder %v871, 0.0
          %vm899 = vcmp.ge.f32.partialorder %v873, 0.0
          %vm900 = vcmp.ge.f32.partialorder %v876, 0.0
          %vm901 = vcmp.ge.f32.partialorder %v878, 0.0
          %vm902 = vcmp.ge.f32.partialorder %v881, 0.0
          %vm903 = vcmp.ge.f32.partialorder %v883, 0.0
          %vm904 = vcmp.ge.f32.partialorder %v886, 0.0
          %vm905 = vcmp.ge.f32.partialorder %v888, 0.0
          %v906 = vmul.f32 %v851, 0.01
          %v907 = vmul.f32 %v853, 0.01
          %v908 = vmul.f32 %v856, 0.01
          %v909 = vmul.f32 %v858, 0.01
          %v910 = vmul.f32 %v861, 0.01
          %v911 = vmul.f32 %v863, 0.01
          %v912 = vmul.f32 %v866, 0.01
          %v913 = vmul.f32 %v868, 0.01
          %v914 = vmul.f32 %v871, 0.01
          %v915 = vmul.f32 %v873, 0.01
          %v916 = vmul.f32 %v876, 0.01
          %v917 = vmul.f32 %v878, 0.01
          %v918 = vmul.f32 %v881, 0.01
          %v919 = vmul.f32 %v883, 0.01
          %v920 = vmul.f32 %v886, 0.01
          %v921 = vmul.f32 %v888, 0.01
          %v922 = vsel %vm890, %v851, %v906
          %v923 = vsel %vm891, %v853, %v907
          %v924 = vsel %vm892, %v856, %v908
          %v925 = vsel %vm893, %v858, %v909
          %v926 = vsel %vm894, %v861, %v910
          %v927 = vsel %vm895, %v863, %v911
          %v928 = vsel %vm896, %v866, %v912
          %v929 = vsel %vm897, %v868, %v913
          %v930 = vsel %vm898, %v871, %v914
          %v931 = vsel %vm899, %v873, %v915
          %v932 = vsel %vm900, %v876, %v916
          %v933 = vsel %vm901, %v878, %v917
          %v934 = vsel %vm902, %v881, %v918
          %v935 = vsel %vm903, %v883, %v919
          %v936 = vsel %vm904, %v886, %v920
          %v937 = vsel %vm905, %v888, %v921
          %v938 = vmul.f32 %v749, %v733
          %v939 = vmul.f32 %v750, %v734
          %v940 = vmul.f32 %v751, %v735
          %v941 = vmul.f32 %v752, %v736
          %v942 = vmul.f32 %v753, %v737
          %v943 = vmul.f32 %v754, %v738
          %v944 = vmul.f32 %v755, %v739
          %v945 = vmul.f32 %v756, %v740
          %v946 = vmul.f32 %v757, %v741
          %v947 = vmul.f32 %v758, %v742
          %v948 = vmul.f32 %v759, %v743
          %v949 = vmul.f32 %v760, %v744
          %v950 = vmul.f32 %v761, %v745
          %v951 = vmul.f32 %v762, %v746
          %v952 = vmul.f32 %v763, %v747
          %v953 = vmul.f32 %v764, %v748
          %v954 = vpack.c.bf16 %v939, %v938
          %v955 = vpack.c.bf16 %v941, %v940
          %v956 = vpack.c.bf16 %v943, %v942
          %v957 = vpack.c.bf16 %v945, %v944
          %v958 = vpack.c.bf16 %v947, %v946
          %v959 = vpack.c.bf16 %v949, %v948
          %v960 = vpack.c.bf16 %v951, %v950
          %v961 = vpack.c.bf16 %v953, %v952
          %v962 = vld [vmem:[%s5] sm:$0xf]
          %v963 = vld [vmem:[%s5 + $0x4] sm:$0xf]
          %v964 = vld [vmem:[%s5 + $0x8] sm:$0xf]
          %v965 = vld [vmem:[%s5 + $0xc] sm:$0xf]
          %v966 = vld [vmem:[%s5 + $0x10] sm:$0xf]
          %v967 = vld [vmem:[%s5 + $0x14] sm:$0xf]
          %v968 = vld [vmem:[%s5 + $0x18] sm:$0xf]
          %v969 = vld [vmem:[%s5 + $0x1c] sm:$0xf]
          %v970 = vld [vmem:[%s5 + $0x20] sm:$0xf]
          %v971 = vld [vmem:[%s5 + $0x24] sm:$0xf]
          %v972 = vld [vmem:[%s5 + $0x28] sm:$0xf]
          %v973 = vld [vmem:[%s5 + $0x2c] sm:$0xf]
          %v974 = vld [vmem:[%s5 + $0x30] sm:$0xf]
          %v975 = vld [vmem:[%s5 + $0x34] sm:$0xf]
          %v976 = vld [vmem:[%s5 + $0x38] sm:$0xf]
          %v977 = vld [vmem:[%s5 + $0x3c] sm:$0xf]
          %v978 = vld [vmem:[%s6] sm:$0x1]
          %v980 = vperm.slane %v978, 0
          %v998 = vunpack.c.l.b16 %v962
          %v999 = vunpack.c.l.b16 %v963
          %v1000 = vunpack.c.l.b16 %v964
          %v1001 = vunpack.c.l.b16 %v965
          %v1002 = vunpack.c.l.b16 %v966
          %v1003 = vunpack.c.l.b16 %v967
          %v1004 = vunpack.c.l.b16 %v968
          %v1005 = vunpack.c.l.b16 %v969
          %v1006 = vunpack.c.l.b16 %v970
          %v1007 = vunpack.c.l.b16 %v971
          %v1008 = vunpack.c.l.b16 %v972
          %v1009 = vunpack.c.l.b16 %v973
          %v1010 = vunpack.c.l.b16 %v974
          %v1011 = vunpack.c.l.b16 %v975
          %v1012 = vunpack.c.l.b16 %v976
          %v1013 = vunpack.c.l.b16 %v977
          %v1014 = vpack.c.b16 %v999, %v998
          %v1015 = vpack.c.b16 %v1001, %v1000
          %v1016 = vpack.c.b16 %v1003, %v1002
          %v1017 = vpack.c.b16 %v1005, %v1004
          %v1018 = vpack.c.b16 %v1007, %v1006
          %v1019 = vpack.c.b16 %v1009, %v1008
          %v1020 = vpack.c.b16 %v1011, %v1010
          %v1021 = vpack.c.b16 %v1013, %v1012
          %1030 = vmatpush.bf16.msra.mxu0 %v1021
          %1031 = vmatpush.bf16.msra.mxu0 %v1020
          %1032 = vmatpush.bf16.msra.mxu0 %v1019
          %1033 = vmatpush.bf16.msra.mxu0 %v1018
          %1034 = vmatpush.bf16.msra.mxu0 %v1017
          %1035 = vmatpush.bf16.msra.mxu0 %v1016
          %1036 = vmatpush.bf16.msra.mxu0 %v1015
          %1037 = vmatpush.bf16.msra.mxu0 %v1014
          %1038 = vmatmul.bf16.gmra.mxu0 %v954
          %v1039 = vpop.f32.mrf.mxu0
          %v1040 = vadd.f32 %v980, %v1039
          %v1041 = vpop.f32.mrf.mxu0
          %v1042 = vadd.f32 %v980, %v1041
          %1043 = vmatmul.bf16.gmra.mxu0 %v955
          %v1044 = vpop.f32.mrf.mxu0
          %v1045 = vadd.f32 %v980, %v1044
          %v1046 = vpop.f32.mrf.mxu0
          %v1047 = vadd.f32 %v980, %v1046
          %1048 = vmatmul.bf16.gmra.mxu0 %v956
          %v1049 = vpop.f32.mrf.mxu0
          %v1050 = vadd.f32 %v980, %v1049
          %v1051 = vpop.f32.mrf.mxu0
          %v1052 = vadd.f32 %v980, %v1051
          %1053 = vmatmul.bf16.gmra.mxu0 %v957
          %v1054 = vpop.f32.mrf.mxu0
          %v1055 = vadd.f32 %v980, %v1054
          %v1056 = vpop.f32.mrf.mxu0
          %v1057 = vadd.f32 %v980, %v1056
          %1058 = vmatmul.bf16.gmra.mxu0 %v958
          %v1059 = vpop.f32.mrf.mxu0
          %v1060 = vadd.f32 %v980, %v1059
          %v1061 = vpop.f32.mrf.mxu0
          %v1062 = vadd.f32 %v980, %v1061
          %1063 = vmatmul.bf16.gmra.mxu0 %v959
          %v1064 = vpop.f32.mrf.mxu0
          %v1065 = vadd.f32 %v980, %v1064
          %v1066 = vpop.f32.mrf.mxu0
          %v1067 = vadd.f32 %v980, %v1066
          %1068 = vmatmul.bf16.gmra.mxu0 %v960
          %v1069 = vpop.f32.mrf.mxu0
          %v1070 = vadd.f32 %v980, %v1069
          %v1071 = vpop.f32.mrf.mxu0
          %v1072 = vadd.f32 %v980, %v1071
          %1073 = vmatmul.bf16.gmra.mxu0 %v961
          %v1074 = vpop.f32.mrf.mxu0
          %v1075 = vadd.f32 %v980, %v1074
          %v1076 = vpop.f32.mrf.mxu0
          %v1077 = vadd.f32 %v980, %v1076
          %1078 = vdwg.mxu0
          %vm1079 = vcmp.ge.f32.partialorder %v1040, 0.0
          %vm1080 = vcmp.ge.f32.partialorder %v1042, 0.0
          %vm1081 = vcmp.ge.f32.partialorder %v1045, 0.0
          %vm1082 = vcmp.ge.f32.partialorder %v1047, 0.0
          %vm1083 = vcmp.ge.f32.partialorder %v1050, 0.0
          %vm1084 = vcmp.ge.f32.partialorder %v1052, 0.0
          %vm1085 = vcmp.ge.f32.partialorder %v1055, 0.0
          %vm1086 = vcmp.ge.f32.partialorder %v1057, 0.0
          %vm1087 = vcmp.ge.f32.partialorder %v1060, 0.0
          %vm1088 = vcmp.ge.f32.partialorder %v1062, 0.0
          %vm1089 = vcmp.ge.f32.partialorder %v1065, 0.0
          %vm1090 = vcmp.ge.f32.partialorder %v1067, 0.0
          %vm1091 = vcmp.ge.f32.partialorder %v1070, 0.0
          %vm1092 = vcmp.ge.f32.partialorder %v1072, 0.0
          %vm1093 = vcmp.ge.f32.partialorder %v1075, 0.0
          %vm1094 = vcmp.ge.f32.partialorder %v1077, 0.0
          %v1095 = vmul.f32 %v1040, 0.01
          %v1096 = vmul.f32 %v1042, 0.01
          %v1097 = vmul.f32 %v1045, 0.01
          %v1098 = vmul.f32 %v1047, 0.01
          %v1099 = vmul.f32 %v1050, 0.01
          %v1100 = vmul.f32 %v1052, 0.01
          %v1101 = vmul.f32 %v1055, 0.01
          %v1102 = vmul.f32 %v1057, 0.01
          %v1103 = vmul.f32 %v1060, 0.01
          %v1104 = vmul.f32 %v1062, 0.01
          %v1105 = vmul.f32 %v1065, 0.01
          %v1106 = vmul.f32 %v1067, 0.01
          %v1107 = vmul.f32 %v1070, 0.01
          %v1108 = vmul.f32 %v1072, 0.01
          %v1109 = vmul.f32 %v1075, 0.01
          %v1110 = vmul.f32 %v1077, 0.01
          %v1111 = vsel %vm1079, %v1040, %v1095
          %v1112 = vsel %vm1080, %v1042, %v1096
          %v1113 = vsel %vm1081, %v1045, %v1097
          %v1114 = vsel %vm1082, %v1047, %v1098
          %v1115 = vsel %vm1083, %v1050, %v1099
          %v1116 = vsel %vm1084, %v1052, %v1100
          %v1117 = vsel %vm1085, %v1055, %v1101
          %v1118 = vsel %vm1086, %v1057, %v1102
          %v1119 = vsel %vm1087, %v1060, %v1103
          %v1120 = vsel %vm1088, %v1062, %v1104
          %v1121 = vsel %vm1089, %v1065, %v1105
          %v1122 = vsel %vm1090, %v1067, %v1106
          %v1123 = vsel %vm1091, %v1070, %v1107
          %v1124 = vsel %vm1092, %v1072, %v1108
          %v1125 = vsel %vm1093, %v1075, %v1109
          %v1126 = vsel %vm1094, %v1077, %v1110
          %v1127 = vadd.f32 %v922, %v1111
          %v1128 = vadd.f32 %v923, %v1112
          %v1129 = vadd.f32 %v924, %v1113
          %v1130 = vadd.f32 %v925, %v1114
          %v1131 = vadd.f32 %v926, %v1115
          %v1132 = vadd.f32 %v927, %v1116
          %v1133 = vadd.f32 %v928, %v1117
          %v1134 = vadd.f32 %v929, %v1118
          %v1135 = vadd.f32 %v930, %v1119
          %v1136 = vadd.f32 %v931, %v1120
          %v1137 = vadd.f32 %v932, %v1121
          %v1138 = vadd.f32 %v933, %v1122
          %v1139 = vadd.f32 %v934, %v1123
          %v1140 = vadd.f32 %v935, %v1124
          %v1141 = vadd.f32 %v936, %v1125
          %v1142 = vadd.f32 %v937, %v1126
          %v1143 = vmul.f32 %v1127, %v1127
          %v1144 = vmul.f32 %v1128, %v1128
          %v1145 = vmul.f32 %v1129, %v1129
          %v1146 = vmul.f32 %v1130, %v1130
          %v1147 = vmul.f32 %v1131, %v1131
          %v1148 = vmul.f32 %v1132, %v1132
          %v1149 = vmul.f32 %v1133, %v1133
          %v1150 = vmul.f32 %v1134, %v1134
          %v1151 = vmul.f32 %v1135, %v1135
          %v1152 = vmul.f32 %v1136, %v1136
          %v1153 = vmul.f32 %v1137, %v1137
          %v1154 = vmul.f32 %v1138, %v1138
          %v1155 = vmul.f32 %v1139, %v1139
          %v1156 = vmul.f32 %v1140, %v1140
          %v1157 = vmul.f32 %v1141, %v1141
          %v1158 = vmul.f32 %v1142, %v1142
          %1159 = vadd.xlane.f32.xlu0 %v1143
          %v1160 = vpop.xlane.xlu0 %1159
          %1161 = vadd.xlane.f32.xlu0 %v1144
          %v1162 = vpop.xlane.xlu0 %1161
          %1163 = vadd.xlane.f32.xlu0 %v1145
          %v1164 = vpop.xlane.xlu0 %1163
          %1165 = vadd.xlane.f32.xlu0 %v1146
          %v1166 = vpop.xlane.xlu0 %1165
          %1167 = vadd.xlane.f32.xlu0 %v1147
          %v1168 = vpop.xlane.xlu0 %1167
          %1169 = vadd.xlane.f32.xlu0 %v1148
          %v1170 = vpop.xlane.xlu0 %1169
          %1171 = vadd.xlane.f32.xlu0 %v1149
          %v1172 = vpop.xlane.xlu0 %1171
          %1173 = vadd.xlane.f32.xlu0 %v1150
          %v1174 = vpop.xlane.xlu0 %1173
          %1175 = vadd.xlane.f32.xlu0 %v1151
          %v1176 = vpop.xlane.xlu0 %1175
          %1177 = vadd.xlane.f32.xlu0 %v1152
          %v1178 = vpop.xlane.xlu0 %1177
          %1179 = vadd.xlane.f32.xlu0 %v1153
          %v1180 = vpop.xlane.xlu0 %1179
          %1181 = vadd.xlane.f32.xlu0 %v1154
          %v1182 = vpop.xlane.xlu0 %1181
          %1183 = vadd.xlane.f32.xlu0 %v1155
          %v1184 = vpop.xlane.xlu0 %1183
          %1185 = vadd.xlane.f32.xlu0 %v1156
          %v1186 = vpop.xlane.xlu0 %1185
          %1187 = vadd.xlane.f32.xlu0 %v1157
          %v1188 = vpop.xlane.xlu0 %1187
          %1189 = vadd.xlane.f32.xlu0 %v1158
          %v1190 = vpop.xlane.xlu0 %1189
          %v1191 = vmax.f32 %v1160, 1e-24
          %v1192 = vmax.f32 %v1162, 1e-24
          %v1193 = vmax.f32 %v1164, 1e-24
          %v1194 = vmax.f32 %v1166, 1e-24
          %v1195 = vmax.f32 %v1168, 1e-24
          %v1196 = vmax.f32 %v1170, 1e-24
          %v1197 = vmax.f32 %v1172, 1e-24
          %v1198 = vmax.f32 %v1174, 1e-24
          %v1199 = vmax.f32 %v1176, 1e-24
          %v1200 = vmax.f32 %v1178, 1e-24
          %v1201 = vmax.f32 %v1180, 1e-24
          %v1202 = vmax.f32 %v1182, 1e-24
          %v1203 = vmax.f32 %v1184, 1e-24
          %v1204 = vmax.f32 %v1186, 1e-24
          %v1205 = vmax.f32 %v1188, 1e-24
          %v1206 = vmax.f32 %v1190, 1e-24
          %v1207 = vrsqrt.pop %v1191
          %v1208 = vmul.f32 %v1207, %v1191
          %v1209 = vmul.f32 %v1208, %v1207
          %v1210 = vmul.f32 0.5, %v1209
          %v1211 = vsub.f32 1.5, %v1210
          %v1212 = vmul.f32 %v1207, %v1211
          %vm1213 = vweird.f32 %v1191
          %vm1214 = vweird.f32 %v1207
          %vm1215 = vmor %vm1213, %vm1214
          %v1216 = vsel %vm1215, %v1207, %v1212
          %v1217 = vrsqrt.pop %v1192
          %v1218 = vmul.f32 %v1217, %v1192
          %v1219 = vmul.f32 %v1218, %v1217
          %v1220 = vmul.f32 0.5, %v1219
          %v1221 = vsub.f32 1.5, %v1220
          %v1222 = vmul.f32 %v1217, %v1221
          %vm1223 = vweird.f32 %v1192
          %vm1224 = vweird.f32 %v1217
          %vm1225 = vmor %vm1223, %vm1224
          %v1226 = vsel %vm1225, %v1217, %v1222
          %v1227 = vrsqrt.pop %v1193
          %v1228 = vmul.f32 %v1227, %v1193
          %v1229 = vmul.f32 %v1228, %v1227
          %v1230 = vmul.f32 0.5, %v1229
          %v1231 = vsub.f32 1.5, %v1230
          %v1232 = vmul.f32 %v1227, %v1231
          %vm1233 = vweird.f32 %v1193
          %vm1234 = vweird.f32 %v1227
          %vm1235 = vmor %vm1233, %vm1234
          %v1236 = vsel %vm1235, %v1227, %v1232
          %v1237 = vrsqrt.pop %v1194
          %v1238 = vmul.f32 %v1237, %v1194
          %v1239 = vmul.f32 %v1238, %v1237
          %v1240 = vmul.f32 0.5, %v1239
          %v1241 = vsub.f32 1.5, %v1240
          %v1242 = vmul.f32 %v1237, %v1241
          %vm1243 = vweird.f32 %v1194
          %vm1244 = vweird.f32 %v1237
          %vm1245 = vmor %vm1243, %vm1244
          %v1246 = vsel %vm1245, %v1237, %v1242
          %v1247 = vrsqrt.pop %v1195
          %v1248 = vmul.f32 %v1247, %v1195
          %v1249 = vmul.f32 %v1248, %v1247
          %v1250 = vmul.f32 0.5, %v1249
          %v1251 = vsub.f32 1.5, %v1250
          %v1252 = vmul.f32 %v1247, %v1251
          %vm1253 = vweird.f32 %v1195
          %vm1254 = vweird.f32 %v1247
          %vm1255 = vmor %vm1253, %vm1254
          %v1256 = vsel %vm1255, %v1247, %v1252
          %v1257 = vrsqrt.pop %v1196
          %v1258 = vmul.f32 %v1257, %v1196
          %v1259 = vmul.f32 %v1258, %v1257
          %v1260 = vmul.f32 0.5, %v1259
          %v1261 = vsub.f32 1.5, %v1260
          %v1262 = vmul.f32 %v1257, %v1261
          %vm1263 = vweird.f32 %v1196
          %vm1264 = vweird.f32 %v1257
          %vm1265 = vmor %vm1263, %vm1264
          %v1266 = vsel %vm1265, %v1257, %v1262
          %v1267 = vrsqrt.pop %v1197
          %v1268 = vmul.f32 %v1267, %v1197
          %v1269 = vmul.f32 %v1268, %v1267
          %v1270 = vmul.f32 0.5, %v1269
          %v1271 = vsub.f32 1.5, %v1270
          %v1272 = vmul.f32 %v1267, %v1271
          %vm1273 = vweird.f32 %v1197
          %vm1274 = vweird.f32 %v1267
          %vm1275 = vmor %vm1273, %vm1274
          %v1276 = vsel %vm1275, %v1267, %v1272
          %v1277 = vrsqrt.pop %v1198
          %v1278 = vmul.f32 %v1277, %v1198
          %v1279 = vmul.f32 %v1278, %v1277
          %v1280 = vmul.f32 0.5, %v1279
          %v1281 = vsub.f32 1.5, %v1280
          %v1282 = vmul.f32 %v1277, %v1281
          %vm1283 = vweird.f32 %v1198
          %vm1284 = vweird.f32 %v1277
          %vm1285 = vmor %vm1283, %vm1284
          %v1286 = vsel %vm1285, %v1277, %v1282
          %v1287 = vrsqrt.pop %v1199
          %v1288 = vmul.f32 %v1287, %v1199
          %v1289 = vmul.f32 %v1288, %v1287
          %v1290 = vmul.f32 0.5, %v1289
          %v1291 = vsub.f32 1.5, %v1290
          %v1292 = vmul.f32 %v1287, %v1291
          %vm1293 = vweird.f32 %v1199
          %vm1294 = vweird.f32 %v1287
          %vm1295 = vmor %vm1293, %vm1294
          %v1296 = vsel %vm1295, %v1287, %v1292
          %v1297 = vrsqrt.pop %v1200
          %v1298 = vmul.f32 %v1297, %v1200
          %v1299 = vmul.f32 %v1298, %v1297
          %v1300 = vmul.f32 0.5, %v1299
          %v1301 = vsub.f32 1.5, %v1300
          %v1302 = vmul.f32 %v1297, %v1301
          %vm1303 = vweird.f32 %v1200
          %vm1304 = vweird.f32 %v1297
          %vm1305 = vmor %vm1303, %vm1304
          %v1306 = vsel %vm1305, %v1297, %v1302
          %v1307 = vrsqrt.pop %v1201
          %v1308 = vmul.f32 %v1307, %v1201
          %v1309 = vmul.f32 %v1308, %v1307
          %v1310 = vmul.f32 0.5, %v1309
          %v1311 = vsub.f32 1.5, %v1310
          %v1312 = vmul.f32 %v1307, %v1311
          %vm1313 = vweird.f32 %v1201
          %vm1314 = vweird.f32 %v1307
          %vm1315 = vmor %vm1313, %vm1314
          %v1316 = vsel %vm1315, %v1307, %v1312
          %v1317 = vrsqrt.pop %v1202
          %v1318 = vmul.f32 %v1317, %v1202
          %v1319 = vmul.f32 %v1318, %v1317
          %v1320 = vmul.f32 0.5, %v1319
          %v1321 = vsub.f32 1.5, %v1320
          %v1322 = vmul.f32 %v1317, %v1321
          %vm1323 = vweird.f32 %v1202
          %vm1324 = vweird.f32 %v1317
          %vm1325 = vmor %vm1323, %vm1324
          %v1326 = vsel %vm1325, %v1317, %v1322
          %v1327 = vrsqrt.pop %v1203
          %v1328 = vmul.f32 %v1327, %v1203
          %v1329 = vmul.f32 %v1328, %v1327
          %v1330 = vmul.f32 0.5, %v1329
          %v1331 = vsub.f32 1.5, %v1330
          %v1332 = vmul.f32 %v1327, %v1331
          %vm1333 = vweird.f32 %v1203
          %vm1334 = vweird.f32 %v1327
          %vm1335 = vmor %vm1333, %vm1334
          %v1336 = vsel %vm1335, %v1327, %v1332
          %v1337 = vrsqrt.pop %v1204
          %v1338 = vmul.f32 %v1337, %v1204
          %v1339 = vmul.f32 %v1338, %v1337
          %v1340 = vmul.f32 0.5, %v1339
          %v1341 = vsub.f32 1.5, %v1340
          %v1342 = vmul.f32 %v1337, %v1341
          %vm1343 = vweird.f32 %v1204
          %vm1344 = vweird.f32 %v1337
          %vm1345 = vmor %vm1343, %vm1344
          %v1346 = vsel %vm1345, %v1337, %v1342
          %v1347 = vrsqrt.pop %v1205
          %v1348 = vmul.f32 %v1347, %v1205
          %v1349 = vmul.f32 %v1348, %v1347
          %v1350 = vmul.f32 0.5, %v1349
          %v1351 = vsub.f32 1.5, %v1350
          %v1352 = vmul.f32 %v1347, %v1351
          %vm1353 = vweird.f32 %v1205
          %vm1354 = vweird.f32 %v1347
          %vm1355 = vmor %vm1353, %vm1354
          %v1356 = vsel %vm1355, %v1347, %v1352
          %v1357 = vrsqrt.pop %v1206
          %v1358 = vmul.f32 %v1357, %v1206
          %v1359 = vmul.f32 %v1358, %v1357
          %v1360 = vmul.f32 0.5, %v1359
          %v1361 = vsub.f32 1.5, %v1360
          %v1362 = vmul.f32 %v1357, %v1361
          %vm1363 = vweird.f32 %v1206
          %vm1364 = vweird.f32 %v1357
          %vm1365 = vmor %vm1363, %vm1364
          %v1366 = vsel %vm1365, %v1357, %v1362
          %1367 = vst [vmem:[%s456] sm:$0xff] %v1127
          %1368 = vst [vmem:[%s456 + $0x8] sm:$0xff] %v1128
          %1369 = vst [vmem:[%s456 + $0x10] sm:$0xff] %v1129
          %1370 = vst [vmem:[%s456 + $0x18] sm:$0xff] %v1130
          %1371 = vst [vmem:[%s456 + $0x20] sm:$0xff] %v1131
          %1372 = vst [vmem:[%s456 + $0x28] sm:$0xff] %v1132
          %1373 = vst [vmem:[%s456 + $0x30] sm:$0xff] %v1133
          %1374 = vst [vmem:[%s456 + $0x38] sm:$0xff] %v1134
          %1375 = vst [vmem:[%s456 + $0x40] sm:$0xff] %v1135
          %1376 = vst [vmem:[%s456 + $0x48] sm:$0xff] %v1136
          %1377 = vst [vmem:[%s456 + $0x50] sm:$0xff] %v1137
          %1378 = vst [vmem:[%s456 + $0x58] sm:$0xff] %v1138
          %1379 = vst [vmem:[%s456 + $0x60] sm:$0xff] %v1139
          %1380 = vst [vmem:[%s456 + $0x68] sm:$0xff] %v1140
          %1381 = vst [vmem:[%s456 + $0x70] sm:$0xff] %v1141
          %1382 = vst [vmem:[%s456 + $0x78] sm:$0xff] %v1142
          %v1383 = vmul.f32 %v1127, %v1216
          %v1384 = vmul.f32 %v1128, %v1226
          %v1385 = vmul.f32 %v1129, %v1236
          %v1386 = vmul.f32 %v1130, %v1246
          %v1387 = vmul.f32 %v1131, %v1256
          %v1388 = vmul.f32 %v1132, %v1266
          %v1389 = vmul.f32 %v1133, %v1276
          %v1390 = vmul.f32 %v1134, %v1286
          %v1391 = vmul.f32 %v1135, %v1296
          %v1392 = vmul.f32 %v1136, %v1306
          %v1393 = vmul.f32 %v1137, %v1316
          %v1394 = vmul.f32 %v1138, %v1326
          %v1395 = vmul.f32 %v1139, %v1336
          %v1396 = vmul.f32 %v1140, %v1346
          %v1397 = vmul.f32 %v1141, %v1356
          %v1398 = vmul.f32 %v1142, %v1366
          %1399 = vst [vmem:[%s482] sm:$0xff] %v1383
          %1400 = vst [vmem:[%s482 + $0x8] sm:$0xff] %v1384
          %1401 = vst [vmem:[%s482 + $0x10] sm:$0xff] %v1385
          %1402 = vst [vmem:[%s482 + $0x18] sm:$0xff] %v1386
          %1403 = vst [vmem:[%s482 + $0x20] sm:$0xff] %v1387
          %1404 = vst [vmem:[%s482 + $0x28] sm:$0xff] %v1388
          %1405 = vst [vmem:[%s482 + $0x30] sm:$0xff] %v1389
          %1406 = vst [vmem:[%s482 + $0x38] sm:$0xff] %v1390
          %1407 = vst [vmem:[%s482 + $0x40] sm:$0xff] %v1391
          %1408 = vst [vmem:[%s482 + $0x48] sm:$0xff] %v1392
          %1409 = vst [vmem:[%s482 + $0x50] sm:$0xff] %v1393
          %1410 = vst [vmem:[%s482 + $0x58] sm:$0xff] %v1394
          %1411 = vst [vmem:[%s482 + $0x60] sm:$0xff] %v1395
          %1412 = vst [vmem:[%s482 + $0x68] sm:$0xff] %v1396
          %1413 = vst [vmem:[%s482 + $0x70] sm:$0xff] %v1397
          %1414 = vst [vmem:[%s482 + $0x78] sm:$0xff] %v1398
        $region97: #{ngcf_forward.3} parent=84 // pred_fallthru
          _
        %s1415 = sand.u32 %s207, 1
        %s1416 = scalar_lea.sflag [#allocation5], %s1415
        %s1417 = sand.u32 %s207, 1
        %s1418 = smul.addr %s1417, 128
        %s1419 = scalar_lea.vmem [#allocation4], %s1418
        %s1420 = smul.u32 16, %s27
        %p1421 = scmp.lt.s32.totalorder %s1420, 63
        %s1422 = scalar_select %p1421, %s1420, 63
        %s1423 = smul.addr %s1422, 8
        %s1424 = scalar_lea.vmem %s8, %s1423
        // Predicated region
        $region98: #{ngcf_forward.3} parent=84 // pred_check
          %p1425 = pneg %p217
        $region99: #{ngcf_forward.3} parent=84 // pred_check_branch
          %1427 = sbr.rel (%p1425) target = $region101
        $region100: #{ngcf_forward.3} parent=84 // pred_region
          %s1428 = smul.u32 16, %s27
          %1430 = vsyncadd %s1416, 0
          %s1431 = smul.addr %s1428, 8
          %s1432 = scalar_lea.hbm %s7, %s1431
          %s1433 = sshll.u32 %s1419, 4
          %s1434 = int_to_ptr.vmem [resolvable:$true] %s1433
          %s1435 = sshll.u32 %s1432, 4
          %s1436 = int_to_ptr.hbm [resolvable:$true] %s1435
          %1441 = dma.vmem_to_hbm [thread:$0]  %s1434, 2048, %s1436, %s1416, 128, 128, 8
        $region101: #{ngcf_forward.3} parent=84 // pred_fallthru
          _
        // Predicated region
        $region102: #{ngcf_forward.3} parent=84 // pred_check
          %p1442 = pneg %p243
        $region103: #{ngcf_forward.3} parent=84 // pred_check_branch
          %1444 = sbr.rel (%p1442) target = $region105
        $region104: #{ngcf_forward.3} parent=84 // pred_region
          %s1445 = smul.u32 16, %s27
        $region105: #{ngcf_forward.3} parent=84 // pred_fallthru
          _
      $region85: #{ngcf_forward.3} parent=5 // pred_fallthru
        _
      %p1446 = scmp.le.s32.totalorder 2, %s18
      // Predicated region
      $region106: #{ngcf_forward.3} parent=5 // pred_check
        %p1447 = pneg %p1446
      $region107: #{ngcf_forward.3} parent=5 // pred_check_branch
        %1449 = sbr.rel (%p1447) target = $region109
      $region108: #{ngcf_forward.3} parent=5 // pred_region
        %s1450 = ssub.s32 %s18, 2
        // Predicated region
        $region110: #{ngcf_forward.3} parent=108 // pred_check
          %p1451 = pneg %p223
        $region111: #{ngcf_forward.3} parent=108 // pred_check_branch
          %1453 = sbr.rel (%p1451) target = $region113
        $region112: #{ngcf_forward.3} parent=108 // pred_region
          %s1454 = sand.u32 %s208, 1
          %s1455 = scalar_lea.sflag [#allocation5], %s1454
          %s1456 = sand.u32 %s208, 1
          %s1457 = smul.addr %s1456, 128
          %s1458 = scalar_lea.vmem [#allocation4], %s1457
          %1460 = dma.done %s1455, 2048
        $region113: #{ngcf_forward.3} parent=108 // pred_fallthru
          _
        // Predicated region
        $region114: #{ngcf_forward.3} parent=108 // pred_check
          %p1461 = pneg %p249
        $region115: #{ngcf_forward.3} parent=108 // pred_check_branch
          %1463 = sbr.rel (%p1461) target = $region117
        $region116: #{ngcf_forward.3} parent=108 // pred_region
          %s1464 = smul.u32 16, %s29
          %p1465 = scmp.lt.s32.totalorder %s1464, 63
          %s1466 = scalar_select %p1465, %s1464, 63
          %s1467 = smul.addr %s1466, 8
          %s1468 = scalar_lea.vmem %s8, %s1467
        $region117: #{ngcf_forward.3} parent=108 // pred_fallthru
          _
      $region109: #{ngcf_forward.3} parent=5 // pred_fallthru
        _
    $region6: #{ngcf_forward.3} parent=1 // loop_footer
      %s22 = sadd.s32 1, %s18
    $region7: #{ngcf_forward.3} parent=1 // loop_footer_branch
      %17 = sbr.rel target = $region3
    $region8: #{ngcf_forward.3} parent=1 // loop_exit
      _
    %1469 = vsyncpa [#allocation5], 1
    %s1470 = scalar_lea.sflag [#allocation5], 1
    %1471 = vsyncpa %s1470, 1

// kernel: ngcf_forward.2
$region0: #{ngcf_forward.2}
  #allocation0 [shape = 'u32[]', space=smem, size = 0x4, offset = 0x4, fixed_abs, tag = 'smem constant byte address 0x4 - core index']
  #allocation1 [shape = 'u32[72,128]{1,0:T(1,128)}', space=vmem, size = 0x9000, scoped, tag = 'internal scratch']
  #allocation2 [shape = 'f32[128,768]{1,0:T(8,128)}', space=vmem, size = 0x60000, scoped, tag = 'scratch operand']
  %s0 = inlined_call_operand.vmem [shape: bf16[512,512], index: 0, kind: input, shape index: {}]
  %s1 = inlined_call_operand.vmem [shape: bf16[512,768], index: 1, kind: input, shape index: {}]
  %s2 = inlined_call_operand.vmem [shape: f32[512,768], index: 2, kind: input, shape index: {}]
  %s3 = inlined_call_operand.vmem [shape: bf16[768,128], index: 3, kind: input, shape index: {}]
  %s4 = inlined_call_operand.vmem [shape: f32[1,128], index: 4, kind: input, shape index: {}]
  %s5 = inlined_call_operand.vmem [shape: bf16[768,128], index: 5, kind: input, shape index: {}]
  %s6 = inlined_call_operand.vmem [shape: f32[1,128], index: 6, kind: input, shape index: {}]
  %s7 = inlined_call_operand.vmem [shape: f32[512,128], index: 7, kind: output, shape index: {0}]
  %s8 = inlined_call_operand.vmem [shape: f32[512,128], index: 8, kind: output, shape index: {1}]
  %9 = xla_tuple %s7, %s8
  %s10 = sld [smem:[#allocation0]]
  $region118: #{ngcf_forward.2} parent=0
    _
  %s12 = ssub.s32 1, %s10
  %s13 = scalar_select 0, %s12, %s10
  $region1: #{ngcf_forward.2} parent=0
    #allocation3 [shape = 'u8[65536]{0}', space=vmem, size = 0x10000, scoped, tag = 'input window, operand 0']
    loop: start=0, step=1, limit=18
    $region2: #{ngcf_forward.2} parent=1 // loop_pre_header
      _
    $region3: #{ngcf_forward.2} parent=1 // loop_header
      %s15 = sphi 0, %s19
      %p16 = scmp.ge.s32.totalorder %s15, 18
      %s22 = sphi 0, %s34
      %s23 = sphi 0, %s30
      %s24 = sphi 0, %s22
      %s25 = sphi 0, %s23
      %s26 = sphi 0, %s24
      %s27 = sphi 0, %s25
      %s39 = sphi 0, %s41
      %s42 = sphi 0, %s39
      %s43 = sphi 0, %s42
      %s59 = sphi 0, %s43
      %s65 = sphi 0, %s67
      %s68 = sphi 0, %s65
      %s69 = sphi 0, %s68
      %s85 = sphi 0, %s69
      %s91 = sphi 0, %s93
      %s94 = sphi 0, %s91
      %s95 = sphi 0, %s94
      %s111 = sphi 0, %s95
      %s115 = sphi 0, %s115
      %s117 = sphi 0, %s115
      %s118 = sphi 0, %s117
      %s132 = sphi 0, %s118
      %s136 = sphi 0, %s136
      %s138 = sphi 0, %s136
      %s139 = sphi 0, %s138
      %s153 = sphi 0, %s139
      %s157 = sphi 0, %s157
      %s159 = sphi 0, %s157
      %s160 = sphi 0, %s159
      %s174 = sphi 0, %s160
      %s178 = sphi 0, %s178
      %s180 = sphi 0, %s178
      %s181 = sphi 0, %s180
      %s195 = sphi 0, %s181
      %s201 = sphi 0, %s203
      %s204 = sphi 0, %s201
      %s205 = sphi 0, %s204
      %s221 = sphi 0, %s205
      %s227 = sphi 0, %s229
      %s230 = sphi 0, %s227
      %s231 = sphi 0, %s230
      %s247 = sphi 0, %s231
    $region4: #{ngcf_forward.2} parent=1 // loop_header_branch
      %18 = sbr.rel (%p16) target = $region8
    $region5: #{ngcf_forward.2} parent=1 // loop_body
      %s20 = ssub.s32 %s15, 1
      %s21 = ssub.s32 %s15, 2
      %s28 = sadd.s32 1, %s23
      %p29 = scmp.ge.s32.totalorder %s28, 4
      %s30 = scalar_select %p29, 0, %s28
      %s31 = sadd.s32 1, %s22
      %s32 = scalar_select %p29, %s31, %s22
      %p33 = scmp.ge.s32.totalorder %s32, 4
      %s34 = scalar_select %p33, 0, %s32
      %s35 = ssub.s32 %s22, %s34
      %s36 = ssub.s32 %s23, %s30
      %s37 = sor.u32 %s35, %s36
      %p38 = scmp.eq.s32.totalorder %s37, 0
      %s40 = sadd.s32 %s39, 1
      %s41 = scalar_select %p38, %s39, %s40
      %p44 = pneg %p38
      %p45 = scmp.eq.s32.totalorder %s15, 15
      %p46 = por %p44, %p45
      %p47 = scmp.ne.s32.totalorder %s39, %s42
      %p48 = scmp.eq.s32.totalorder %s15, 0
      %p49 = por %p47, %p48
      %p50 = scmp.ne.s32.totalorder %s39, %s42
      %p51 = scmp.eq.s32.totalorder %s20, 15
      %p52 = por %p50, %p51
      %p53 = scmp.ne.s32.totalorder %s42, %s43
      %p54 = scmp.eq.s32.totalorder %s20, 0
      %p55 = por %p53, %p54
      %p56 = scmp.ne.s32.totalorder %s42, %s43
      %p57 = scmp.eq.s32.totalorder %s21, 15
      %p58 = por %p56, %p57
      %p60 = scmp.ne.s32.totalorder %s43, %s59
      %p61 = scmp.eq.s32.totalorder %s21, 0
      %p62 = por %p60, %p61
      %s63 = ssub.s32 %s23, %s30
      %p64 = scmp.eq.s32.totalorder %s63, 0
      %s66 = sadd.s32 %s65, 1
      %s67 = scalar_select %p64, %s65, %s66
      %p70 = pneg %p64
      %p71 = scmp.eq.s32.totalorder %s15, 15
      %p72 = por %p70, %p71
      %p73 = scmp.ne.s32.totalorder %s65, %s68
      %p74 = scmp.eq.s32.totalorder %s15, 0
      %p75 = por %p73, %p74
      %p76 = scmp.ne.s32.totalorder %s65, %s68
      %p77 = scmp.eq.s32.totalorder %s20, 15
      %p78 = por %p76, %p77
      %p79 = scmp.ne.s32.totalorder %s68, %s69
      %p80 = scmp.eq.s32.totalorder %s20, 0
      %p81 = por %p79, %p80
      %p82 = scmp.ne.s32.totalorder %s68, %s69
      %p83 = scmp.eq.s32.totalorder %s21, 15
      %p84 = por %p82, %p83
      %p86 = scmp.ne.s32.totalorder %s69, %s85
      %p87 = scmp.eq.s32.totalorder %s21, 0
      %p88 = por %p86, %p87
      %s89 = ssub.s32 %s22, %s34
      %p90 = scmp.eq.s32.totalorder %s89, 0
      %s92 = sadd.s32 %s91, 1
      %s93 = scalar_select %p90, %s91, %s92
      %p96 = pneg %p90
      %p97 = scmp.eq.s32.totalorder %s15, 15
      %p98 = por %p96, %p97
      %p99 = scmp.ne.s32.totalorder %s91, %s94
      %p100 = scmp.eq.s32.totalorder %s15, 0
      %p101 = por %p99, %p100
      %p102 = scmp.ne.s32.totalorder %s91, %s94
      %p103 = scmp.eq.s32.totalorder %s20, 15
      %p104 = por %p102, %p103
      %p105 = scmp.ne.s32.totalorder %s94, %s95
      %p106 = scmp.eq.s32.totalorder %s20, 0
      %p107 = por %p105, %p106
      %p108 = scmp.ne.s32.totalorder %s94, %s95
      %p109 = scmp.eq.s32.totalorder %s21, 15
      %p110 = por %p108, %p109
      %p112 = scmp.ne.s32.totalorder %s95, %s111
      %p113 = scmp.eq.s32.totalorder %s21, 0
      %p114 = por %p112, %p113
      %s116 = sadd.s32 %s115, 1
      %p119 = scmp.eq.s32.totalorder %s15, 15
      %p120 = scmp.ne.s32.totalorder %s115, %s117
      %p121 = scmp.eq.s32.totalorder %s15, 0
      %p122 = por %p120, %p121
      %p123 = scmp.ne.s32.totalorder %s115, %s117
      %p124 = scmp.eq.s32.totalorder %s20, 15
      %p125 = por %p123, %p124
      %p126 = scmp.ne.s32.totalorder %s117, %s118
      %p127 = scmp.eq.s32.totalorder %s20, 0
      %p128 = por %p126, %p127
      %p129 = scmp.ne.s32.totalorder %s117, %s118
      %p130 = scmp.eq.s32.totalorder %s21, 15
      %p131 = por %p129, %p130
      %p133 = scmp.ne.s32.totalorder %s118, %s132
      %p134 = scmp.eq.s32.totalorder %s21, 0
      %p135 = por %p133, %p134
      %s137 = sadd.s32 %s136, 1
      %p140 = scmp.eq.s32.totalorder %s15, 15
      %p141 = scmp.ne.s32.totalorder %s136, %s138
      %p142 = scmp.eq.s32.totalorder %s15, 0
      %p143 = por %p141, %p142
      %p144 = scmp.ne.s32.totalorder %s136, %s138
      %p145 = scmp.eq.s32.totalorder %s20, 15
      %p146 = por %p144, %p145
      %p147 = scmp.ne.s32.totalorder %s138, %s139
      %p148 = scmp.eq.s32.totalorder %s20, 0
      %p149 = por %p147, %p148
      %p150 = scmp.ne.s32.totalorder %s138, %s139
      %p151 = scmp.eq.s32.totalorder %s21, 15
      %p152 = por %p150, %p151
      %p154 = scmp.ne.s32.totalorder %s139, %s153
      %p155 = scmp.eq.s32.totalorder %s21, 0
      %p156 = por %p154, %p155
      %s158 = sadd.s32 %s157, 1
      %p161 = scmp.eq.s32.totalorder %s15, 15
      %p162 = scmp.ne.s32.totalorder %s157, %s159
      %p163 = scmp.eq.s32.totalorder %s15, 0
      %p164 = por %p162, %p163
      %p165 = scmp.ne.s32.totalorder %s157, %s159
      %p166 = scmp.eq.s32.totalorder %s20, 15
      %p167 = por %p165, %p166
      %p168 = scmp.ne.s32.totalorder %s159, %s160
      %p169 = scmp.eq.s32.totalorder %s20, 0
      %p170 = por %p168, %p169
      %p171 = scmp.ne.s32.totalorder %s159, %s160
      %p172 = scmp.eq.s32.totalorder %s21, 15
      %p173 = por %p171, %p172
      %p175 = scmp.ne.s32.totalorder %s160, %s174
      %p176 = scmp.eq.s32.totalorder %s21, 0
      %p177 = por %p175, %p176
      %s179 = sadd.s32 %s178, 1
      %p182 = scmp.eq.s32.totalorder %s15, 15
      %p183 = scmp.ne.s32.totalorder %s178, %s180
      %p184 = scmp.eq.s32.totalorder %s15, 0
      %p185 = por %p183, %p184
      %p186 = scmp.ne.s32.totalorder %s178, %s180
      %p187 = scmp.eq.s32.totalorder %s20, 15
      %p188 = por %p186, %p187
      %p189 = scmp.ne.s32.totalorder %s180, %s181
      %p190 = scmp.eq.s32.totalorder %s20, 0
      %p191 = por %p189, %p190
      %p192 = scmp.ne.s32.totalorder %s180, %s181
      %p193 = scmp.eq.s32.totalorder %s21, 15
      %p194 = por %p192, %p193
      %p196 = scmp.ne.s32.totalorder %s181, %s195
      %p197 = scmp.eq.s32.totalorder %s21, 0
      %p198 = por %p196, %p197
      %s199 = ssub.s32 %s22, %s34
      %p200 = scmp.eq.s32.totalorder %s199, 0
      %s202 = sadd.s32 %s201, 1
      %s203 = scalar_select %p200, %s201, %s202
      %p206 = pneg %p200
      %p207 = scmp.eq.s32.totalorder %s15, 15
      %p208 = por %p206, %p207
      %p209 = scmp.ne.s32.totalorder %s201, %s204
      %p210 = scmp.eq.s32.totalorder %s15, 0
      %p211 = por %p209, %p210
      %p212 = scmp.ne.s32.totalorder %s201, %s204
      %p213 = scmp.eq.s32.totalorder %s20, 15
      %p214 = por %p212, %p213
      %p215 = scmp.ne.s32.totalorder %s204, %s205
      %p216 = scmp.eq.s32.totalorder %s20, 0
      %p217 = por %p215, %p216
      %p218 = scmp.ne.s32.totalorder %s204, %s205
      %p219 = scmp.eq.s32.totalorder %s21, 15
      %p220 = por %p218, %p219
      %p222 = scmp.ne.s32.totalorder %s205, %s221
      %p223 = scmp.eq.s32.totalorder %s21, 0
      %p224 = por %p222, %p223
      %s225 = ssub.s32 %s22, %s34
      %p226 = scmp.eq.s32.totalorder %s225, 0
      %s228 = sadd.s32 %s227, 1
      %s229 = scalar_select %p226, %s227, %s228
      %p232 = pneg %p226
      %p233 = scmp.eq.s32.totalorder %s15, 15
      %p234 = por %p232, %p233
      %p235 = scmp.ne.s32.totalorder %s227, %s230
      %p236 = scmp.eq.s32.totalorder %s15, 0
      %p237 = por %p235, %p236
      %p238 = scmp.ne.s32.totalorder %s227, %s230
      %p239 = scmp.eq.s32.totalorder %s20, 15
      %p240 = por %p238, %p239
      %p241 = scmp.ne.s32.totalorder %s230, %s231
      %p242 = scmp.eq.s32.totalorder %s20, 0
      %p243 = por %p241, %p242
      %p244 = scmp.ne.s32.totalorder %s230, %s231
      %p245 = scmp.eq.s32.totalorder %s21, 15
      %p246 = por %p244, %p245
      %p248 = scmp.ne.s32.totalorder %s231, %s247
      %p249 = scmp.eq.s32.totalorder %s21, 0
      %p250 = por %p248, %p249
      %p251 = scmp.le.s32.totalorder 1, %s15
      %p252 = scmp.lt.s32.totalorder %s15, 17
      %p253 = pnand %p251, %p252
      %p254 = pneg %p253
      // Predicated region
      $region9: #{ngcf_forward.2} parent=5 // pred_check
        _
      $region10: #{ngcf_forward.2} parent=5 // pred_check_branch
        %256 = sbr.rel (%p253) target = $region12
      $region11: #{ngcf_forward.2} parent=5 // pred_region
        %s257 = ssub.s32 %s15, 1
        // Predicated region
        $region13: #{ngcf_forward.2} parent=11 // pred_check
          %p258 = pneg %p128
        $region14: #{ngcf_forward.2} parent=11 // pred_check_branch
          %260 = sbr.rel (%p258) target = $region16
        $region15: #{ngcf_forward.2} parent=11 // pred_region
          _
        $region16: #{ngcf_forward.2} parent=11 // pred_fallthru
          _
        // Predicated region
        $region17: #{ngcf_forward.2} parent=11 // pred_check
          %p261 = pneg %p149
        $region18: #{ngcf_forward.2} parent=11 // pred_check_branch
          %263 = sbr.rel (%p261) target = $region20
        $region19: #{ngcf_forward.2} parent=11 // pred_region
          _
        $region20: #{ngcf_forward.2} parent=11 // pred_fallthru
          _
        // Predicated region
        $region21: #{ngcf_forward.2} parent=11 // pred_check
          %p264 = pneg %p170
        $region22: #{ngcf_forward.2} parent=11 // pred_check_branch
          %266 = sbr.rel (%p264) target = $region24
        $region23: #{ngcf_forward.2} parent=11 // pred_region
          _
        $region24: #{ngcf_forward.2} parent=11 // pred_fallthru
          _
        // Predicated region
        $region25: #{ngcf_forward.2} parent=11 // pred_check
          %p267 = pneg %p191
        $region26: #{ngcf_forward.2} parent=11 // pred_check_branch
          %269 = sbr.rel (%p267) target = $region28
        $region27: #{ngcf_forward.2} parent=11 // pred_region
          _
        $region28: #{ngcf_forward.2} parent=11 // pred_fallthru
          _
      $region12: #{ngcf_forward.2} parent=5 // pred_fallthru
        _
      %p270 = scmp.lt.s32.totalorder %s15, 16
      // Predicated region
      $region29: #{ngcf_forward.2} parent=5 // pred_check
        %p271 = pneg %p270
      $region30: #{ngcf_forward.2} parent=5 // pred_check_branch
        %273 = sbr.rel (%p271) target = $region32
      $region31: #{ngcf_forward.2} parent=5 // pred_region
        // Predicated region
        $region33: #{ngcf_forward.2} parent=31 // pred_check
          %p274 = pneg %p49
        $region34: #{ngcf_forward.2} parent=31 // pred_check_branch
          %276 = sbr.rel (%p274) target = $region36
        $region35: #{ngcf_forward.2} parent=31 // pred_region
          %s277 = sand.u32 %s39, 1
          %s278 = sand.u32 %s39, 1
          %s279 = smul.addr %s278, 64
          %s280 = scalar_lea.vmem [#allocation3], %s279
          %s281 = smul.u32 16, %s22
          %s282 = smul.addr %s281, 4
          %s283 = sadd.s32 %s23, %s282
          %s284 = smul.addr %s283, 4
          %s285 = scalar_lea.vmem %s0, %s284
          // Predicated region
          $region37: #{ngcf_forward.2} parent=35 // pred_check
            _
          $region38: #{ngcf_forward.2} parent=35 // pred_check_branch
            %287 = sbr.rel (0) target = $region40
          $region39: #{ngcf_forward.2} parent=35 // pred_region
            // Predicated region
            $region41: #{ngcf_forward.2} parent=39 // pred_check
              _
            $region42: #{ngcf_forward.2} parent=39 // pred_check_branch
              %289 = sbr.rel target = $region44
            $region43: #{ngcf_forward.2} parent=39 // pred_region
              // Predicated region
              $region56: #{ngcf_forward.2} parent=43 // pred_check
                _
              $region57: #{ngcf_forward.2} parent=43 // pred_check_branch
                %335 = sbr.rel (0) target = $region59
              $region58: #{ngcf_forward.2} parent=43 // pred_region
                loop: start=0, step=1, limit=1
                $region60: #{ngcf_forward.2} parent=58 // loop_pre_header
                  _
                $region61: #{ngcf_forward.2} parent=58 // loop_header
                  %s337 = sphi 0, %s341
                  %p338 = scmp.ge.s32.totalorder %s337, 1
                  %s342 = sphi %s285, %s285
                  %s343 = sphi %s280, %s280
                $region62: #{ngcf_forward.2} parent=58 // loop_header_branch
                  %340 = sbr.rel (%p338) target = $region66
                $region63: #{ngcf_forward.2} parent=58 // loop_body
                  _
                $region64: #{ngcf_forward.2} parent=58 // loop_footer
                  %s341 = sadd.s32 1, %s337
                $region65: #{ngcf_forward.2} parent=58 // loop_footer_branch
                  %336 = sbr.rel target = $region61
                $region66: #{ngcf_forward.2} parent=58 // loop_exit
                  _
                %s345 = ssub.s32 16, 1
                loop: start=0, step=1, limit=1
                $region67: #{ngcf_forward.2} parent=58 // loop_pre_header
                  _
                $region68: #{ngcf_forward.2} parent=58 // loop_header
                  %s347 = sphi 0, %s351
                  %p348 = scmp.ge.s32.totalorder %s347, 1
                  %s352 = sphi %s285, %s285
                  %s353 = sphi %s280, %s280
                $region69: #{ngcf_forward.2} parent=58 // loop_header_branch
                  %350 = sbr.rel (%p348) target = $region73
                $region70: #{ngcf_forward.2} parent=58 // loop_body
                  %v354 = vld [vmem:[%s352] sm:%s345]
                  %355 = vst [vmem:[%s353] sm:%s345] %v354
                  %v356 = vld [vmem:[%s352 + $0x10] sm:%s345]
                  %357 = vst [vmem:[%s353 + $0x4] sm:%s345] %v356
                  %v358 = vld [vmem:[%s352 + $0x20] sm:%s345]
                  %359 = vst [vmem:[%s353 + $0x8] sm:%s345] %v358
                  %v360 = vld [vmem:[%s352 + $0x30] sm:%s345]
                  %361 = vst [vmem:[%s353 + $0xc] sm:%s345] %v360
                  %v362 = vld [vmem:[%s352 + $0x40] sm:%s345]
                  %363 = vst [vmem:[%s353 + $0x10] sm:%s345] %v362
                  %v364 = vld [vmem:[%s352 + $0x50] sm:%s345]
                  %365 = vst [vmem:[%s353 + $0x14] sm:%s345] %v364
                  %v366 = vld [vmem:[%s352 + $0x60] sm:%s345]
                  %367 = vst [vmem:[%s353 + $0x18] sm:%s345] %v366
                  %v368 = vld [vmem:[%s352 + $0x70] sm:%s345]
                  %369 = vst [vmem:[%s353 + $0x1c] sm:%s345] %v368
                  %v370 = vld [vmem:[%s352 + $0x80] sm:%s345]
                  %371 = vst [vmem:[%s353 + $0x20] sm:%s345] %v370
                  %v372 = vld [vmem:[%s352 + $0x90] sm:%s345]
                  %373 = vst [vmem:[%s353 + $0x24] sm:%s345] %v372
                  %v374 = vld [vmem:[%s352 + $0xa0] sm:%s345]
                  %375 = vst [vmem:[%s353 + $0x28] sm:%s345] %v374
                  %v376 = vld [vmem:[%s352 + $0xb0] sm:%s345]
                  %377 = vst [vmem:[%s353 + $0x2c] sm:%s345] %v376
                  %v378 = vld [vmem:[%s352 + $0xc0] sm:%s345]
                  %379 = vst [vmem:[%s353 + $0x30] sm:%s345] %v378
                  %v380 = vld [vmem:[%s352 + $0xd0] sm:%s345]
                  %381 = vst [vmem:[%s353 + $0x34] sm:%s345] %v380
                  %v382 = vld [vmem:[%s352 + $0xe0] sm:%s345]
                  %383 = vst [vmem:[%s353 + $0x38] sm:%s345] %v382
                  %v384 = vld [vmem:[%s352 + $0xf0] sm:%s345]
                  %385 = vst [vmem:[%s353 + $0x3c] sm:%s345] %v384
                $region71: #{ngcf_forward.2} parent=58 // loop_footer
                  %s351 = sadd.s32 1, %s347
                $region72: #{ngcf_forward.2} parent=58 // loop_footer_branch
                  %346 = sbr.rel target = $region68
                $region73: #{ngcf_forward.2} parent=58 // loop_exit
                  _
              $region59: #{ngcf_forward.2} parent=43 // pred_fallthru
                _
            $region44: #{ngcf_forward.2} parent=39 // pred_fallthru
              _
            // Predicated region
            $region45: #{ngcf_forward.2} parent=39 // pred_check
              _
            $region46: #{ngcf_forward.2} parent=39 // pred_check_branch
              %291 = sbr.rel (0) target = $region48
            $region47: #{ngcf_forward.2} parent=39 // pred_region
              %s293 = ssub.s32 16, 1
              loop: start=0, step=1, limit=1
              $region49: #{ngcf_forward.2} parent=47 // loop_pre_header
                _
              $region50: #{ngcf_forward.2} parent=47 // loop_header
                %s295 = sphi 0, %s299
                %p296 = scmp.ge.s32.totalorder %s295, 1
                %s300 = sphi %s285, %s285
                %s301 = sphi %s280, %s280
              $region51: #{ngcf_forward.2} parent=47 // loop_header_branch
                %298 = sbr.rel (%p296) target = $region55
              $region52: #{ngcf_forward.2} parent=47 // loop_body
                %v302 = vld [vmem:[%s300] sm:%s293]
                %303 = vst [vmem:[%s301] sm:%s293] %v302
                %v304 = vld [vmem:[%s300 + $0x10] sm:%s293]
                %305 = vst [vmem:[%s301 + $0x4] sm:%s293] %v304
                %v306 = vld [vmem:[%s300 + $0x20] sm:%s293]
                %307 = vst [vmem:[%s301 + $0x8] sm:%s293] %v306
                %v308 = vld [vmem:[%s300 + $0x30] sm:%s293]
                %309 = vst [vmem:[%s301 + $0xc] sm:%s293] %v308
                %v310 = vld [vmem:[%s300 + $0x40] sm:%s293]
                %311 = vst [vmem:[%s301 + $0x10] sm:%s293] %v310
                %v312 = vld [vmem:[%s300 + $0x50] sm:%s293]
                %313 = vst [vmem:[%s301 + $0x14] sm:%s293] %v312
                %v314 = vld [vmem:[%s300 + $0x60] sm:%s293]
                %315 = vst [vmem:[%s301 + $0x18] sm:%s293] %v314
                %v316 = vld [vmem:[%s300 + $0x70] sm:%s293]
                %317 = vst [vmem:[%s301 + $0x1c] sm:%s293] %v316
                %v318 = vld [vmem:[%s300 + $0x80] sm:%s293]
                %319 = vst [vmem:[%s301 + $0x20] sm:%s293] %v318
                %v320 = vld [vmem:[%s300 + $0x90] sm:%s293]
                %321 = vst [vmem:[%s301 + $0x24] sm:%s293] %v320
                %v322 = vld [vmem:[%s300 + $0xa0] sm:%s293]
                %323 = vst [vmem:[%s301 + $0x28] sm:%s293] %v322
                %v324 = vld [vmem:[%s300 + $0xb0] sm:%s293]
                %325 = vst [vmem:[%s301 + $0x2c] sm:%s293] %v324
                %v326 = vld [vmem:[%s300 + $0xc0] sm:%s293]
                %327 = vst [vmem:[%s301 + $0x30] sm:%s293] %v326
                %v328 = vld [vmem:[%s300 + $0xd0] sm:%s293]
                %329 = vst [vmem:[%s301 + $0x34] sm:%s293] %v328
                %v330 = vld [vmem:[%s300 + $0xe0] sm:%s293]
                %331 = vst [vmem:[%s301 + $0x38] sm:%s293] %v330
                %v332 = vld [vmem:[%s300 + $0xf0] sm:%s293]
                %333 = vst [vmem:[%s301 + $0x3c] sm:%s293] %v332
              $region53: #{ngcf_forward.2} parent=47 // loop_footer
                %s299 = sadd.s32 1, %s295
              $region54: #{ngcf_forward.2} parent=47 // loop_footer_branch
                %294 = sbr.rel target = $region50
              $region55: #{ngcf_forward.2} parent=47 // loop_exit
                _
            $region48: #{ngcf_forward.2} parent=39 // pred_fallthru
              _
          $region40: #{ngcf_forward.2} parent=35 // pred_fallthru
            _
          %386 = vnop
        $region36: #{ngcf_forward.2} parent=31 // pred_fallthru
          _
        // Predicated region
        $region74: #{ngcf_forward.2} parent=31 // pred_check
          %p387 = pneg %p75
        $region75: #{ngcf_forward.2} parent=31 // pred_check_branch
          %389 = sbr.rel (%p387) target = $region77
        $region76: #{ngcf_forward.2} parent=31 // pred_region
          %s390 = smul.u32 16, %s23
          %p391 = scmp.lt.s32.totalorder %s390, 63
          %s392 = scalar_select %p391, %s390, 63
          %s393 = smul.addr %s392, 6
          %s394 = smul.addr %s393, 4
          %s395 = scalar_lea.vmem %s1, %s394
          %s396 = smul.u32 16, %s23
        $region77: #{ngcf_forward.2} parent=31 // pred_fallthru
          _
        // Predicated region
        $region78: #{ngcf_forward.2} parent=31 // pred_check
          %p397 = pneg %p101
        $region79: #{ngcf_forward.2} parent=31 // pred_check_branch
          %399 = sbr.rel (%p397) target = $region81
        $region80: #{ngcf_forward.2} parent=31 // pred_region
          %s400 = smul.u32 16, %s22
          %p401 = scmp.lt.s32.totalorder %s400, 63
          %s402 = scalar_select %p401, %s400, 63
          %s403 = smul.addr %s402, 6
          %s404 = smul.addr %s403, 8
          %s405 = scalar_lea.vmem %s2, %s404
          %s406 = smul.u32 16, %s22
        $region81: #{ngcf_forward.2} parent=31 // pred_fallthru
          _
      $region32: #{ngcf_forward.2} parent=5 // pred_fallthru
        _
      %p407 = scmp.le.s32.totalorder 1, %s15
      %p408 = scmp.lt.s32.totalorder %s15, 17
      %p409 = pnand %p407, %p408
      %p410 = pneg %p409
      // Predicated region
      $region82: #{ngcf_forward.2} parent=5 // pred_check
        _
      $region83: #{ngcf_forward.2} parent=5 // pred_check_branch
        %412 = sbr.rel (%p409) target = $region85
      $region84: #{ngcf_forward.2} parent=5 // pred_region
        %s413 = ssub.s32 %s15, 1
        %s414 = sand.u32 %s42, 1
        %s415 = sand.u32 %s42, 1
        %s416 = smul.addr %s415, 64
        %s417 = scalar_lea.vmem [#allocation3], %s416
        // Predicated region
        $region86: #{ngcf_forward.2} parent=84 // pred_check
          %p418 = pneg %p55
        $region87: #{ngcf_forward.2} parent=84 // pred_check_branch
          %420 = sbr.rel (%p418) target = $region89
        $region88: #{ngcf_forward.2} parent=84 // pred_region
          _
        $region89: #{ngcf_forward.2} parent=84 // pred_fallthru
          _
        %s421 = sand.u32 %s42, 1
        %s422 = sand.u32 %s42, 1
        %s423 = smul.addr %s422, 64
        %s424 = scalar_lea.vmem [#allocation3], %s423
        %p425 = pneg %p55
        %p426 = pneg %p52
        %s427 = smul.u32 16, %s25
        %p428 = scmp.lt.s32.totalorder %s427, 63
        %s429 = scalar_select %p428, %s427, 63
        %s430 = smul.addr %s429, 6
        %s431 = smul.addr %s430, 4
        %s432 = scalar_lea.vmem %s1, %s431
        %p433 = pneg %p81
        %p434 = pneg %p78
        %s435 = smul.u32 16, %s24
        %p436 = scmp.lt.s32.totalorder %s435, 63
        %s437 = scalar_select %p436, %s435, 63
        %s438 = smul.addr %s437, 6
        %s439 = smul.addr %s438, 8
        %s440 = scalar_lea.vmem %s2, %s439
        %p441 = pneg %p107
        %p442 = pneg %p104
        %p443 = pneg %p128
        %p444 = pneg %p125
        %p445 = pneg %p149
        %p446 = pneg %p146
        %p447 = pneg %p170
        %p448 = pneg %p167
        %p449 = pneg %p191
        %p450 = pneg %p188
        %p451 = pneg %p217
        %p452 = pneg %p214
        %s453 = smul.u32 16, %s24
        %p454 = scmp.lt.s32.totalorder %s453, 63
        %s455 = scalar_select %p454, %s453, 63
        %s456 = smul.addr %s455, 8
        %s457 = scalar_lea.vmem %s7, %s456
        %p458 = pneg %p243
        %p459 = pneg %p240
        %s460 = smul.u32 16, %s24
        %p461 = scmp.lt.s32.totalorder %s460, 63
        %s462 = scalar_select %p461, %s460, 63
        %s463 = smul.addr %s462, 8
        %s464 = scalar_lea.vmem %s8, %s463
        %s465 = smul.u32 16, %s24
        %s466 = smul.u32 16, %s25
        %p467 = scmp.lt.s32.totalorder %s466, 63
        %s468 = scalar_select %p467, %s466, 63
        %s469 = smul.addr %s468, 6
        %s470 = smul.addr %s469, 4
        %s471 = scalar_lea.vmem %s1, %s470
        %s472 = smul.u32 16, %s25
        %s473 = smul.u32 16, %s24
        %p474 = scmp.lt.s32.totalorder %s473, 63
        %s475 = scalar_select %p474, %s473, 63
        %s476 = smul.addr %s475, 6
        %s477 = smul.addr %s476, 8
        %s478 = scalar_lea.vmem %s2, %s477
        %s479 = smul.u32 16, %s24
        %s480 = smul.u32 16, %s24
        %p481 = scmp.lt.s32.totalorder %s480, 63
        %s482 = scalar_select %p481, %s480, 63
        %s483 = smul.addr %s482, 8
        %s484 = scalar_lea.vmem %s7, %s483
        %s485 = smul.u32 16, %s24
        %s486 = smul.u32 16, %s24
        %p487 = scmp.lt.s32.totalorder %s486, 63
        %s488 = scalar_select %p487, %s486, 63
        %s489 = smul.addr %s488, 8
        %s490 = scalar_lea.vmem %s8, %s489
        %s491 = smul.u32 16, %s24
        %p492 = scmp.eq.s32.totalorder %s25, 0
        // Predicated region
        $region90: #{ngcf_forward.2} parent=84 // pred_check
          %p493 = pneg %p492
        $region91: #{ngcf_forward.2} parent=84 // pred_check_branch
          %495 = sbr.rel (%p493) target = $region93
        $region92: #{ngcf_forward.2} parent=84 // pred_region
          %496 = vst [vmem:[#allocation2] sm:$0xff] 0.0
          %497 = vst [vmem:[#allocation2 + $0x8] sm:$0xff] 0.0
          %498 = vst [vmem:[#allocation2 + $0x10] sm:$0xff] 0.0
          %499 = vst [vmem:[#allocation2 + $0x18] sm:$0xff] 0.0
          %500 = vst [vmem:[#allocation2 + $0x20] sm:$0xff] 0.0
          %501 = vst [vmem:[#allocation2 + $0x28] sm:$0xff] 0.0
          %502 = vst [vmem:[#allocation2 + $0x30] sm:$0xff] 0.0
          %503 = vst [vmem:[#allocation2 + $0x38] sm:$0xff] 0.0
          %504 = vst [vmem:[#allocation2 + $0x40] sm:$0xff] 0.0
          %505 = vst [vmem:[#allocation2 + $0x48] sm:$0xff] 0.0
          %506 = vst [vmem:[#allocation2 + $0x50] sm:$0xff] 0.0
          %507 = vst [vmem:[#allocation2 + $0x58] sm:$0xff] 0.0
          %508 = vst [vmem:[#allocation2 + $0x60] sm:$0xff] 0.0
          %509 = vst [vmem:[#allocation2 + $0x68] sm:$0xff] 0.0
          %510 = vst [vmem:[#allocation2 + $0x70] sm:$0xff] 0.0
          %511 = vst [vmem:[#allocation2 + $0x78] sm:$0xff] 0.0
          %512 = vst [vmem:[#allocation2 + $0x80] sm:$0xff] 0.0
          %513 = vst [vmem:[#allocation2 + $0x88] sm:$0xff] 0.0
          %514 = vst [vmem:[#allocation2 + $0x90] sm:$0xff] 0.0
          %515 = vst [vmem:[#allocation2 + $0x98] sm:$0xff] 0.0
          %516 = vst [vmem:[#allocation2 + $0xa0] sm:$0xff] 0.0
          %517 = vst [vmem:[#allocation2 + $0xa8] sm:$0xff] 0.0
          %518 = vst [vmem:[#allocation2 + $0xb0] sm:$0xff] 0.0
          %519 = vst [vmem:[#allocation2 + $0xb8] sm:$0xff] 0.0
          %520 = vst [vmem:[#allocation2 + $0xc0] sm:$0xff] 0.0
          %521 = vst [vmem:[#allocation2 + $0xc8] sm:$0xff] 0.0
          %522 = vst [vmem:[#allocation2 + $0xd0] sm:$0xff] 0.0
          %523 = vst [vmem:[#allocation2 + $0xd8] sm:$0xff] 0.0
          %524 = vst [vmem:[#allocation2 + $0xe0] sm:$0xff] 0.0
          %525 = vst [vmem:[#allocation2 + $0xe8] sm:$0xff] 0.0
          %526 = vst [vmem:[#allocation2 + $0xf0] sm:$0xff] 0.0
          %527 = vst [vmem:[#allocation2 + $0xf8] sm:$0xff] 0.0
          %528 = vst [vmem:[#allocation2 + $0x100] sm:$0xff] 0.0
          %529 = vst [vmem:[#allocation2 + $0x108] sm:$0xff] 0.0
          %530 = vst [vmem:[#allocation2 + $0x110] sm:$0xff] 0.0
          %531 = vst [vmem:[#allocation2 + $0x118] sm:$0xff] 0.0
          %532 = vst [vmem:[#allocation2 + $0x120] sm:$0xff] 0.0
          %533 = vst [vmem:[#allocation2 + $0x128] sm:$0xff] 0.0
          %534 = vst [vmem:[#allocation2 + $0x130] sm:$0xff] 0.0
          %535 = vst [vmem:[#allocation2 + $0x138] sm:$0xff] 0.0
          %536 = vst [vmem:[#allocation2 + $0x140] sm:$0xff] 0.0
          %537 = vst [vmem:[#allocation2 + $0x148] sm:$0xff] 0.0
          %538 = vst [vmem:[#allocation2 + $0x150] sm:$0xff] 0.0
          %539 = vst [vmem:[#allocation2 + $0x158] sm:$0xff] 0.0
          %540 = vst [vmem:[#allocation2 + $0x160] sm:$0xff] 0.0
          %541 = vst [vmem:[#allocation2 + $0x168] sm:$0xff] 0.0
          %542 = vst [vmem:[#allocation2 + $0x170] sm:$0xff] 0.0
          %543 = vst [vmem:[#allocation2 + $0x178] sm:$0xff] 0.0
          %544 = vst [vmem:[#allocation2 + $0x180] sm:$0xff] 0.0
          %545 = vst [vmem:[#allocation2 + $0x188] sm:$0xff] 0.0
          %546 = vst [vmem:[#allocation2 + $0x190] sm:$0xff] 0.0
          %547 = vst [vmem:[#allocation2 + $0x198] sm:$0xff] 0.0
          %548 = vst [vmem:[#allocation2 + $0x1a0] sm:$0xff] 0.0
          %549 = vst [vmem:[#allocation2 + $0x1a8] sm:$0xff] 0.0
          %550 = vst [vmem:[#allocation2 + $0x1b0] sm:$0xff] 0.0
          %551 = vst [vmem:[#allocation2 + $0x1b8] sm:$0xff] 0.0
          %552 = vst [vmem:[#allocation2 + $0x1c0] sm:$0xff] 0.0
          %553 = vst [vmem:[#allocation2 + $0x1c8] sm:$0xff] 0.0
          %554 = vst [vmem:[#allocation2 + $0x1d0] sm:$0xff] 0.0
          %555 = vst [vmem:[#allocation2 + $0x1d8] sm:$0xff] 0.0
          %556 = vst [vmem:[#allocation2 + $0x1e0] sm:$0xff] 0.0
          %557 = vst [vmem:[#allocation2 + $0x1e8] sm:$0xff] 0.0
          %558 = vst [vmem:[#allocation2 + $0x1f0] sm:$0xff] 0.0
          %559 = vst [vmem:[#allocation2 + $0x1f8] sm:$0xff] 0.0
          %560 = vst [vmem:[#allocation2 + $0x200] sm:$0xff] 0.0
          %561 = vst [vmem:[#allocation2 + $0x208] sm:$0xff] 0.0
          %562 = vst [vmem:[#allocation2 + $0x210] sm:$0xff] 0.0
          %563 = vst [vmem:[#allocation2 + $0x218] sm:$0xff] 0.0
          %564 = vst [vmem:[#allocation2 + $0x220] sm:$0xff] 0.0
          %565 = vst [vmem:[#allocation2 + $0x228] sm:$0xff] 0.0
          %566 = vst [vmem:[#allocation2 + $0x230] sm:$0xff] 0.0
          %567 = vst [vmem:[#allocation2 + $0x238] sm:$0xff] 0.0
          %568 = vst [vmem:[#allocation2 + $0x240] sm:$0xff] 0.0
          %569 = vst [vmem:[#allocation2 + $0x248] sm:$0xff] 0.0
          %570 = vst [vmem:[#allocation2 + $0x250] sm:$0xff] 0.0
          %571 = vst [vmem:[#allocation2 + $0x258] sm:$0xff] 0.0
          %572 = vst [vmem:[#allocation2 + $0x260] sm:$0xff] 0.0
          %573 = vst [vmem:[#allocation2 + $0x268] sm:$0xff] 0.0
          %574 = vst [vmem:[#allocation2 + $0x270] sm:$0xff] 0.0
          %575 = vst [vmem:[#allocation2 + $0x278] sm:$0xff] 0.0
          %576 = vst [vmem:[#allocation2 + $0x280] sm:$0xff] 0.0
          %577 = vst [vmem:[#allocation2 + $0x288] sm:$0xff] 0.0
          %578 = vst [vmem:[#allocation2 + $0x290] sm:$0xff] 0.0
          %579 = vst [vmem:[#allocation2 + $0x298] sm:$0xff] 0.0
          %580 = vst [vmem:[#allocation2 + $0x2a0] sm:$0xff] 0.0
          %581 = vst [vmem:[#allocation2 + $0x2a8] sm:$0xff] 0.0
          %582 = vst [vmem:[#allocation2 + $0x2b0] sm:$0xff] 0.0
          %583 = vst [vmem:[#allocation2 + $0x2b8] sm:$0xff] 0.0
          %584 = vst [vmem:[#allocation2 + $0x2c0] sm:$0xff] 0.0
          %585 = vst [vmem:[#allocation2 + $0x2c8] sm:$0xff] 0.0
          %586 = vst [vmem:[#allocation2 + $0x2d0] sm:$0xff] 0.0
          %587 = vst [vmem:[#allocation2 + $0x2d8] sm:$0xff] 0.0
          %588 = vst [vmem:[#allocation2 + $0x2e0] sm:$0xff] 0.0
          %589 = vst [vmem:[#allocation2 + $0x2e8] sm:$0xff] 0.0
          %590 = vst [vmem:[#allocation2 + $0x2f0] sm:$0xff] 0.0
          %591 = vst [vmem:[#allocation2 + $0x2f8] sm:$0xff] 0.0
        $region93: #{ngcf_forward.2} parent=84 // pred_fallthru
          _
        %v592 = vld [vmem:[#allocation2] sm:$0xff]
        %v593 = vld [vmem:[#allocation2 + $0x8] sm:$0xff]
        %v594 = vld [vmem:[#allocation2 + $0x10] sm:$0xff]
        %v595 = vld [vmem:[#allocation2 + $0x18] sm:$0xff]
        %v596 = vld [vmem:[#allocation2 + $0x20] sm:$0xff]
        %v597 = vld [vmem:[#allocation2 + $0x28] sm:$0xff]
        %v598 = vld [vmem:[#allocation2 + $0x30] sm:$0xff]
        %v599 = vld [vmem:[#allocation2 + $0x38] sm:$0xff]
        %v600 = vld [vmem:[#allocation2 + $0x40] sm:$0xff]
        %v601 = vld [vmem:[#allocation2 + $0x48] sm:$0xff]
        %v602 = vld [vmem:[#allocation2 + $0x50] sm:$0xff]
        %v603 = vld [vmem:[#allocation2 + $0x58] sm:$0xff]
        %v604 = vld [vmem:[#allocation2 + $0x60] sm:$0xff]
        %v605 = vld [vmem:[#allocation2 + $0x68] sm:$0xff]
        %v606 = vld [vmem:[#allocation2 + $0x70] sm:$0xff]
        %v607 = vld [vmem:[#allocation2 + $0x78] sm:$0xff]
        %v608 = vld [vmem:[#allocation2 + $0x80] sm:$0xff]
        %v609 = vld [vmem:[#allocation2 + $0x88] sm:$0xff]
        %v610 = vld [vmem:[#allocation2 + $0x90] sm:$0xff]
        %v611 = vld [vmem:[#allocation2 + $0x98] sm:$0xff]
        %v612 = vld [vmem:[#allocation2 + $0xa0] sm:$0xff]
        %v613 = vld [vmem:[#allocation2 + $0xa8] sm:$0xff]
        %v614 = vld [vmem:[#allocation2 + $0xb0] sm:$0xff]
        %v615 = vld [vmem:[#allocation2 + $0xb8] sm:$0xff]
        %v616 = vld [vmem:[#allocation2 + $0xc0] sm:$0xff]
        %v617 = vld [vmem:[#allocation2 + $0xc8] sm:$0xff]
        %v618 = vld [vmem:[#allocation2 + $0xd0] sm:$0xff]
        %v619 = vld [vmem:[#allocation2 + $0xd8] sm:$0xff]
        %v620 = vld [vmem:[#allocation2 + $0xe0] sm:$0xff]
        %v621 = vld [vmem:[#allocation2 + $0xe8] sm:$0xff]
        %v622 = vld [vmem:[#allocation2 + $0xf0] sm:$0xff]
        %v623 = vld [vmem:[#allocation2 + $0xf8] sm:$0xff]
        %v624 = vld [vmem:[#allocation2 + $0x100] sm:$0xff]
        %v625 = vld [vmem:[#allocation2 + $0x108] sm:$0xff]
        %v626 = vld [vmem:[#allocation2 + $0x110] sm:$0xff]
        %v627 = vld [vmem:[#allocation2 + $0x118] sm:$0xff]
        %v628 = vld [vmem:[#allocation2 + $0x120] sm:$0xff]
        %v629 = vld [vmem:[#allocation2 + $0x128] sm:$0xff]
        %v630 = vld [vmem:[#allocation2 + $0x130] sm:$0xff]
        %v631 = vld [vmem:[#allocation2 + $0x138] sm:$0xff]
        %v632 = vld [vmem:[#allocation2 + $0x140] sm:$0xff]
        %v633 = vld [vmem:[#allocation2 + $0x148] sm:$0xff]
        %v634 = vld [vmem:[#allocation2 + $0x150] sm:$0xff]
        %v635 = vld [vmem:[#allocation2 + $0x158] sm:$0xff]
        %v636 = vld [vmem:[#allocation2 + $0x160] sm:$0xff]
        %v637 = vld [vmem:[#allocation2 + $0x168] sm:$0xff]
        %v638 = vld [vmem:[#allocation2 + $0x170] sm:$0xff]
        %v639 = vld [vmem:[#allocation2 + $0x178] sm:$0xff]
        %v640 = vld [vmem:[#allocation2 + $0x180] sm:$0xff]
        %v641 = vld [vmem:[#allocation2 + $0x188] sm:$0xff]
        %v642 = vld [vmem:[#allocation2 + $0x190] sm:$0xff]
        %v643 = vld [vmem:[#allocation2 + $0x198] sm:$0xff]
        %v644 = vld [vmem:[#allocation2 + $0x1a0] sm:$0xff]
        %v645 = vld [vmem:[#allocation2 + $0x1a8] sm:$0xff]
        %v646 = vld [vmem:[#allocation2 + $0x1b0] sm:$0xff]
        %v647 = vld [vmem:[#allocation2 + $0x1b8] sm:$0xff]
        %v648 = vld [vmem:[#allocation2 + $0x1c0] sm:$0xff]
        %v649 = vld [vmem:[#allocation2 + $0x1c8] sm:$0xff]
        %v650 = vld [vmem:[#allocation2 + $0x1d0] sm:$0xff]
        %v651 = vld [vmem:[#allocation2 + $0x1d8] sm:$0xff]
        %v652 = vld [vmem:[#allocation2 + $0x1e0] sm:$0xff]
        %v653 = vld [vmem:[#allocation2 + $0x1e8] sm:$0xff]
        %v654 = vld [vmem:[#allocation2 + $0x1f0] sm:$0xff]
        %v655 = vld [vmem:[#allocation2 + $0x1f8] sm:$0xff]
        %v656 = vld [vmem:[#allocation2 + $0x200] sm:$0xff]
        %v657 = vld [vmem:[#allocation2 + $0x208] sm:$0xff]
        %v658 = vld [vmem:[#allocation2 + $0x210] sm:$0xff]
        %v659 = vld [vmem:[#allocation2 + $0x218] sm:$0xff]
        %v660 = vld [vmem:[#allocation2 + $0x220] sm:$0xff]
        %v661 = vld [vmem:[#allocation2 + $0x228] sm:$0xff]
        %v662 = vld [vmem:[#allocation2 + $0x230] sm:$0xff]
        %v663 = vld [vmem:[#allocation2 + $0x238] sm:$0xff]
        %v664 = vld [vmem:[#allocation2 + $0x240] sm:$0xff]
        %v665 = vld [vmem:[#allocation2 + $0x248] sm:$0xff]
        %v666 = vld [vmem:[#allocation2 + $0x250] sm:$0xff]
        %v667 = vld [vmem:[#allocation2 + $0x258] sm:$0xff]
        %v668 = vld [vmem:[#allocation2 + $0x260] sm:$0xff]
        %v669 = vld [vmem:[#allocation2 + $0x268] sm:$0xff]
        %v670 = vld [vmem:[#allocation2 + $0x270] sm:$0xff]
        %v671 = vld [vmem:[#allocation2 + $0x278] sm:$0xff]
        %v672 = vld [vmem:[#allocation2 + $0x280] sm:$0xff]
        %v673 = vld [vmem:[#allocation2 + $0x288] sm:$0xff]
        %v674 = vld [vmem:[#allocation2 + $0x290] sm:$0xff]
        %v675 = vld [vmem:[#allocation2 + $0x298] sm:$0xff]
        %v676 = vld [vmem:[#allocation2 + $0x2a0] sm:$0xff]
        %v677 = vld [vmem:[#allocation2 + $0x2a8] sm:$0xff]
        %v678 = vld [vmem:[#allocation2 + $0x2b0] sm:$0xff]
        %v679 = vld [vmem:[#allocation2 + $0x2b8] sm:$0xff]
        %v680 = vld [vmem:[#allocation2 + $0x2c0] sm:$0xff]
        %v681 = vld [vmem:[#allocation2 + $0x2c8] sm:$0xff]
        %v682 = vld [vmem:[#allocation2 + $0x2d0] sm:$0xff]
        %v683 = vld [vmem:[#allocation2 + $0x2d8] sm:$0xff]
        %v684 = vld [vmem:[#allocation2 + $0x2e0] sm:$0xff]
        %v685 = vld [vmem:[#allocation2 + $0x2e8] sm:$0xff]
        %v686 = vld [vmem:[#allocation2 + $0x2f0] sm:$0xff]
        %v687 = vld [vmem:[#allocation2 + $0x2f8] sm:$0xff]
        %v688 = vld [vmem:[%s417] sm:$0xf]
        %v689 = vld [vmem:[%s417 + $0x4] sm:$0xf]
        %v690 = vld [vmem:[%s417 + $0x8] sm:$0xf]
        %v691 = vld [vmem:[%s417 + $0xc] sm:$0xf]
        %v692 = vld [vmem:[%s417 + $0x10] sm:$0xf]
        %v693 = vld [vmem:[%s417 + $0x14] sm:$0xf]
        %v694 = vld [vmem:[%s417 + $0x18] sm:$0xf]
        %v695 = vld [vmem:[%s417 + $0x1c] sm:$0xf]
        %v696 = vld [vmem:[%s417 + $0x20] sm:$0xf]
        %v697 = vld [vmem:[%s417 + $0x24] sm:$0xf]
        %v698 = vld [vmem:[%s417 + $0x28] sm:$0xf]
        %v699 = vld [vmem:[%s417 + $0x2c] sm:$0xf]
        %v700 = vld [vmem:[%s417 + $0x30] sm:$0xf]
        %v701 = vld [vmem:[%s417 + $0x34] sm:$0xf]
        %v702 = vld [vmem:[%s417 + $0x38] sm:$0xf]
        %v703 = vld [vmem:[%s417 + $0x3c] sm:$0xf]
        %v704 = vld [vmem:[%s471] sm:$0xff]
        %v705 = vld [vmem:[%s471 + $0x8] sm:$0xff]
        %v706 = vld [vmem:[%s471 + $0x10] sm:$0xff]
        %v707 = vld [vmem:[%s471 + $0x18] sm:$0xff]
        %v708 = vld [vmem:[%s471 + $0x20] sm:$0xff]
        %v709 = vld [vmem:[%s471 + $0x28] sm:$0xff]
        %v710 = vld [vmem:[%s471 + $0x30] sm:$0xff]
        %v711 = vld [vmem:[%s471 + $0x38] sm:$0xff]
        %v712 = vld [vmem:[%s471 + $0x40] sm:$0xff]
        %v713 = vld [vmem:[%s471 + $0x48] sm:$0xff]
        %v714 = vld [vmem:[%s471 + $0x50] sm:$0xff]
        %v715 = vld [vmem:[%s471 + $0x58] sm:$0xff]
        %v716 = vld [vmem:[%s471 + $0x60] sm:$0xff]
        %v717 = vld [vmem:[%s471 + $0x68] sm:$0xff]
        %v718 = vld [vmem:[%s471 + $0x70] sm:$0xff]
        %v719 = vld [vmem:[%s471 + $0x78] sm:$0xff]
        %v720 = vld [vmem:[%s471 + $0x80] sm:$0xff]
        %v721 = vld [vmem:[%s471 + $0x88] sm:$0xff]
        %v722 = vld [vmem:[%s471 + $0x90] sm:$0xff]
        %v723 = vld [vmem:[%s471 + $0x98] sm:$0xff]
        %v724 = vld [vmem:[%s471 + $0xa0] sm:$0xff]
        %v725 = vld [vmem:[%s471 + $0xa8] sm:$0xff]
        %v726 = vld [vmem:[%s471 + $0xb0] sm:$0xff]
        %v727 = vld [vmem:[%s471 + $0xb8] sm:$0xff]
        %v728 = vld [vmem:[%s471 + $0xc0] sm:$0xff]
        %v729 = vld [vmem:[%s471 + $0xc8] sm:$0xff]
        %v730 = vld [vmem:[%s471 + $0xd0] sm:$0xff]
        %v731 = vld [vmem:[%s471 + $0xd8] sm:$0xff]
        %v732 = vld [vmem:[%s471 + $0xe0] sm:$0xff]
        %v733 = vld [vmem:[%s471 + $0xe8] sm:$0xff]
        %v734 = vld [vmem:[%s471 + $0xf0] sm:$0xff]
        %v735 = vld [vmem:[%s471 + $0xf8] sm:$0xff]
        %v736 = vld [vmem:[%s471 + $0x100] sm:$0xff]
        %v737 = vld [vmem:[%s471 + $0x108] sm:$0xff]
        %v738 = vld [vmem:[%s471 + $0x110] sm:$0xff]
        %v739 = vld [vmem:[%s471 + $0x118] sm:$0xff]
        %v740 = vld [vmem:[%s471 + $0x120] sm:$0xff]
        %v741 = vld [vmem:[%s471 + $0x128] sm:$0xff]
        %v742 = vld [vmem:[%s471 + $0x130] sm:$0xff]
        %v743 = vld [vmem:[%s471 + $0x138] sm:$0xff]
        %v744 = vld [vmem:[%s471 + $0x140] sm:$0xff]
        %v745 = vld [vmem:[%s471 + $0x148] sm:$0xff]
        %v746 = vld [vmem:[%s471 + $0x150] sm:$0xff]
        %v747 = vld [vmem:[%s471 + $0x158] sm:$0xff]
        %v748 = vld [vmem:[%s471 + $0x160] sm:$0xff]
        %v749 = vld [vmem:[%s471 + $0x168] sm:$0xff]
        %v750 = vld [vmem:[%s471 + $0x170] sm:$0xff]
        %v751 = vld [vmem:[%s471 + $0x178] sm:$0xff]
        %v768 = vunpack.c.l.b16 %v688
        %v769 = vunpack.c.l.b16 %v689
        %v770 = vunpack.c.l.b16 %v690
        %v771 = vunpack.c.l.b16 %v691
        %v772 = vunpack.c.l.b16 %v692
        %v773 = vunpack.c.l.b16 %v693
        %v774 = vunpack.c.l.b16 %v694
        %v775 = vunpack.c.l.b16 %v695
        %v776 = vunpack.c.l.b16 %v696
        %v777 = vunpack.c.l.b16 %v697
        %v778 = vunpack.c.l.b16 %v698
        %v779 = vunpack.c.l.b16 %v699
        %v780 = vunpack.c.l.b16 %v700
        %v781 = vunpack.c.l.b16 %v701
        %v782 = vunpack.c.l.b16 %v702
        %v783 = vunpack.c.l.b16 %v703
        %v784 = vpack.c.b16 %v769, %v768
        %v785 = vpack.c.b16 %v771, %v770
        %v786 = vpack.c.b16 %v773, %v772
        %v787 = vpack.c.b16 %v775, %v774
        %v788 = vpack.c.b16 %v777, %v776
        %v789 = vpack.c.b16 %v779, %v778
        %v790 = vpack.c.b16 %v781, %v780
        %v791 = vpack.c.b16 %v783, %v782
        %v848 = vunpack.c.l.b16 %v704
        %v849 = vunpack.c.h.b16 %v704
        %v850 = vunpack.c.l.b16 %v705
        %v851 = vunpack.c.h.b16 %v705
        %v852 = vunpack.c.l.b16 %v706
        %v853 = vunpack.c.h.b16 %v706
        %v854 = vunpack.c.l.b16 %v707
        %v855 = vunpack.c.h.b16 %v707
        %v856 = vunpack.c.l.b16 %v708
        %v857 = vunpack.c.h.b16 %v708
        %v858 = vunpack.c.l.b16 %v709
        %v859 = vunpack.c.h.b16 %v709
        %v860 = vunpack.c.l.b16 %v710
        %v861 = vunpack.c.h.b16 %v710
        %v862 = vunpack.c.l.b16 %v711
        %v863 = vunpack.c.h.b16 %v711
        %v864 = vunpack.c.l.b16 %v712
        %v865 = vunpack.c.h.b16 %v712
        %v866 = vunpack.c.l.b16 %v713
        %v867 = vunpack.c.h.b16 %v713
        %v868 = vunpack.c.l.b16 %v714
        %v869 = vunpack.c.h.b16 %v714
        %v870 = vunpack.c.l.b16 %v715
        %v871 = vunpack.c.h.b16 %v715
        %v872 = vunpack.c.l.b16 %v716
        %v873 = vunpack.c.h.b16 %v716
        %v874 = vunpack.c.l.b16 %v717
        %v875 = vunpack.c.h.b16 %v717
        %v876 = vunpack.c.l.b16 %v718
        %v877 = vunpack.c.h.b16 %v718
        %v878 = vunpack.c.l.b16 %v719
        %v879 = vunpack.c.h.b16 %v719
        %v880 = vunpack.c.l.b16 %v720
        %v881 = vunpack.c.h.b16 %v720
        %v882 = vunpack.c.l.b16 %v721
        %v883 = vunpack.c.h.b16 %v721
        %v884 = vunpack.c.l.b16 %v722
        %v885 = vunpack.c.h.b16 %v722
        %v886 = vunpack.c.l.b16 %v723
        %v887 = vunpack.c.h.b16 %v723
        %v888 = vunpack.c.l.b16 %v724
        %v889 = vunpack.c.h.b16 %v724
        %v890 = vunpack.c.l.b16 %v725
        %v891 = vunpack.c.h.b16 %v725
        %v892 = vunpack.c.l.b16 %v726
        %v893 = vunpack.c.h.b16 %v726
        %v894 = vunpack.c.l.b16 %v727
        %v895 = vunpack.c.h.b16 %v727
        %v896 = vunpack.c.l.b16 %v728
        %v897 = vunpack.c.h.b16 %v728
        %v898 = vunpack.c.l.b16 %v729
        %v899 = vunpack.c.h.b16 %v729
        %v900 = vunpack.c.l.b16 %v730
        %v901 = vunpack.c.h.b16 %v730
        %v902 = vunpack.c.l.b16 %v731
        %v903 = vunpack.c.h.b16 %v731
        %v904 = vunpack.c.l.b16 %v732
        %v905 = vunpack.c.h.b16 %v732
        %v906 = vunpack.c.l.b16 %v733
        %v907 = vunpack.c.h.b16 %v733
        %v908 = vunpack.c.l.b16 %v734
        %v909 = vunpack.c.h.b16 %v734
        %v910 = vunpack.c.l.b16 %v735
        %v911 = vunpack.c.h.b16 %v735
        %v912 = vunpack.c.l.b16 %v736
        %v913 = vunpack.c.h.b16 %v736
        %v914 = vunpack.c.l.b16 %v737
        %v915 = vunpack.c.h.b16 %v737
        %v916 = vunpack.c.l.b16 %v738
        %v917 = vunpack.c.h.b16 %v738
        %v918 = vunpack.c.l.b16 %v739
        %v919 = vunpack.c.h.b16 %v739
        %v920 = vunpack.c.l.b16 %v740
        %v921 = vunpack.c.h.b16 %v740
        %v922 = vunpack.c.l.b16 %v741
        %v923 = vunpack.c.h.b16 %v741
        %v924 = vunpack.c.l.b16 %v742
        %v925 = vunpack.c.h.b16 %v742
        %v926 = vunpack.c.l.b16 %v743
        %v927 = vunpack.c.h.b16 %v743
        %v928 = vunpack.c.l.b16 %v744
        %v929 = vunpack.c.h.b16 %v744
        %v930 = vunpack.c.l.b16 %v745
        %v931 = vunpack.c.h.b16 %v745
        %v932 = vunpack.c.l.b16 %v746
        %v933 = vunpack.c.h.b16 %v746
        %v934 = vunpack.c.l.b16 %v747
        %v935 = vunpack.c.h.b16 %v747
        %v936 = vunpack.c.l.b16 %v748
        %v937 = vunpack.c.h.b16 %v748
        %v938 = vunpack.c.l.b16 %v749
        %v939 = vunpack.c.h.b16 %v749
        %v940 = vunpack.c.l.b16 %v750
        %v941 = vunpack.c.h.b16 %v750
        %v942 = vunpack.c.l.b16 %v751
        %v943 = vunpack.c.h.b16 %v751
        %v944 = vpack.c.b16 %v854, %v848
        %v945 = vpack.c.b16 %v855, %v849
        %v946 = vpack.c.b16 %v856, %v850
        %v947 = vpack.c.b16 %v857, %v851
        %v948 = vpack.c.b16 %v858, %v852
        %v949 = vpack.c.b16 %v859, %v853
        %v950 = vpack.c.b16 %v866, %v860
        %v951 = vpack.c.b16 %v867, %v861
        %v952 = vpack.c.b16 %v868, %v862
        %v953 = vpack.c.b16 %v869, %v863
        %v954 = vpack.c.b16 %v870, %v864
        %v955 = vpack.c.b16 %v871, %v865
        %v956 = vpack.c.b16 %v878, %v872
        %v957 = vpack.c.b16 %v879, %v873
        %v958 = vpack.c.b16 %v880, %v874
        %v959 = vpack.c.b16 %v881, %v875
        %v960 = vpack.c.b16 %v882, %v876
        %v961 = vpack.c.b16 %v883, %v877
        %v962 = vpack.c.b16 %v890, %v884
        %v963 = vpack.c.b16 %v891, %v885
        %v964 = vpack.c.b16 %v892, %v886
        %v965 = vpack.c.b16 %v893, %v887
        %v966 = vpack.c.b16 %v894, %v888
        %v967 = vpack.c.b16 %v895, %v889
        %v968 = vpack.c.b16 %v902, %v896
        %v969 = vpack.c.b16 %v903, %v897
        %v970 = vpack.c.b16 %v904, %v898
        %v971 = vpack.c.b16 %v905, %v899
        %v972 = vpack.c.b16 %v906, %v900
        %v973 = vpack.c.b16 %v907, %v901
        %v974 = vpack.c.b16 %v914, %v908
        %v975 = vpack.c.b16 %v915, %v909
        %v976 = vpack.c.b16 %v916, %v910
        %v977 = vpack.c.b16 %v917, %v911
        %v978 = vpack.c.b16 %v918, %v912
        %v979 = vpack.c.b16 %v919, %v913
        %v980 = vpack.c.b16 %v926, %v920
        %v981 = vpack.c.b16 %v927, %v921
        %v982 = vpack.c.b16 %v928, %v922
        %v983 = vpack.c.b16 %v929, %v923
        %v984 = vpack.c.b16 %v930, %v924
        %v985 = vpack.c.b16 %v931, %v925
        %v986 = vpack.c.b16 %v938, %v932
        %v987 = vpack.c.b16 %v939, %v933
        %v988 = vpack.c.b16 %v940, %v934
        %v989 = vpack.c.b16 %v941, %v935
        %v990 = vpack.c.b16 %v942, %v936
        %v991 = vpack.c.b16 %v943, %v937
        %1040 = vmatpush.bf16.msra.mxu0 %v986
        %1041 = vmatpush.bf16.msra.mxu0 %v980
        %1042 = vmatpush.bf16.msra.mxu0 %v974
        %1043 = vmatpush.bf16.msra.mxu0 %v968
        %1044 = vmatpush.bf16.msra.mxu0 %v962
        %1045 = vmatpush.bf16.msra.mxu0 %v956
        %1046 = vmatpush.bf16.msra.mxu0 %v950
        %1047 = vmatpush.bf16.msra.mxu0 %v944
        %1048 = vmatmul.bf16.gmra.mxu0 %v784
        %v1049 = vpop.f32.mrf.mxu0
        %v1050 = vadd.f32 0.0, %v1049
        %v1051 = vpop.f32.mrf.mxu0
        %v1052 = vadd.f32 0.0, %v1051
        %1053 = vmatmul.bf16.gmra.mxu0 %v785
        %v1054 = vpop.f32.mrf.mxu0
        %v1055 = vadd.f32 0.0, %v1054
        %v1056 = vpop.f32.mrf.mxu0
        %v1057 = vadd.f32 0.0, %v1056
        %1058 = vmatmul.bf16.gmra.mxu0 %v786
        %v1059 = vpop.f32.mrf.mxu0
        %v1060 = vadd.f32 0.0, %v1059
        %v1061 = vpop.f32.mrf.mxu0
        %v1062 = vadd.f32 0.0, %v1061
        %1063 = vmatmul.bf16.gmra.mxu0 %v787
        %v1064 = vpop.f32.mrf.mxu0
        %v1065 = vadd.f32 0.0, %v1064
        %v1066 = vpop.f32.mrf.mxu0
        %v1067 = vadd.f32 0.0, %v1066
        %1068 = vmatmul.bf16.gmra.mxu0 %v788
        %v1069 = vpop.f32.mrf.mxu0
        %v1070 = vadd.f32 0.0, %v1069
        %v1071 = vpop.f32.mrf.mxu0
        %v1072 = vadd.f32 0.0, %v1071
        %1073 = vmatmul.bf16.gmra.mxu0 %v789
        %v1074 = vpop.f32.mrf.mxu0
        %v1075 = vadd.f32 0.0, %v1074
        %v1076 = vpop.f32.mrf.mxu0
        %v1077 = vadd.f32 0.0, %v1076
        %1078 = vmatmul.bf16.gmra.mxu0 %v790
        %v1079 = vpop.f32.mrf.mxu0
        %v1080 = vadd.f32 0.0, %v1079
        %v1081 = vpop.f32.mrf.mxu0
        %v1082 = vadd.f32 0.0, %v1081
        %1083 = vmatmul.bf16.gmra.mxu0 %v791
        %v1084 = vpop.f32.mrf.mxu0
        %v1085 = vadd.f32 0.0, %v1084
        %v1086 = vpop.f32.mrf.mxu0
        %v1087 = vadd.f32 0.0, %v1086
        %1088 = vdwg.mxu0
        %1089 = vmatpush.bf16.msra.mxu0 %v987
        %1090 = vmatpush.bf16.msra.mxu0 %v981
        %1091 = vmatpush.bf16.msra.mxu0 %v975
        %1092 = vmatpush.bf16.msra.mxu0 %v969
        %1093 = vmatpush.bf16.msra.mxu0 %v963
        %1094 = vmatpush.bf16.msra.mxu0 %v957
        %1095 = vmatpush.bf16.msra.mxu0 %v951
        %1096 = vmatpush.bf16.msra.mxu0 %v945
        %1097 = vmatmul.bf16.gmra.mxu0 %v784
        %v1098 = vpop.f32.mrf.mxu0
        %v1099 = vadd.f32 0.0, %v1098
        %v1100 = vpop.f32.mrf.mxu0
        %v1101 = vadd.f32 0.0, %v1100
        %1102 = vmatmul.bf16.gmra.mxu0 %v785
        %v1103 = vpop.f32.mrf.mxu0
        %v1104 = vadd.f32 0.0, %v1103
        %v1105 = vpop.f32.mrf.mxu0
        %v1106 = vadd.f32 0.0, %v1105
        %1107 = vmatmul.bf16.gmra.mxu0 %v786
        %v1108 = vpop.f32.mrf.mxu0
        %v1109 = vadd.f32 0.0, %v1108
        %v1110 = vpop.f32.mrf.mxu0
        %v1111 = vadd.f32 0.0, %v1110
        %1112 = vmatmul.bf16.gmra.mxu0 %v787
        %v1113 = vpop.f32.mrf.mxu0
        %v1114 = vadd.f32 0.0, %v1113
        %v1115 = vpop.f32.mrf.mxu0
        %v1116 = vadd.f32 0.0, %v1115
        %1117 = vmatmul.bf16.gmra.mxu0 %v788
        %v1118 = vpop.f32.mrf.mxu0
        %v1119 = vadd.f32 0.0, %v1118
        %v1120 = vpop.f32.mrf.mxu0
        %v1121 = vadd.f32 0.0, %v1120
        %1122 = vmatmul.bf16.gmra.mxu0 %v789
        %v1123 = vpop.f32.mrf.mxu0
        %v1124 = vadd.f32 0.0, %v1123
        %v1125 = vpop.f32.mrf.mxu0
        %v1126 = vadd.f32 0.0, %v1125
        %1127 = vmatmul.bf16.gmra.mxu0 %v790
        %v1128 = vpop.f32.mrf.mxu0
        %v1129 = vadd.f32 0.0, %v1128
        %v1130 = vpop.f32.mrf.mxu0
        %v1131 = vadd.f32 0.0, %v1130
        %1132 = vmatmul.bf16.gmra.mxu0 %v791
        %v1133 = vpop.f32.mrf.mxu0
        %v1134 = vadd.f32 0.0, %v1133
        %v1135 = vpop.f32.mrf.mxu0
        %v1136 = vadd.f32 0.0, %v1135
        %1137 = vdwg.mxu0
        %1138 = vmatpush.bf16.msra.mxu0 %v988
        %1139 = vmatpush.bf16.msra.mxu0 %v982
        %1140 = vmatpush.bf16.msra.mxu0 %v976
        %1141 = vmatpush.bf16.msra.mxu0 %v970
        %1142 = vmatpush.bf16.msra.mxu0 %v964
        %1143 = vmatpush.bf16.msra.mxu0 %v958
        %1144 = vmatpush.bf16.msra.mxu0 %v952
        %1145 = vmatpush.bf16.msra.mxu0 %v946
        %1146 = vmatmul.bf16.gmra.mxu0 %v784
        %v1147 = vpop.f32.mrf.mxu0
        %v1148 = vadd.f32 0.0, %v1147
        %v1149 = vpop.f32.mrf.mxu0
        %v1150 = vadd.f32 0.0, %v1149
        %1151 = vmatmul.bf16.gmra.mxu0 %v785
        %v1152 = vpop.f32.mrf.mxu0
        %v1153 = vadd.f32 0.0, %v1152
        %v1154 = vpop.f32.mrf.mxu0
        %v1155 = vadd.f32 0.0, %v1154
        %1156 = vmatmul.bf16.gmra.mxu0 %v786
        %v1157 = vpop.f32.mrf.mxu0
        %v1158 = vadd.f32 0.0, %v1157
        %v1159 = vpop.f32.mrf.mxu0
        %v1160 = vadd.f32 0.0, %v1159
        %1161 = vmatmul.bf16.gmra.mxu0 %v787
        %v1162 = vpop.f32.mrf.mxu0
        %v1163 = vadd.f32 0.0, %v1162
        %v1164 = vpop.f32.mrf.mxu0
        %v1165 = vadd.f32 0.0, %v1164
        %1166 = vmatmul.bf16.gmra.mxu0 %v788
        %v1167 = vpop.f32.mrf.mxu0
        %v1168 = vadd.f32 0.0, %v1167
        %v1169 = vpop.f32.mrf.mxu0
        %v1170 = vadd.f32 0.0, %v1169
        %1171 = vmatmul.bf16.gmra.mxu0 %v789
        %v1172 = vpop.f32.mrf.mxu0
        %v1173 = vadd.f32 0.0, %v1172
        %v1174 = vpop.f32.mrf.mxu0
        %v1175 = vadd.f32 0.0, %v1174
        %1176 = vmatmul.bf16.gmra.mxu0 %v790
        %v1177 = vpop.f32.mrf.mxu0
        %v1178 = vadd.f32 0.0, %v1177
        %v1179 = vpop.f32.mrf.mxu0
        %v1180 = vadd.f32 0.0, %v1179
        %1181 = vmatmul.bf16.gmra.mxu0 %v791
        %v1182 = vpop.f32.mrf.mxu0
        %v1183 = vadd.f32 0.0, %v1182
        %v1184 = vpop.f32.mrf.mxu0
        %v1185 = vadd.f32 0.0, %v1184
        %1186 = vdwg.mxu0
        %1187 = vmatpush.bf16.msra.mxu0 %v989
        %1188 = vmatpush.bf16.msra.mxu0 %v983
        %1189 = vmatpush.bf16.msra.mxu0 %v977
        %1190 = vmatpush.bf16.msra.mxu0 %v971
        %1191 = vmatpush.bf16.msra.mxu0 %v965
        %1192 = vmatpush.bf16.msra.mxu0 %v959
        %1193 = vmatpush.bf16.msra.mxu0 %v953
        %1194 = vmatpush.bf16.msra.mxu0 %v947
        %1195 = vmatmul.bf16.gmra.mxu0 %v784
        %v1196 = vpop.f32.mrf.mxu0
        %v1197 = vadd.f32 0.0, %v1196
        %v1198 = vpop.f32.mrf.mxu0
        %v1199 = vadd.f32 0.0, %v1198
        %1200 = vmatmul.bf16.gmra.mxu0 %v785
        %v1201 = vpop.f32.mrf.mxu0
        %v1202 = vadd.f32 0.0, %v1201
        %v1203 = vpop.f32.mrf.mxu0
        %v1204 = vadd.f32 0.0, %v1203
        %1205 = vmatmul.bf16.gmra.mxu0 %v786
        %v1206 = vpop.f32.mrf.mxu0
        %v1207 = vadd.f32 0.0, %v1206
        %v1208 = vpop.f32.mrf.mxu0
        %v1209 = vadd.f32 0.0, %v1208
        %1210 = vmatmul.bf16.gmra.mxu0 %v787
        %v1211 = vpop.f32.mrf.mxu0
        %v1212 = vadd.f32 0.0, %v1211
        %v1213 = vpop.f32.mrf.mxu0
        %v1214 = vadd.f32 0.0, %v1213
        %1215 = vmatmul.bf16.gmra.mxu0 %v788
        %v1216 = vpop.f32.mrf.mxu0
        %v1217 = vadd.f32 0.0, %v1216
        %v1218 = vpop.f32.mrf.mxu0
        %v1219 = vadd.f32 0.0, %v1218
        %1220 = vmatmul.bf16.gmra.mxu0 %v789
        %v1221 = vpop.f32.mrf.mxu0
        %v1222 = vadd.f32 0.0, %v1221
        %v1223 = vpop.f32.mrf.mxu0
        %v1224 = vadd.f32 0.0, %v1223
        %1225 = vmatmul.bf16.gmra.mxu0 %v790
        %v1226 = vpop.f32.mrf.mxu0
        %v1227 = vadd.f32 0.0, %v1226
        %v1228 = vpop.f32.mrf.mxu0
        %v1229 = vadd.f32 0.0, %v1228
        %1230 = vmatmul.bf16.gmra.mxu0 %v791
        %v1231 = vpop.f32.mrf.mxu0
        %v1232 = vadd.f32 0.0, %v1231
        %v1233 = vpop.f32.mrf.mxu0
        %v1234 = vadd.f32 0.0, %v1233
        %1235 = vdwg.mxu0
        %1236 = vmatpush.bf16.msra.mxu0 %v990
        %1237 = vmatpush.bf16.msra.mxu0 %v984
        %1238 = vmatpush.bf16.msra.mxu0 %v978
        %1239 = vmatpush.bf16.msra.mxu0 %v972
        %1240 = vmatpush.bf16.msra.mxu0 %v966
        %1241 = vmatpush.bf16.msra.mxu0 %v960
        %1242 = vmatpush.bf16.msra.mxu0 %v954
        %1243 = vmatpush.bf16.msra.mxu0 %v948
        %1244 = vmatmul.bf16.gmra.mxu0 %v784
        %v1245 = vpop.f32.mrf.mxu0
        %v1246 = vadd.f32 0.0, %v1245
        %v1247 = vpop.f32.mrf.mxu0
        %v1248 = vadd.f32 0.0, %v1247
        %1249 = vmatmul.bf16.gmra.mxu0 %v785
        %v1250 = vpop.f32.mrf.mxu0
        %v1251 = vadd.f32 0.0, %v1250
        %v1252 = vpop.f32.mrf.mxu0
        %v1253 = vadd.f32 0.0, %v1252
        %1254 = vmatmul.bf16.gmra.mxu0 %v786
        %v1255 = vpop.f32.mrf.mxu0
        %v1256 = vadd.f32 0.0, %v1255
        %v1257 = vpop.f32.mrf.mxu0
        %v1258 = vadd.f32 0.0, %v1257
        %1259 = vmatmul.bf16.gmra.mxu0 %v787
        %v1260 = vpop.f32.mrf.mxu0
        %v1261 = vadd.f32 0.0, %v1260
        %v1262 = vpop.f32.mrf.mxu0
        %v1263 = vadd.f32 0.0, %v1262
        %1264 = vmatmul.bf16.gmra.mxu0 %v788
        %v1265 = vpop.f32.mrf.mxu0
        %v1266 = vadd.f32 0.0, %v1265
        %v1267 = vpop.f32.mrf.mxu0
        %v1268 = vadd.f32 0.0, %v1267
        %1269 = vmatmul.bf16.gmra.mxu0 %v789
        %v1270 = vpop.f32.mrf.mxu0
        %v1271 = vadd.f32 0.0, %v1270
        %v1272 = vpop.f32.mrf.mxu0
        %v1273 = vadd.f32 0.0, %v1272
        %1274 = vmatmul.bf16.gmra.mxu0 %v790
        %v1275 = vpop.f32.mrf.mxu0
        %v1276 = vadd.f32 0.0, %v1275
        %v1277 = vpop.f32.mrf.mxu0
        %v1278 = vadd.f32 0.0, %v1277
        %1279 = vmatmul.bf16.gmra.mxu0 %v791
        %v1280 = vpop.f32.mrf.mxu0
        %v1281 = vadd.f32 0.0, %v1280
        %v1282 = vpop.f32.mrf.mxu0
        %v1283 = vadd.f32 0.0, %v1282
        %1284 = vdwg.mxu0
        %1285 = vmatpush.bf16.msra.mxu0 %v991
        %1286 = vmatpush.bf16.msra.mxu0 %v985
        %1287 = vmatpush.bf16.msra.mxu0 %v979
        %1288 = vmatpush.bf16.msra.mxu0 %v973
        %1289 = vmatpush.bf16.msra.mxu0 %v967
        %1290 = vmatpush.bf16.msra.mxu0 %v961
        %1291 = vmatpush.bf16.msra.mxu0 %v955
        %1292 = vmatpush.bf16.msra.mxu0 %v949
        %1293 = vmatmul.bf16.gmra.mxu0 %v784
        %v1294 = vpop.f32.mrf.mxu0
        %v1295 = vadd.f32 0.0, %v1294
        %v1296 = vpop.f32.mrf.mxu0
        %v1297 = vadd.f32 0.0, %v1296
        %1298 = vmatmul.bf16.gmra.mxu0 %v785
        %v1299 = vpop.f32.mrf.mxu0
        %v1300 = vadd.f32 0.0, %v1299
        %v1301 = vpop.f32.mrf.mxu0
        %v1302 = vadd.f32 0.0, %v1301
        %1303 = vmatmul.bf16.gmra.mxu0 %v786
        %v1304 = vpop.f32.mrf.mxu0
        %v1305 = vadd.f32 0.0, %v1304
        %v1306 = vpop.f32.mrf.mxu0
        %v1307 = vadd.f32 0.0, %v1306
        %1308 = vmatmul.bf16.gmra.mxu0 %v787
        %v1309 = vpop.f32.mrf.mxu0
        %v1310 = vadd.f32 0.0, %v1309
        %v1311 = vpop.f32.mrf.mxu0
        %v1312 = vadd.f32 0.0, %v1311
        %1313 = vmatmul.bf16.gmra.mxu0 %v788
        %v1314 = vpop.f32.mrf.mxu0
        %v1315 = vadd.f32 0.0, %v1314
        %v1316 = vpop.f32.mrf.mxu0
        %v1317 = vadd.f32 0.0, %v1316
        %1318 = vmatmul.bf16.gmra.mxu0 %v789
        %v1319 = vpop.f32.mrf.mxu0
        %v1320 = vadd.f32 0.0, %v1319
        %v1321 = vpop.f32.mrf.mxu0
        %v1322 = vadd.f32 0.0, %v1321
        %1323 = vmatmul.bf16.gmra.mxu0 %v790
        %v1324 = vpop.f32.mrf.mxu0
        %v1325 = vadd.f32 0.0, %v1324
        %v1326 = vpop.f32.mrf.mxu0
        %v1327 = vadd.f32 0.0, %v1326
        %1328 = vmatmul.bf16.gmra.mxu0 %v791
        %v1329 = vpop.f32.mrf.mxu0
        %v1330 = vadd.f32 0.0, %v1329
        %v1331 = vpop.f32.mrf.mxu0
        %v1332 = vadd.f32 0.0, %v1331
        %1333 = vdwg.mxu0
        %v1334 = vadd.f32 %v592, %v1050
        %v1335 = vadd.f32 %v593, %v1099
        %v1336 = vadd.f32 %v594, %v1148
        %v1337 = vadd.f32 %v595, %v1197
        %v1338 = vadd.f32 %v596, %v1246
        %v1339 = vadd.f32 %v597, %v1295
        %v1340 = vadd.f32 %v598, %v1052
        %v1341 = vadd.f32 %v599, %v1101
        %v1342 = vadd.f32 %v600, %v1150
        %v1343 = vadd.f32 %v601, %v1199
        %v1344 = vadd.f32 %v602, %v1248
        %v1345 = vadd.f32 %v603, %v1297
        %v1346 = vadd.f32 %v604, %v1055
        %v1347 = vadd.f32 %v605, %v1104
        %v1348 = vadd.f32 %v606, %v1153
        %v1349 = vadd.f32 %v607, %v1202
        %v1350 = vadd.f32 %v608, %v1251
        %v1351 = vadd.f32 %v609, %v1300
        %v1352 = vadd.f32 %v610, %v1057
        %v1353 = vadd.f32 %v611, %v1106
        %v1354 = vadd.f32 %v612, %v1155
        %v1355 = vadd.f32 %v613, %v1204
        %v1356 = vadd.f32 %v614, %v1253
        %v1357 = vadd.f32 %v615, %v1302
        %v1358 = vadd.f32 %v616, %v1060
        %v1359 = vadd.f32 %v617, %v1109
        %v1360 = vadd.f32 %v618, %v1158
        %v1361 = vadd.f32 %v619, %v1207
        %v1362 = vadd.f32 %v620, %v1256
        %v1363 = vadd.f32 %v621, %v1305
        %v1364 = vadd.f32 %v622, %v1062
        %v1365 = vadd.f32 %v623, %v1111
        %v1366 = vadd.f32 %v624, %v1160
        %v1367 = vadd.f32 %v625, %v1209
        %v1368 = vadd.f32 %v626, %v1258
        %v1369 = vadd.f32 %v627, %v1307
        %v1370 = vadd.f32 %v628, %v1065
        %v1371 = vadd.f32 %v629, %v1114
        %v1372 = vadd.f32 %v630, %v1163
        %v1373 = vadd.f32 %v631, %v1212
        %v1374 = vadd.f32 %v632, %v1261
        %v1375 = vadd.f32 %v633, %v1310
        %v1376 = vadd.f32 %v634, %v1067
        %v1377 = vadd.f32 %v635, %v1116
        %v1378 = vadd.f32 %v636, %v1165
        %v1379 = vadd.f32 %v637, %v1214
        %v1380 = vadd.f32 %v638, %v1263
        %v1381 = vadd.f32 %v639, %v1312
        %v1382 = vadd.f32 %v640, %v1070
        %v1383 = vadd.f32 %v641, %v1119
        %v1384 = vadd.f32 %v642, %v1168
        %v1385 = vadd.f32 %v643, %v1217
        %v1386 = vadd.f32 %v644, %v1266
        %v1387 = vadd.f32 %v645, %v1315
        %v1388 = vadd.f32 %v646, %v1072
        %v1389 = vadd.f32 %v647, %v1121
        %v1390 = vadd.f32 %v648, %v1170
        %v1391 = vadd.f32 %v649, %v1219
        %v1392 = vadd.f32 %v650, %v1268
        %v1393 = vadd.f32 %v651, %v1317
        %v1394 = vadd.f32 %v652, %v1075
        %v1395 = vadd.f32 %v653, %v1124
        %v1396 = vadd.f32 %v654, %v1173
        %v1397 = vadd.f32 %v655, %v1222
        %v1398 = vadd.f32 %v656, %v1271
        %v1399 = vadd.f32 %v657, %v1320
        %v1400 = vadd.f32 %v658, %v1077
        %v1401 = vadd.f32 %v659, %v1126
        %v1402 = vadd.f32 %v660, %v1175
        %v1403 = vadd.f32 %v661, %v1224
        %v1404 = vadd.f32 %v662, %v1273
        %v1405 = vadd.f32 %v663, %v1322
        %v1406 = vadd.f32 %v664, %v1080
        %v1407 = vadd.f32 %v665, %v1129
        %v1408 = vadd.f32 %v666, %v1178
        %v1409 = vadd.f32 %v667, %v1227
        %v1410 = vadd.f32 %v668, %v1276
        %v1411 = vadd.f32 %v669, %v1325
        %v1412 = vadd.f32 %v670, %v1082
        %v1413 = vadd.f32 %v671, %v1131
        %v1414 = vadd.f32 %v672, %v1180
        %v1415 = vadd.f32 %v673, %v1229
        %v1416 = vadd.f32 %v674, %v1278
        %v1417 = vadd.f32 %v675, %v1327
        %v1418 = vadd.f32 %v676, %v1085
        %v1419 = vadd.f32 %v677, %v1134
        %v1420 = vadd.f32 %v678, %v1183
        %v1421 = vadd.f32 %v679, %v1232
        %v1422 = vadd.f32 %v680, %v1281
        %v1423 = vadd.f32 %v681, %v1330
        %v1424 = vadd.f32 %v682, %v1087
        %v1425 = vadd.f32 %v683, %v1136
        %v1426 = vadd.f32 %v684, %v1185
        %v1427 = vadd.f32 %v685, %v1234
        %v1428 = vadd.f32 %v686, %v1283
        %v1429 = vadd.f32 %v687, %v1332
        %1430 = vst [vmem:[#allocation2] sm:$0xff] %v1334
        %1431 = vst [vmem:[#allocation2 + $0x8] sm:$0xff] %v1335
        %1432 = vst [vmem:[#allocation2 + $0x10] sm:$0xff] %v1336
        %1433 = vst [vmem:[#allocation2 + $0x18] sm:$0xff] %v1337
        %1434 = vst [vmem:[#allocation2 + $0x20] sm:$0xff] %v1338
        %1435 = vst [vmem:[#allocation2 + $0x28] sm:$0xff] %v1339
        %1436 = vst [vmem:[#allocation2 + $0x30] sm:$0xff] %v1340
        %1437 = vst [vmem:[#allocation2 + $0x38] sm:$0xff] %v1341
        %1438 = vst [vmem:[#allocation2 + $0x40] sm:$0xff] %v1342
        %1439 = vst [vmem:[#allocation2 + $0x48] sm:$0xff] %v1343
        %1440 = vst [vmem:[#allocation2 + $0x50] sm:$0xff] %v1344
        %1441 = vst [vmem:[#allocation2 + $0x58] sm:$0xff] %v1345
        %1442 = vst [vmem:[#allocation2 + $0x60] sm:$0xff] %v1346
        %1443 = vst [vmem:[#allocation2 + $0x68] sm:$0xff] %v1347
        %1444 = vst [vmem:[#allocation2 + $0x70] sm:$0xff] %v1348
        %1445 = vst [vmem:[#allocation2 + $0x78] sm:$0xff] %v1349
        %1446 = vst [vmem:[#allocation2 + $0x80] sm:$0xff] %v1350
        %1447 = vst [vmem:[#allocation2 + $0x88] sm:$0xff] %v1351
        %1448 = vst [vmem:[#allocation2 + $0x90] sm:$0xff] %v1352
        %1449 = vst [vmem:[#allocation2 + $0x98] sm:$0xff] %v1353
        %1450 = vst [vmem:[#allocation2 + $0xa0] sm:$0xff] %v1354
        %1451 = vst [vmem:[#allocation2 + $0xa8] sm:$0xff] %v1355
        %1452 = vst [vmem:[#allocation2 + $0xb0] sm:$0xff] %v1356
        %1453 = vst [vmem:[#allocation2 + $0xb8] sm:$0xff] %v1357
        %1454 = vst [vmem:[#allocation2 + $0xc0] sm:$0xff] %v1358
        %1455 = vst [vmem:[#allocation2 + $0xc8] sm:$0xff] %v1359
        %1456 = vst [vmem:[#allocation2 + $0xd0] sm:$0xff] %v1360
        %1457 = vst [vmem:[#allocation2 + $0xd8] sm:$0xff] %v1361
        %1458 = vst [vmem:[#allocation2 + $0xe0] sm:$0xff] %v1362
        %1459 = vst [vmem:[#allocation2 + $0xe8] sm:$0xff] %v1363
        %1460 = vst [vmem:[#allocation2 + $0xf0] sm:$0xff] %v1364
        %1461 = vst [vmem:[#allocation2 + $0xf8] sm:$0xff] %v1365
        %1462 = vst [vmem:[#allocation2 + $0x100] sm:$0xff] %v1366
        %1463 = vst [vmem:[#allocation2 + $0x108] sm:$0xff] %v1367
        %1464 = vst [vmem:[#allocation2 + $0x110] sm:$0xff] %v1368
        %1465 = vst [vmem:[#allocation2 + $0x118] sm:$0xff] %v1369
        %1466 = vst [vmem:[#allocation2 + $0x120] sm:$0xff] %v1370
        %1467 = vst [vmem:[#allocation2 + $0x128] sm:$0xff] %v1371
        %1468 = vst [vmem:[#allocation2 + $0x130] sm:$0xff] %v1372
        %1469 = vst [vmem:[#allocation2 + $0x138] sm:$0xff] %v1373
        %1470 = vst [vmem:[#allocation2 + $0x140] sm:$0xff] %v1374
        %1471 = vst [vmem:[#allocation2 + $0x148] sm:$0xff] %v1375
        %1472 = vst [vmem:[#allocation2 + $0x150] sm:$0xff] %v1376
        %1473 = vst [vmem:[#allocation2 + $0x158] sm:$0xff] %v1377
        %1474 = vst [vmem:[#allocation2 + $0x160] sm:$0xff] %v1378
        %1475 = vst [vmem:[#allocation2 + $0x168] sm:$0xff] %v1379
        %1476 = vst [vmem:[#allocation2 + $0x170] sm:$0xff] %v1380
        %1477 = vst [vmem:[#allocation2 + $0x178] sm:$0xff] %v1381
        %1478 = vst [vmem:[#allocation2 + $0x180] sm:$0xff] %v1382
        %1479 = vst [vmem:[#allocation2 + $0x188] sm:$0xff] %v1383
        %1480 = vst [vmem:[#allocation2 + $0x190] sm:$0xff] %v1384
        %1481 = vst [vmem:[#allocation2 + $0x198] sm:$0xff] %v1385
        %1482 = vst [vmem:[#allocation2 + $0x1a0] sm:$0xff] %v1386
        %1483 = vst [vmem:[#allocation2 + $0x1a8] sm:$0xff] %v1387
        %1484 = vst [vmem:[#allocation2 + $0x1b0] sm:$0xff] %v1388
        %1485 = vst [vmem:[#allocation2 + $0x1b8] sm:$0xff] %v1389
        %1486 = vst [vmem:[#allocation2 + $0x1c0] sm:$0xff] %v1390
        %1487 = vst [vmem:[#allocation2 + $0x1c8] sm:$0xff] %v1391
        %1488 = vst [vmem:[#allocation2 + $0x1d0] sm:$0xff] %v1392
        %1489 = vst [vmem:[#allocation2 + $0x1d8] sm:$0xff] %v1393
        %1490 = vst [vmem:[#allocation2 + $0x1e0] sm:$0xff] %v1394
        %1491 = vst [vmem:[#allocation2 + $0x1e8] sm:$0xff] %v1395
        %1492 = vst [vmem:[#allocation2 + $0x1f0] sm:$0xff] %v1396
        %1493 = vst [vmem:[#allocation2 + $0x1f8] sm:$0xff] %v1397
        %1494 = vst [vmem:[#allocation2 + $0x200] sm:$0xff] %v1398
        %1495 = vst [vmem:[#allocation2 + $0x208] sm:$0xff] %v1399
        %1496 = vst [vmem:[#allocation2 + $0x210] sm:$0xff] %v1400
        %1497 = vst [vmem:[#allocation2 + $0x218] sm:$0xff] %v1401
        %1498 = vst [vmem:[#allocation2 + $0x220] sm:$0xff] %v1402
        %1499 = vst [vmem:[#allocation2 + $0x228] sm:$0xff] %v1403
        %1500 = vst [vmem:[#allocation2 + $0x230] sm:$0xff] %v1404
        %1501 = vst [vmem:[#allocation2 + $0x238] sm:$0xff] %v1405
        %1502 = vst [vmem:[#allocation2 + $0x240] sm:$0xff] %v1406
        %1503 = vst [vmem:[#allocation2 + $0x248] sm:$0xff] %v1407
        %1504 = vst [vmem:[#allocation2 + $0x250] sm:$0xff] %v1408
        %1505 = vst [vmem:[#allocation2 + $0x258] sm:$0xff] %v1409
        %1506 = vst [vmem:[#allocation2 + $0x260] sm:$0xff] %v1410
        %1507 = vst [vmem:[#allocation2 + $0x268] sm:$0xff] %v1411
        %1508 = vst [vmem:[#allocation2 + $0x270] sm:$0xff] %v1412
        %1509 = vst [vmem:[#allocation2 + $0x278] sm:$0xff] %v1413
        %1510 = vst [vmem:[#allocation2 + $0x280] sm:$0xff] %v1414
        %1511 = vst [vmem:[#allocation2 + $0x288] sm:$0xff] %v1415
        %1512 = vst [vmem:[#allocation2 + $0x290] sm:$0xff] %v1416
        %1513 = vst [vmem:[#allocation2 + $0x298] sm:$0xff] %v1417
        %1514 = vst [vmem:[#allocation2 + $0x2a0] sm:$0xff] %v1418
        %1515 = vst [vmem:[#allocation2 + $0x2a8] sm:$0xff] %v1419
        %1516 = vst [vmem:[#allocation2 + $0x2b0] sm:$0xff] %v1420
        %1517 = vst [vmem:[#allocation2 + $0x2b8] sm:$0xff] %v1421
        %1518 = vst [vmem:[#allocation2 + $0x2c0] sm:$0xff] %v1422
        %1519 = vst [vmem:[#allocation2 + $0x2c8] sm:$0xff] %v1423
        %1520 = vst [vmem:[#allocation2 + $0x2d0] sm:$0xff] %v1424
        %1521 = vst [vmem:[#allocation2 + $0x2d8] sm:$0xff] %v1425
        %1522 = vst [vmem:[#allocation2 + $0x2e0] sm:$0xff] %v1426
        %1523 = vst [vmem:[#allocation2 + $0x2e8] sm:$0xff] %v1427
        %1524 = vst [vmem:[#allocation2 + $0x2f0] sm:$0xff] %v1428
        %1525 = vst [vmem:[#allocation2 + $0x2f8] sm:$0xff] %v1429
        %p1526 = scmp.eq.s32.totalorder %s25, 3
        // Predicated region
        $region94: #{ngcf_forward.2} parent=84 // pred_check
          %p1527 = pneg %p1526
        $region95: #{ngcf_forward.2} parent=84 // pred_check_branch
          %1529 = sbr.rel (%p1527) target = $region97
        $region96: #{ngcf_forward.2} parent=84 // pred_region
          %v1530 = vld [vmem:[#allocation2] sm:$0xff]
          %v1531 = vld [vmem:[#allocation2 + $0x8] sm:$0xff]
          %v1532 = vld [vmem:[#allocation2 + $0x10] sm:$0xff]
          %v1533 = vld [vmem:[#allocation2 + $0x18] sm:$0xff]
          %v1534 = vld [vmem:[#allocation2 + $0x20] sm:$0xff]
          %v1535 = vld [vmem:[#allocation2 + $0x28] sm:$0xff]
          %v1536 = vld [vmem:[#allocation2 + $0x30] sm:$0xff]
          %v1537 = vld [vmem:[#allocation2 + $0x38] sm:$0xff]
          %v1538 = vld [vmem:[#allocation2 + $0x40] sm:$0xff]
          %v1539 = vld [vmem:[#allocation2 + $0x48] sm:$0xff]
          %v1540 = vld [vmem:[#allocation2 + $0x50] sm:$0xff]
          %v1541 = vld [vmem:[#allocation2 + $0x58] sm:$0xff]
          %v1542 = vld [vmem:[#allocation2 + $0x60] sm:$0xff]
          %v1543 = vld [vmem:[#allocation2 + $0x68] sm:$0xff]
          %v1544 = vld [vmem:[#allocation2 + $0x70] sm:$0xff]
          %v1545 = vld [vmem:[#allocation2 + $0x78] sm:$0xff]
          %v1546 = vld [vmem:[#allocation2 + $0x80] sm:$0xff]
          %v1547 = vld [vmem:[#allocation2 + $0x88] sm:$0xff]
          %v1548 = vld [vmem:[#allocation2 + $0x90] sm:$0xff]
          %v1549 = vld [vmem:[#allocation2 + $0x98] sm:$0xff]
          %v1550 = vld [vmem:[#allocation2 + $0xa0] sm:$0xff]
          %v1551 = vld [vmem:[#allocation2 + $0xa8] sm:$0xff]
          %v1552 = vld [vmem:[#allocation2 + $0xb0] sm:$0xff]
          %v1553 = vld [vmem:[#allocation2 + $0xb8] sm:$0xff]
          %v1554 = vld [vmem:[#allocation2 + $0xc0] sm:$0xff]
          %v1555 = vld [vmem:[#allocation2 + $0xc8] sm:$0xff]
          %v1556 = vld [vmem:[#allocation2 + $0xd0] sm:$0xff]
          %v1557 = vld [vmem:[#allocation2 + $0xd8] sm:$0xff]
          %v1558 = vld [vmem:[#allocation2 + $0xe0] sm:$0xff]
          %v1559 = vld [vmem:[#allocation2 + $0xe8] sm:$0xff]
          %v1560 = vld [vmem:[#allocation2 + $0xf0] sm:$0xff]
          %v1561 = vld [vmem:[#allocation2 + $0xf8] sm:$0xff]
          %v1562 = vld [vmem:[#allocation2 + $0x100] sm:$0xff]
          %v1563 = vld [vmem:[#allocation2 + $0x108] sm:$0xff]
          %v1564 = vld [vmem:[#allocation2 + $0x110] sm:$0xff]
          %v1565 = vld [vmem:[#allocation2 + $0x118] sm:$0xff]
          %v1566 = vld [vmem:[#allocation2 + $0x120] sm:$0xff]
          %v1567 = vld [vmem:[#allocation2 + $0x128] sm:$0xff]
          %v1568 = vld [vmem:[#allocation2 + $0x130] sm:$0xff]
          %v1569 = vld [vmem:[#allocation2 + $0x138] sm:$0xff]
          %v1570 = vld [vmem:[#allocation2 + $0x140] sm:$0xff]
          %v1571 = vld [vmem:[#allocation2 + $0x148] sm:$0xff]
          %v1572 = vld [vmem:[#allocation2 + $0x150] sm:$0xff]
          %v1573 = vld [vmem:[#allocation2 + $0x158] sm:$0xff]
          %v1574 = vld [vmem:[#allocation2 + $0x160] sm:$0xff]
          %v1575 = vld [vmem:[#allocation2 + $0x168] sm:$0xff]
          %v1576 = vld [vmem:[#allocation2 + $0x170] sm:$0xff]
          %v1577 = vld [vmem:[#allocation2 + $0x178] sm:$0xff]
          %v1578 = vld [vmem:[#allocation2 + $0x180] sm:$0xff]
          %v1579 = vld [vmem:[#allocation2 + $0x188] sm:$0xff]
          %v1580 = vld [vmem:[#allocation2 + $0x190] sm:$0xff]
          %v1581 = vld [vmem:[#allocation2 + $0x198] sm:$0xff]
          %v1582 = vld [vmem:[#allocation2 + $0x1a0] sm:$0xff]
          %v1583 = vld [vmem:[#allocation2 + $0x1a8] sm:$0xff]
          %v1584 = vld [vmem:[#allocation2 + $0x1b0] sm:$0xff]
          %v1585 = vld [vmem:[#allocation2 + $0x1b8] sm:$0xff]
          %v1586 = vld [vmem:[#allocation2 + $0x1c0] sm:$0xff]
          %v1587 = vld [vmem:[#allocation2 + $0x1c8] sm:$0xff]
          %v1588 = vld [vmem:[#allocation2 + $0x1d0] sm:$0xff]
          %v1589 = vld [vmem:[#allocation2 + $0x1d8] sm:$0xff]
          %v1590 = vld [vmem:[#allocation2 + $0x1e0] sm:$0xff]
          %v1591 = vld [vmem:[#allocation2 + $0x1e8] sm:$0xff]
          %v1592 = vld [vmem:[#allocation2 + $0x1f0] sm:$0xff]
          %v1593 = vld [vmem:[#allocation2 + $0x1f8] sm:$0xff]
          %v1594 = vld [vmem:[#allocation2 + $0x200] sm:$0xff]
          %v1595 = vld [vmem:[#allocation2 + $0x208] sm:$0xff]
          %v1596 = vld [vmem:[#allocation2 + $0x210] sm:$0xff]
          %v1597 = vld [vmem:[#allocation2 + $0x218] sm:$0xff]
          %v1598 = vld [vmem:[#allocation2 + $0x220] sm:$0xff]
          %v1599 = vld [vmem:[#allocation2 + $0x228] sm:$0xff]
          %v1600 = vld [vmem:[#allocation2 + $0x230] sm:$0xff]
          %v1601 = vld [vmem:[#allocation2 + $0x238] sm:$0xff]
          %v1602 = vld [vmem:[#allocation2 + $0x240] sm:$0xff]
          %v1603 = vld [vmem:[#allocation2 + $0x248] sm:$0xff]
          %v1604 = vld [vmem:[#allocation2 + $0x250] sm:$0xff]
          %v1605 = vld [vmem:[#allocation2 + $0x258] sm:$0xff]
          %v1606 = vld [vmem:[#allocation2 + $0x260] sm:$0xff]
          %v1607 = vld [vmem:[#allocation2 + $0x268] sm:$0xff]
          %v1608 = vld [vmem:[#allocation2 + $0x270] sm:$0xff]
          %v1609 = vld [vmem:[#allocation2 + $0x278] sm:$0xff]
          %v1610 = vld [vmem:[#allocation2 + $0x280] sm:$0xff]
          %v1611 = vld [vmem:[#allocation2 + $0x288] sm:$0xff]
          %v1612 = vld [vmem:[#allocation2 + $0x290] sm:$0xff]
          %v1613 = vld [vmem:[#allocation2 + $0x298] sm:$0xff]
          %v1614 = vld [vmem:[#allocation2 + $0x2a0] sm:$0xff]
          %v1615 = vld [vmem:[#allocation2 + $0x2a8] sm:$0xff]
          %v1616 = vld [vmem:[#allocation2 + $0x2b0] sm:$0xff]
          %v1617 = vld [vmem:[#allocation2 + $0x2b8] sm:$0xff]
          %v1618 = vld [vmem:[#allocation2 + $0x2c0] sm:$0xff]
          %v1619 = vld [vmem:[#allocation2 + $0x2c8] sm:$0xff]
          %v1620 = vld [vmem:[#allocation2 + $0x2d0] sm:$0xff]
          %v1621 = vld [vmem:[#allocation2 + $0x2d8] sm:$0xff]
          %v1622 = vld [vmem:[#allocation2 + $0x2e0] sm:$0xff]
          %v1623 = vld [vmem:[#allocation2 + $0x2e8] sm:$0xff]
          %v1624 = vld [vmem:[#allocation2 + $0x2f0] sm:$0xff]
          %v1625 = vld [vmem:[#allocation2 + $0x2f8] sm:$0xff]
          %v1626 = vld [vmem:[%s478] sm:$0xff]
          %v1627 = vld [vmem:[%s478 + $0x8] sm:$0xff]
          %v1628 = vld [vmem:[%s478 + $0x10] sm:$0xff]
          %v1629 = vld [vmem:[%s478 + $0x18] sm:$0xff]
          %v1630 = vld [vmem:[%s478 + $0x20] sm:$0xff]
          %v1631 = vld [vmem:[%s478 + $0x28] sm:$0xff]
          %v1632 = vld [vmem:[%s478 + $0x30] sm:$0xff]
          %v1633 = vld [vmem:[%s478 + $0x38] sm:$0xff]
          %v1634 = vld [vmem:[%s478 + $0x40] sm:$0xff]
          %v1635 = vld [vmem:[%s478 + $0x48] sm:$0xff]
          %v1636 = vld [vmem:[%s478 + $0x50] sm:$0xff]
          %v1637 = vld [vmem:[%s478 + $0x58] sm:$0xff]
          %v1638 = vld [vmem:[%s478 + $0x60] sm:$0xff]
          %v1639 = vld [vmem:[%s478 + $0x68] sm:$0xff]
          %v1640 = vld [vmem:[%s478 + $0x70] sm:$0xff]
          %v1641 = vld [vmem:[%s478 + $0x78] sm:$0xff]
          %v1642 = vld [vmem:[%s478 + $0x80] sm:$0xff]
          %v1643 = vld [vmem:[%s478 + $0x88] sm:$0xff]
          %v1644 = vld [vmem:[%s478 + $0x90] sm:$0xff]
          %v1645 = vld [vmem:[%s478 + $0x98] sm:$0xff]
          %v1646 = vld [vmem:[%s478 + $0xa0] sm:$0xff]
          %v1647 = vld [vmem:[%s478 + $0xa8] sm:$0xff]
          %v1648 = vld [vmem:[%s478 + $0xb0] sm:$0xff]
          %v1649 = vld [vmem:[%s478 + $0xb8] sm:$0xff]
          %v1650 = vld [vmem:[%s478 + $0xc0] sm:$0xff]
          %v1651 = vld [vmem:[%s478 + $0xc8] sm:$0xff]
          %v1652 = vld [vmem:[%s478 + $0xd0] sm:$0xff]
          %v1653 = vld [vmem:[%s478 + $0xd8] sm:$0xff]
          %v1654 = vld [vmem:[%s478 + $0xe0] sm:$0xff]
          %v1655 = vld [vmem:[%s478 + $0xe8] sm:$0xff]
          %v1656 = vld [vmem:[%s478 + $0xf0] sm:$0xff]
          %v1657 = vld [vmem:[%s478 + $0xf8] sm:$0xff]
          %v1658 = vld [vmem:[%s478 + $0x100] sm:$0xff]
          %v1659 = vld [vmem:[%s478 + $0x108] sm:$0xff]
          %v1660 = vld [vmem:[%s478 + $0x110] sm:$0xff]
          %v1661 = vld [vmem:[%s478 + $0x118] sm:$0xff]
          %v1662 = vld [vmem:[%s478 + $0x120] sm:$0xff]
          %v1663 = vld [vmem:[%s478 + $0x128] sm:$0xff]
          %v1664 = vld [vmem:[%s478 + $0x130] sm:$0xff]
          %v1665 = vld [vmem:[%s478 + $0x138] sm:$0xff]
          %v1666 = vld [vmem:[%s478 + $0x140] sm:$0xff]
          %v1667 = vld [vmem:[%s478 + $0x148] sm:$0xff]
          %v1668 = vld [vmem:[%s478 + $0x150] sm:$0xff]
          %v1669 = vld [vmem:[%s478 + $0x158] sm:$0xff]
          %v1670 = vld [vmem:[%s478 + $0x160] sm:$0xff]
          %v1671 = vld [vmem:[%s478 + $0x168] sm:$0xff]
          %v1672 = vld [vmem:[%s478 + $0x170] sm:$0xff]
          %v1673 = vld [vmem:[%s478 + $0x178] sm:$0xff]
          %v1674 = vld [vmem:[%s478 + $0x180] sm:$0xff]
          %v1675 = vld [vmem:[%s478 + $0x188] sm:$0xff]
          %v1676 = vld [vmem:[%s478 + $0x190] sm:$0xff]
          %v1677 = vld [vmem:[%s478 + $0x198] sm:$0xff]
          %v1678 = vld [vmem:[%s478 + $0x1a0] sm:$0xff]
          %v1679 = vld [vmem:[%s478 + $0x1a8] sm:$0xff]
          %v1680 = vld [vmem:[%s478 + $0x1b0] sm:$0xff]
          %v1681 = vld [vmem:[%s478 + $0x1b8] sm:$0xff]
          %v1682 = vld [vmem:[%s478 + $0x1c0] sm:$0xff]
          %v1683 = vld [vmem:[%s478 + $0x1c8] sm:$0xff]
          %v1684 = vld [vmem:[%s478 + $0x1d0] sm:$0xff]
          %v1685 = vld [vmem:[%s478 + $0x1d8] sm:$0xff]
          %v1686 = vld [vmem:[%s478 + $0x1e0] sm:$0xff]
          %v1687 = vld [vmem:[%s478 + $0x1e8] sm:$0xff]
          %v1688 = vld [vmem:[%s478 + $0x1f0] sm:$0xff]
          %v1689 = vld [vmem:[%s478 + $0x1f8] sm:$0xff]
          %v1690 = vld [vmem:[%s478 + $0x200] sm:$0xff]
          %v1691 = vld [vmem:[%s478 + $0x208] sm:$0xff]
          %v1692 = vld [vmem:[%s478 + $0x210] sm:$0xff]
          %v1693 = vld [vmem:[%s478 + $0x218] sm:$0xff]
          %v1694 = vld [vmem:[%s478 + $0x220] sm:$0xff]
          %v1695 = vld [vmem:[%s478 + $0x228] sm:$0xff]
          %v1696 = vld [vmem:[%s478 + $0x230] sm:$0xff]
          %v1697 = vld [vmem:[%s478 + $0x238] sm:$0xff]
          %v1698 = vld [vmem:[%s478 + $0x240] sm:$0xff]
          %v1699 = vld [vmem:[%s478 + $0x248] sm:$0xff]
          %v1700 = vld [vmem:[%s478 + $0x250] sm:$0xff]
          %v1701 = vld [vmem:[%s478 + $0x258] sm:$0xff]
          %v1702 = vld [vmem:[%s478 + $0x260] sm:$0xff]
          %v1703 = vld [vmem:[%s478 + $0x268] sm:$0xff]
          %v1704 = vld [vmem:[%s478 + $0x270] sm:$0xff]
          %v1705 = vld [vmem:[%s478 + $0x278] sm:$0xff]
          %v1706 = vld [vmem:[%s478 + $0x280] sm:$0xff]
          %v1707 = vld [vmem:[%s478 + $0x288] sm:$0xff]
          %v1708 = vld [vmem:[%s478 + $0x290] sm:$0xff]
          %v1709 = vld [vmem:[%s478 + $0x298] sm:$0xff]
          %v1710 = vld [vmem:[%s478 + $0x2a0] sm:$0xff]
          %v1711 = vld [vmem:[%s478 + $0x2a8] sm:$0xff]
          %v1712 = vld [vmem:[%s478 + $0x2b0] sm:$0xff]
          %v1713 = vld [vmem:[%s478 + $0x2b8] sm:$0xff]
          %v1714 = vld [vmem:[%s478 + $0x2c0] sm:$0xff]
          %v1715 = vld [vmem:[%s478 + $0x2c8] sm:$0xff]
          %v1716 = vld [vmem:[%s478 + $0x2d0] sm:$0xff]
          %v1717 = vld [vmem:[%s478 + $0x2d8] sm:$0xff]
          %v1718 = vld [vmem:[%s478 + $0x2e0] sm:$0xff]
          %v1719 = vld [vmem:[%s478 + $0x2e8] sm:$0xff]
          %v1720 = vld [vmem:[%s478 + $0x2f0] sm:$0xff]
          %v1721 = vld [vmem:[%s478 + $0x2f8] sm:$0xff]
          %v1722 = vpack.c.bf16 %v1536, %v1530
          %v1723 = vpack.c.bf16 %v1537, %v1531
          %v1724 = vpack.c.bf16 %v1538, %v1532
          %v1725 = vpack.c.bf16 %v1539, %v1533
          %v1726 = vpack.c.bf16 %v1540, %v1534
          %v1727 = vpack.c.bf16 %v1541, %v1535
          %v1728 = vpack.c.bf16 %v1548, %v1542
          %v1729 = vpack.c.bf16 %v1549, %v1543
          %v1730 = vpack.c.bf16 %v1550, %v1544
          %v1731 = vpack.c.bf16 %v1551, %v1545
          %v1732 = vpack.c.bf16 %v1552, %v1546
          %v1733 = vpack.c.bf16 %v1553, %v1547
          %v1734 = vpack.c.bf16 %v1560, %v1554
          %v1735 = vpack.c.bf16 %v1561, %v1555
          %v1736 = vpack.c.bf16 %v1562, %v1556
          %v1737 = vpack.c.bf16 %v1563, %v1557
          %v1738 = vpack.c.bf16 %v1564, %v1558
          %v1739 = vpack.c.bf16 %v1565, %v1559
          %v1740 = vpack.c.bf16 %v1572, %v1566
          %v1741 = vpack.c.bf16 %v1573, %v1567
          %v1742 = vpack.c.bf16 %v1574, %v1568
          %v1743 = vpack.c.bf16 %v1575, %v1569
          %v1744 = vpack.c.bf16 %v1576, %v1570
          %v1745 = vpack.c.bf16 %v1577, %v1571
          %v1746 = vpack.c.bf16 %v1584, %v1578
          %v1747 = vpack.c.bf16 %v1585, %v1579
          %v1748 = vpack.c.bf16 %v1586, %v1580
          %v1749 = vpack.c.bf16 %v1587, %v1581
          %v1750 = vpack.c.bf16 %v1588, %v1582
          %v1751 = vpack.c.bf16 %v1589, %v1583
          %v1752 = vpack.c.bf16 %v1596, %v1590
          %v1753 = vpack.c.bf16 %v1597, %v1591
          %v1754 = vpack.c.bf16 %v1598, %v1592
          %v1755 = vpack.c.bf16 %v1599, %v1593
          %v1756 = vpack.c.bf16 %v1600, %v1594
          %v1757 = vpack.c.bf16 %v1601, %v1595
          %v1758 = vpack.c.bf16 %v1608, %v1602
          %v1759 = vpack.c.bf16 %v1609, %v1603
          %v1760 = vpack.c.bf16 %v1610, %v1604
          %v1761 = vpack.c.bf16 %v1611, %v1605
          %v1762 = vpack.c.bf16 %v1612, %v1606
          %v1763 = vpack.c.bf16 %v1613, %v1607
          %v1764 = vpack.c.bf16 %v1620, %v1614
          %v1765 = vpack.c.bf16 %v1621, %v1615
          %v1766 = vpack.c.bf16 %v1622, %v1616
          %v1767 = vpack.c.bf16 %v1623, %v1617
          %v1768 = vpack.c.bf16 %v1624, %v1618
          %v1769 = vpack.c.bf16 %v1625, %v1619
          %v1770 = vld [vmem:[%s3] sm:$0xf]
          %v1771 = vld [vmem:[%s3 + $0x4] sm:$0xf]
          %v1772 = vld [vmem:[%s3 + $0x8] sm:$0xf]
          %v1773 = vld [vmem:[%s3 + $0xc] sm:$0xf]
          %v1774 = vld [vmem:[%s3 + $0x10] sm:$0xf]
          %v1775 = vld [vmem:[%s3 + $0x14] sm:$0xf]
          %v1776 = vld [vmem:[%s3 + $0x18] sm:$0xf]
          %v1777 = vld [vmem:[%s3 + $0x1c] sm:$0xf]
          %v1778 = vld [vmem:[%s3 + $0x20] sm:$0xf]
          %v1779 = vld [vmem:[%s3 + $0x24] sm:$0xf]
          %v1780 = vld [vmem:[%s3 + $0x28] sm:$0xf]
          %v1781 = vld [vmem:[%s3 + $0x2c] sm:$0xf]
          %v1782 = vld [vmem:[%s3 + $0x30] sm:$0xf]
          %v1783 = vld [vmem:[%s3 + $0x34] sm:$0xf]
          %v1784 = vld [vmem:[%s3 + $0x38] sm:$0xf]
          %v1785 = vld [vmem:[%s3 + $0x3c] sm:$0xf]
          %v1786 = vld [vmem:[%s3 + $0x40] sm:$0xf]
          %v1787 = vld [vmem:[%s3 + $0x44] sm:$0xf]
          %v1788 = vld [vmem:[%s3 + $0x48] sm:$0xf]
          %v1789 = vld [vmem:[%s3 + $0x4c] sm:$0xf]
          %v1790 = vld [vmem:[%s3 + $0x50] sm:$0xf]
          %v1791 = vld [vmem:[%s3 + $0x54] sm:$0xf]
          %v1792 = vld [vmem:[%s3 + $0x58] sm:$0xf]
          %v1793 = vld [vmem:[%s3 + $0x5c] sm:$0xf]
          %v1794 = vld [vmem:[%s3 + $0x60] sm:$0xf]
          %v1795 = vld [vmem:[%s3 + $0x64] sm:$0xf]
          %v1796 = vld [vmem:[%s3 + $0x68] sm:$0xf]
          %v1797 = vld [vmem:[%s3 + $0x6c] sm:$0xf]
          %v1798 = vld [vmem:[%s3 + $0x70] sm:$0xf]
          %v1799 = vld [vmem:[%s3 + $0x74] sm:$0xf]
          %v1800 = vld [vmem:[%s3 + $0x78] sm:$0xf]
          %v1801 = vld [vmem:[%s3 + $0x7c] sm:$0xf]
          %v1802 = vld [vmem:[%s3 + $0x80] sm:$0xf]
          %v1803 = vld [vmem:[%s3 + $0x84] sm:$0xf]
          %v1804 = vld [vmem:[%s3 + $0x88] sm:$0xf]
          %v1805 = vld [vmem:[%s3 + $0x8c] sm:$0xf]
          %v1806 = vld [vmem:[%s3 + $0x90] sm:$0xf]
          %v1807 = vld [vmem:[%s3 + $0x94] sm:$0xf]
          %v1808 = vld [vmem:[%s3 + $0x98] sm:$0xf]
          %v1809 = vld [vmem:[%s3 + $0x9c] sm:$0xf]
          %v1810 = vld [vmem:[%s3 + $0xa0] sm:$0xf]
          %v1811 = vld [vmem:[%s3 + $0xa4] sm:$0xf]
          %v1812 = vld [vmem:[%s3 + $0xa8] sm:$0xf]
          %v1813 = vld [vmem:[%s3 + $0xac] sm:$0xf]
          %v1814 = vld [vmem:[%s3 + $0xb0] sm:$0xf]
          %v1815 = vld [vmem:[%s3 + $0xb4] sm:$0xf]
          %v1816 = vld [vmem:[%s3 + $0xb8] sm:$0xf]
          %v1817 = vld [vmem:[%s3 + $0xbc] sm:$0xf]
          %v1818 = vld [vmem:[%s3 + $0xc0] sm:$0xf]
          %v1819 = vld [vmem:[%s3 + $0xc4] sm:$0xf]
          %v1820 = vld [vmem:[%s3 + $0xc8] sm:$0xf]
          %v1821 = vld [vmem:[%s3 + $0xcc] sm:$0xf]
          %v1822 = vld [vmem:[%s3 + $0xd0] sm:$0xf]
          %v1823 = vld [vmem:[%s3 + $0xd4] sm:$0xf]
          %v1824 = vld [vmem:[%s3 + $0xd8] sm:$0xf]
          %v1825 = vld [vmem:[%s3 + $0xdc] sm:$0xf]
          %v1826 = vld [vmem:[%s3 + $0xe0] sm:$0xf]
          %v1827 = vld [vmem:[%s3 + $0xe4] sm:$0xf]
          %v1828 = vld [vmem:[%s3 + $0xe8] sm:$0xf]
          %v1829 = vld [vmem:[%s3 + $0xec] sm:$0xf]
          %v1830 = vld [vmem:[%s3 + $0xf0] sm:$0xf]
          %v1831 = vld [vmem:[%s3 + $0xf4] sm:$0xf]
          %v1832 = vld [vmem:[%s3 + $0xf8] sm:$0xf]
          %v1833 = vld [vmem:[%s3 + $0xfc] sm:$0xf]
          %v1834 = vld [vmem:[%s3 + $0x100] sm:$0xf]
          %v1835 = vld [vmem:[%s3 + $0x104] sm:$0xf]
          %v1836 = vld [vmem:[%s3 + $0x108] sm:$0xf]
          %v1837 = vld [vmem:[%s3 + $0x10c] sm:$0xf]
          %v1838 = vld [vmem:[%s3 + $0x110] sm:$0xf]
          %v1839 = vld [vmem:[%s3 + $0x114] sm:$0xf]
          %v1840 = vld [vmem:[%s3 + $0x118] sm:$0xf]
          %v1841 = vld [vmem:[%s3 + $0x11c] sm:$0xf]
          %v1842 = vld [vmem:[%s3 + $0x120] sm:$0xf]
          %v1843 = vld [vmem:[%s3 + $0x124] sm:$0xf]
          %v1844 = vld [vmem:[%s3 + $0x128] sm:$0xf]
          %v1845 = vld [vmem:[%s3 + $0x12c] sm:$0xf]
          %v1846 = vld [vmem:[%s3 + $0x130] sm:$0xf]
          %v1847 = vld [vmem:[%s3 + $0x134] sm:$0xf]
          %v1848 = vld [vmem:[%s3 + $0x138] sm:$0xf]
          %v1849 = vld [vmem:[%s3 + $0x13c] sm:$0xf]
          %v1850 = vld [vmem:[%s3 + $0x140] sm:$0xf]
          %v1851 = vld [vmem:[%s3 + $0x144] sm:$0xf]
          %v1852 = vld [vmem:[%s3 + $0x148] sm:$0xf]
          %v1853 = vld [vmem:[%s3 + $0x14c] sm:$0xf]
          %v1854 = vld [vmem:[%s3 + $0x150] sm:$0xf]
          %v1855 = vld [vmem:[%s3 + $0x154] sm:$0xf]
          %v1856 = vld [vmem:[%s3 + $0x158] sm:$0xf]
          %v1857 = vld [vmem:[%s3 + $0x15c] sm:$0xf]
          %v1858 = vld [vmem:[%s3 + $0x160] sm:$0xf]
          %v1859 = vld [vmem:[%s3 + $0x164] sm:$0xf]
          %v1860 = vld [vmem:[%s3 + $0x168] sm:$0xf]
          %v1861 = vld [vmem:[%s3 + $0x16c] sm:$0xf]
          %v1862 = vld [vmem:[%s3 + $0x170] sm:$0xf]
          %v1863 = vld [vmem:[%s3 + $0x174] sm:$0xf]
          %v1864 = vld [vmem:[%s3 + $0x178] sm:$0xf]
          %v1865 = vld [vmem:[%s3 + $0x17c] sm:$0xf]
          %v1866 = vld [vmem:[%s4] sm:$0x1]
          %v1868 = vperm.slane %v1866, 0
          %v1966 = vunpack.c.l.b16 %v1770
          %v1967 = vunpack.c.l.b16 %v1771
          %v1968 = vunpack.c.l.b16 %v1772
          %v1969 = vunpack.c.l.b16 %v1773
          %v1970 = vunpack.c.l.b16 %v1774
          %v1971 = vunpack.c.l.b16 %v1775
          %v1972 = vunpack.c.l.b16 %v1776
          %v1973 = vunpack.c.l.b16 %v1777
          %v1974 = vunpack.c.l.b16 %v1778
          %v1975 = vunpack.c.l.b16 %v1779
          %v1976 = vunpack.c.l.b16 %v1780
          %v1977 = vunpack.c.l.b16 %v1781
          %v1978 = vunpack.c.l.b16 %v1782
          %v1979 = vunpack.c.l.b16 %v1783
          %v1980 = vunpack.c.l.b16 %v1784
          %v1981 = vunpack.c.l.b16 %v1785
          %v1982 = vunpack.c.l.b16 %v1786
          %v1983 = vunpack.c.l.b16 %v1787
          %v1984 = vunpack.c.l.b16 %v1788
          %v1985 = vunpack.c.l.b16 %v1789
          %v1986 = vunpack.c.l.b16 %v1790
          %v1987 = vunpack.c.l.b16 %v1791
          %v1988 = vunpack.c.l.b16 %v1792
          %v1989 = vunpack.c.l.b16 %v1793
          %v1990 = vunpack.c.l.b16 %v1794
          %v1991 = vunpack.c.l.b16 %v1795
          %v1992 = vunpack.c.l.b16 %v1796
          %v1993 = vunpack.c.l.b16 %v1797
          %v1994 = vunpack.c.l.b16 %v1798
          %v1995 = vunpack.c.l.b16 %v1799
          %v1996 = vunpack.c.l.b16 %v1800
          %v1997 = vunpack.c.l.b16 %v1801
          %v1998 = vunpack.c.l.b16 %v1802
          %v1999 = vunpack.c.l.b16 %v1803
          %v2000 = vunpack.c.l.b16 %v1804
          %v2001 = vunpack.c.l.b16 %v1805
          %v2002 = vunpack.c.l.b16 %v1806
          %v2003 = vunpack.c.l.b16 %v1807
          %v2004 = vunpack.c.l.b16 %v1808
          %v2005 = vunpack.c.l.b16 %v1809
          %v2006 = vunpack.c.l.b16 %v1810
          %v2007 = vunpack.c.l.b16 %v1811
          %v2008 = vunpack.c.l.b16 %v1812
          %v2009 = vunpack.c.l.b16 %v1813
          %v2010 = vunpack.c.l.b16 %v1814
          %v2011 = vunpack.c.l.b16 %v1815
          %v2012 = vunpack.c.l.b16 %v1816
          %v2013 = vunpack.c.l.b16 %v1817
          %v2014 = vunpack.c.l.b16 %v1818
          %v2015 = vunpack.c.l.b16 %v1819
          %v2016 = vunpack.c.l.b16 %v1820
          %v2017 = vunpack.c.l.b16 %v1821
          %v2018 = vunpack.c.l.b16 %v1822
          %v2019 = vunpack.c.l.b16 %v1823
          %v2020 = vunpack.c.l.b16 %v1824
          %v2021 = vunpack.c.l.b16 %v1825
          %v2022 = vunpack.c.l.b16 %v1826
          %v2023 = vunpack.c.l.b16 %v1827
          %v2024 = vunpack.c.l.b16 %v1828
          %v2025 = vunpack.c.l.b16 %v1829
          %v2026 = vunpack.c.l.b16 %v1830
          %v2027 = vunpack.c.l.b16 %v1831
          %v2028 = vunpack.c.l.b16 %v1832
          %v2029 = vunpack.c.l.b16 %v1833
          %v2030 = vunpack.c.l.b16 %v1834
          %v2031 = vunpack.c.l.b16 %v1835
          %v2032 = vunpack.c.l.b16 %v1836
          %v2033 = vunpack.c.l.b16 %v1837
          %v2034 = vunpack.c.l.b16 %v1838
          %v2035 = vunpack.c.l.b16 %v1839
          %v2036 = vunpack.c.l.b16 %v1840
          %v2037 = vunpack.c.l.b16 %v1841
          %v2038 = vunpack.c.l.b16 %v1842
          %v2039 = vunpack.c.l.b16 %v1843
          %v2040 = vunpack.c.l.b16 %v1844
          %v2041 = vunpack.c.l.b16 %v1845
          %v2042 = vunpack.c.l.b16 %v1846
          %v2043 = vunpack.c.l.b16 %v1847
          %v2044 = vunpack.c.l.b16 %v1848
          %v2045 = vunpack.c.l.b16 %v1849
          %v2046 = vunpack.c.l.b16 %v1850
          %v2047 = vunpack.c.l.b16 %v1851
          %v2048 = vunpack.c.l.b16 %v1852
          %v2049 = vunpack.c.l.b16 %v1853
          %v2050 = vunpack.c.l.b16 %v1854
          %v2051 = vunpack.c.l.b16 %v1855
          %v2052 = vunpack.c.l.b16 %v1856
          %v2053 = vunpack.c.l.b16 %v1857
          %v2054 = vunpack.c.l.b16 %v1858
          %v2055 = vunpack.c.l.b16 %v1859
          %v2056 = vunpack.c.l.b16 %v1860
          %v2057 = vunpack.c.l.b16 %v1861
          %v2058 = vunpack.c.l.b16 %v1862
          %v2059 = vunpack.c.l.b16 %v1863
          %v2060 = vunpack.c.l.b16 %v1864
          %v2061 = vunpack.c.l.b16 %v1865
          %v2062 = vpack.c.b16 %v1967, %v1966
          %v2063 = vpack.c.b16 %v1969, %v1968
          %v2064 = vpack.c.b16 %v1971, %v1970
          %v2065 = vpack.c.b16 %v1973, %v1972
          %v2066 = vpack.c.b16 %v1975, %v1974
          %v2067 = vpack.c.b16 %v1977, %v1976
          %v2068 = vpack.c.b16 %v1979, %v1978
          %v2069 = vpack.c.b16 %v1981, %v1980
          %v2070 = vpack.c.b16 %v1983, %v1982
          %v2071 = vpack.c.b16 %v1985, %v1984
          %v2072 = vpack.c.b16 %v1987, %v1986
          %v2073 = vpack.c.b16 %v1989, %v1988
          %v2074 = vpack.c.b16 %v1991, %v1990
          %v2075 = vpack.c.b16 %v1993, %v1992
          %v2076 = vpack.c.b16 %v1995, %v1994
          %v2077 = vpack.c.b16 %v1997, %v1996
          %v2078 = vpack.c.b16 %v1999, %v1998
          %v2079 = vpack.c.b16 %v2001, %v2000
          %v2080 = vpack.c.b16 %v2003, %v2002
          %v2081 = vpack.c.b16 %v2005, %v2004
          %v2082 = vpack.c.b16 %v2007, %v2006
          %v2083 = vpack.c.b16 %v2009, %v2008
          %v2084 = vpack.c.b16 %v2011, %v2010
          %v2085 = vpack.c.b16 %v2013, %v2012
          %v2086 = vpack.c.b16 %v2015, %v2014
          %v2087 = vpack.c.b16 %v2017, %v2016
          %v2088 = vpack.c.b16 %v2019, %v2018
          %v2089 = vpack.c.b16 %v2021, %v2020
          %v2090 = vpack.c.b16 %v2023, %v2022
          %v2091 = vpack.c.b16 %v2025, %v2024
          %v2092 = vpack.c.b16 %v2027, %v2026
          %v2093 = vpack.c.b16 %v2029, %v2028
          %v2094 = vpack.c.b16 %v2031, %v2030
          %v2095 = vpack.c.b16 %v2033, %v2032
          %v2096 = vpack.c.b16 %v2035, %v2034
          %v2097 = vpack.c.b16 %v2037, %v2036
          %v2098 = vpack.c.b16 %v2039, %v2038
          %v2099 = vpack.c.b16 %v2041, %v2040
          %v2100 = vpack.c.b16 %v2043, %v2042
          %v2101 = vpack.c.b16 %v2045, %v2044
          %v2102 = vpack.c.b16 %v2047, %v2046
          %v2103 = vpack.c.b16 %v2049, %v2048
          %v2104 = vpack.c.b16 %v2051, %v2050
          %v2105 = vpack.c.b16 %v2053, %v2052
          %v2106 = vpack.c.b16 %v2055, %v2054
          %v2107 = vpack.c.b16 %v2057, %v2056
          %v2108 = vpack.c.b16 %v2059, %v2058
          %v2109 = vpack.c.b16 %v2061, %v2060
          %2158 = vmatpush.bf16.msra.mxu0 %v2069
          %2159 = vmatpush.bf16.msra.mxu0 %v2068
          %2160 = vmatpush.bf16.msra.mxu0 %v2067
          %2161 = vmatpush.bf16.msra.mxu0 %v2066
          %2162 = vmatpush.bf16.msra.mxu0 %v2065
          %2163 = vmatpush.bf16.msra.mxu0 %v2064
          %2164 = vmatpush.bf16.msra.mxu0 %v2063
          %2165 = vmatpush.bf16.msra.mxu0 %v2062
          %2166 = vmatmul.bf16.gmra.mxu0 %v1722
          %v2167 = vpop.f32.mrf.mxu0
          %v2168 = vadd.f32 %v1868, %v2167
          %v2169 = vpop.f32.mrf.mxu0
          %v2170 = vadd.f32 %v1868, %v2169
          %2171 = vmatmul.bf16.gmra.mxu0 %v1728
          %v2172 = vpop.f32.mrf.mxu0
          %v2173 = vadd.f32 %v1868, %v2172
          %v2174 = vpop.f32.mrf.mxu0
          %v2175 = vadd.f32 %v1868, %v2174
          %2176 = vmatmul.bf16.gmra.mxu0 %v1734
          %v2177 = vpop.f32.mrf.mxu0
          %v2178 = vadd.f32 %v1868, %v2177
          %v2179 = vpop.f32.mrf.mxu0
          %v2180 = vadd.f32 %v1868, %v2179
          %2181 = vmatmul.bf16.gmra.mxu0 %v1740
          %v2182 = vpop.f32.mrf.mxu0
          %v2183 = vadd.f32 %v1868, %v2182
          %v2184 = vpop.f32.mrf.mxu0
          %v2185 = vadd.f32 %v1868, %v2184
          %2186 = vmatmul.bf16.gmra.mxu0 %v1746
          %v2187 = vpop.f32.mrf.mxu0
          %v2188 = vadd.f32 %v1868, %v2187
          %v2189 = vpop.f32.mrf.mxu0
          %v2190 = vadd.f32 %v1868, %v2189
          %2191 = vmatmul.bf16.gmra.mxu0 %v1752
          %v2192 = vpop.f32.mrf.mxu0
          %v2193 = vadd.f32 %v1868, %v2192
          %v2194 = vpop.f32.mrf.mxu0
          %v2195 = vadd.f32 %v1868, %v2194
          %2196 = vmatmul.bf16.gmra.mxu0 %v1758
          %v2197 = vpop.f32.mrf.mxu0
          %v2198 = vadd.f32 %v1868, %v2197
          %v2199 = vpop.f32.mrf.mxu0
          %v2200 = vadd.f32 %v1868, %v2199
          %2201 = vmatmul.bf16.gmra.mxu0 %v1764
          %v2202 = vpop.f32.mrf.mxu0
          %v2203 = vadd.f32 %v1868, %v2202
          %v2204 = vpop.f32.mrf.mxu0
          %v2205 = vadd.f32 %v1868, %v2204
          %2206 = vdwg.mxu0
          %2207 = vmatpush.bf16.msra.mxu0 %v2077
          %2208 = vmatpush.bf16.msra.mxu0 %v2076
          %2209 = vmatpush.bf16.msra.mxu0 %v2075
          %2210 = vmatpush.bf16.msra.mxu0 %v2074
          %2211 = vmatpush.bf16.msra.mxu0 %v2073
          %2212 = vmatpush.bf16.msra.mxu0 %v2072
          %2213 = vmatpush.bf16.msra.mxu0 %v2071
          %2214 = vmatpush.bf16.msra.mxu0 %v2070
          %2215 = vmatmul.bf16.gmra.mxu0 %v1723
          %v2216 = vpop.f32.mrf.mxu0
          %v2217 = vadd.f32 %v2168, %v2216
          %v2218 = vpop.f32.mrf.mxu0
          %v2219 = vadd.f32 %v2170, %v2218
          %2220 = vmatmul.bf16.gmra.mxu0 %v1729
          %v2221 = vpop.f32.mrf.mxu0
          %v2222 = vadd.f32 %v2173, %v2221
          %v2223 = vpop.f32.mrf.mxu0
          %v2224 = vadd.f32 %v2175, %v2223
          %2225 = vmatmul.bf16.gmra.mxu0 %v1735
          %v2226 = vpop.f32.mrf.mxu0
          %v2227 = vadd.f32 %v2178, %v2226
          %v2228 = vpop.f32.mrf.mxu0
          %v2229 = vadd.f32 %v2180, %v2228
          %2230 = vmatmul.bf16.gmra.mxu0 %v1741
          %v2231 = vpop.f32.mrf.mxu0
          %v2232 = vadd.f32 %v2183, %v2231
          %v2233 = vpop.f32.mrf.mxu0
          %v2234 = vadd.f32 %v2185, %v2233
          %2235 = vmatmul.bf16.gmra.mxu0 %v1747
          %v2236 = vpop.f32.mrf.mxu0
          %v2237 = vadd.f32 %v2188, %v2236
          %v2238 = vpop.f32.mrf.mxu0
          %v2239 = vadd.f32 %v2190, %v2238
          %2240 = vmatmul.bf16.gmra.mxu0 %v1753
          %v2241 = vpop.f32.mrf.mxu0
          %v2242 = vadd.f32 %v2193, %v2241
          %v2243 = vpop.f32.mrf.mxu0
          %v2244 = vadd.f32 %v2195, %v2243
          %2245 = vmatmul.bf16.gmra.mxu0 %v1759
          %v2246 = vpop.f32.mrf.mxu0
          %v2247 = vadd.f32 %v2198, %v2246
          %v2248 = vpop.f32.mrf.mxu0
          %v2249 = vadd.f32 %v2200, %v2248
          %2250 = vmatmul.bf16.gmra.mxu0 %v1765
          %v2251 = vpop.f32.mrf.mxu0
          %v2252 = vadd.f32 %v2203, %v2251
          %v2253 = vpop.f32.mrf.mxu0
          %v2254 = vadd.f32 %v2205, %v2253
          %2255 = vdwg.mxu0
          %2256 = vmatpush.bf16.msra.mxu0 %v2085
          %2257 = vmatpush.bf16.msra.mxu0 %v2084
          %2258 = vmatpush.bf16.msra.mxu0 %v2083
          %2259 = vmatpush.bf16.msra.mxu0 %v2082
          %2260 = vmatpush.bf16.msra.mxu0 %v2081
          %2261 = vmatpush.bf16.msra.mxu0 %v2080
          %2262 = vmatpush.bf16.msra.mxu0 %v2079
          %2263 = vmatpush.bf16.msra.mxu0 %v2078
          %2264 = vmatmul.bf16.gmra.mxu0 %v1724
          %v2265 = vpop.f32.mrf.mxu0
          %v2266 = vadd.f32 %v2217, %v2265
          %v2267 = vpop.f32.mrf.mxu0
          %v2268 = vadd.f32 %v2219, %v2267
          %2269 = vmatmul.bf16.gmra.mxu0 %v1730
          %v2270 = vpop.f32.mrf.mxu0
          %v2271 = vadd.f32 %v2222, %v2270
          %v2272 = vpop.f32.mrf.mxu0
          %v2273 = vadd.f32 %v2224, %v2272
          %2274 = vmatmul.bf16.gmra.mxu0 %v1736
          %v2275 = vpop.f32.mrf.mxu0
          %v2276 = vadd.f32 %v2227, %v2275
          %v2277 = vpop.f32.mrf.mxu0
          %v2278 = vadd.f32 %v2229, %v2277
          %2279 = vmatmul.bf16.gmra.mxu0 %v1742
          %v2280 = vpop.f32.mrf.mxu0
          %v2281 = vadd.f32 %v2232, %v2280
          %v2282 = vpop.f32.mrf.mxu0
          %v2283 = vadd.f32 %v2234, %v2282
          %2284 = vmatmul.bf16.gmra.mxu0 %v1748
          %v2285 = vpop.f32.mrf.mxu0
          %v2286 = vadd.f32 %v2237, %v2285
          %v2287 = vpop.f32.mrf.mxu0
          %v2288 = vadd.f32 %v2239, %v2287
          %2289 = vmatmul.bf16.gmra.mxu0 %v1754
          %v2290 = vpop.f32.mrf.mxu0
          %v2291 = vadd.f32 %v2242, %v2290
          %v2292 = vpop.f32.mrf.mxu0
          %v2293 = vadd.f32 %v2244, %v2292
          %2294 = vmatmul.bf16.gmra.mxu0 %v1760
          %v2295 = vpop.f32.mrf.mxu0
          %v2296 = vadd.f32 %v2247, %v2295
          %v2297 = vpop.f32.mrf.mxu0
          %v2298 = vadd.f32 %v2249, %v2297
          %2299 = vmatmul.bf16.gmra.mxu0 %v1766
          %v2300 = vpop.f32.mrf.mxu0
          %v2301 = vadd.f32 %v2252, %v2300
          %v2302 = vpop.f32.mrf.mxu0
          %v2303 = vadd.f32 %v2254, %v2302
          %2304 = vdwg.mxu0
          %2305 = vmatpush.bf16.msra.mxu0 %v2093
          %2306 = vmatpush.bf16.msra.mxu0 %v2092
          %2307 = vmatpush.bf16.msra.mxu0 %v2091
          %2308 = vmatpush.bf16.msra.mxu0 %v2090
          %2309 = vmatpush.bf16.msra.mxu0 %v2089
          %2310 = vmatpush.bf16.msra.mxu0 %v2088
          %2311 = vmatpush.bf16.msra.mxu0 %v2087
          %2312 = vmatpush.bf16.msra.mxu0 %v2086
          %2313 = vmatmul.bf16.gmra.mxu0 %v1725
          %v2314 = vpop.f32.mrf.mxu0
          %v2315 = vadd.f32 %v2266, %v2314
          %v2316 = vpop.f32.mrf.mxu0
          %v2317 = vadd.f32 %v2268, %v2316
          %2318 = vmatmul.bf16.gmra.mxu0 %v1731
          %v2319 = vpop.f32.mrf.mxu0
          %v2320 = vadd.f32 %v2271, %v2319
          %v2321 = vpop.f32.mrf.mxu0
          %v2322 = vadd.f32 %v2273, %v2321
          %2323 = vmatmul.bf16.gmra.mxu0 %v1737
          %v2324 = vpop.f32.mrf.mxu0
          %v2325 = vadd.f32 %v2276, %v2324
          %v2326 = vpop.f32.mrf.mxu0
          %v2327 = vadd.f32 %v2278, %v2326
          %2328 = vmatmul.bf16.gmra.mxu0 %v1743
          %v2329 = vpop.f32.mrf.mxu0
          %v2330 = vadd.f32 %v2281, %v2329
          %v2331 = vpop.f32.mrf.mxu0
          %v2332 = vadd.f32 %v2283, %v2331
          %2333 = vmatmul.bf16.gmra.mxu0 %v1749
          %v2334 = vpop.f32.mrf.mxu0
          %v2335 = vadd.f32 %v2286, %v2334
          %v2336 = vpop.f32.mrf.mxu0
          %v2337 = vadd.f32 %v2288, %v2336
          %2338 = vmatmul.bf16.gmra.mxu0 %v1755
          %v2339 = vpop.f32.mrf.mxu0
          %v2340 = vadd.f32 %v2291, %v2339
          %v2341 = vpop.f32.mrf.mxu0
          %v2342 = vadd.f32 %v2293, %v2341
          %2343 = vmatmul.bf16.gmra.mxu0 %v1761
          %v2344 = vpop.f32.mrf.mxu0
          %v2345 = vadd.f32 %v2296, %v2344
          %v2346 = vpop.f32.mrf.mxu0
          %v2347 = vadd.f32 %v2298, %v2346
          %2348 = vmatmul.bf16.gmra.mxu0 %v1767
          %v2349 = vpop.f32.mrf.mxu0
          %v2350 = vadd.f32 %v2301, %v2349
          %v2351 = vpop.f32.mrf.mxu0
          %v2352 = vadd.f32 %v2303, %v2351
          %2353 = vdwg.mxu0
          %2354 = vmatpush.bf16.msra.mxu0 %v2101
          %2355 = vmatpush.bf16.msra.mxu0 %v2100
          %2356 = vmatpush.bf16.msra.mxu0 %v2099
          %2357 = vmatpush.bf16.msra.mxu0 %v2098
          %2358 = vmatpush.bf16.msra.mxu0 %v2097
          %2359 = vmatpush.bf16.msra.mxu0 %v2096
          %2360 = vmatpush.bf16.msra.mxu0 %v2095
          %2361 = vmatpush.bf16.msra.mxu0 %v2094
          %2362 = vmatmul.bf16.gmra.mxu0 %v1726
          %v2363 = vpop.f32.mrf.mxu0
          %v2364 = vadd.f32 %v2315, %v2363
          %v2365 = vpop.f32.mrf.mxu0
          %v2366 = vadd.f32 %v2317, %v2365
          %2367 = vmatmul.bf16.gmra.mxu0 %v1732
          %v2368 = vpop.f32.mrf.mxu0
          %v2369 = vadd.f32 %v2320, %v2368
          %v2370 = vpop.f32.mrf.mxu0
          %v2371 = vadd.f32 %v2322, %v2370
          %2372 = vmatmul.bf16.gmra.mxu0 %v1738
          %v2373 = vpop.f32.mrf.mxu0
          %v2374 = vadd.f32 %v2325, %v2373
          %v2375 = vpop.f32.mrf.mxu0
          %v2376 = vadd.f32 %v2327, %v2375
          %2377 = vmatmul.bf16.gmra.mxu0 %v1744
          %v2378 = vpop.f32.mrf.mxu0
          %v2379 = vadd.f32 %v2330, %v2378
          %v2380 = vpop.f32.mrf.mxu0
          %v2381 = vadd.f32 %v2332, %v2380
          %2382 = vmatmul.bf16.gmra.mxu0 %v1750
          %v2383 = vpop.f32.mrf.mxu0
          %v2384 = vadd.f32 %v2335, %v2383
          %v2385 = vpop.f32.mrf.mxu0
          %v2386 = vadd.f32 %v2337, %v2385
          %2387 = vmatmul.bf16.gmra.mxu0 %v1756
          %v2388 = vpop.f32.mrf.mxu0
          %v2389 = vadd.f32 %v2340, %v2388
          %v2390 = vpop.f32.mrf.mxu0
          %v2391 = vadd.f32 %v2342, %v2390
          %2392 = vmatmul.bf16.gmra.mxu0 %v1762
          %v2393 = vpop.f32.mrf.mxu0
          %v2394 = vadd.f32 %v2345, %v2393
          %v2395 = vpop.f32.mrf.mxu0
          %v2396 = vadd.f32 %v2347, %v2395
          %2397 = vmatmul.bf16.gmra.mxu0 %v1768
          %v2398 = vpop.f32.mrf.mxu0
          %v2399 = vadd.f32 %v2350, %v2398
          %v2400 = vpop.f32.mrf.mxu0
          %v2401 = vadd.f32 %v2352, %v2400
          %2402 = vdwg.mxu0
          %2403 = vmatpush.bf16.msra.mxu0 %v2109
          %2404 = vmatpush.bf16.msra.mxu0 %v2108
          %2405 = vmatpush.bf16.msra.mxu0 %v2107
          %2406 = vmatpush.bf16.msra.mxu0 %v2106
          %2407 = vmatpush.bf16.msra.mxu0 %v2105
          %2408 = vmatpush.bf16.msra.mxu0 %v2104
          %2409 = vmatpush.bf16.msra.mxu0 %v2103
          %2410 = vmatpush.bf16.msra.mxu0 %v2102
          %2411 = vmatmul.bf16.gmra.mxu0 %v1727
          %v2412 = vpop.f32.mrf.mxu0
          %v2413 = vadd.f32 %v2364, %v2412
          %v2414 = vpop.f32.mrf.mxu0
          %v2415 = vadd.f32 %v2366, %v2414
          %2416 = vmatmul.bf16.gmra.mxu0 %v1733
          %v2417 = vpop.f32.mrf.mxu0
          %v2418 = vadd.f32 %v2369, %v2417
          %v2419 = vpop.f32.mrf.mxu0
          %v2420 = vadd.f32 %v2371, %v2419
          %2421 = vmatmul.bf16.gmra.mxu0 %v1739
          %v2422 = vpop.f32.mrf.mxu0
          %v2423 = vadd.f32 %v2374, %v2422
          %v2424 = vpop.f32.mrf.mxu0
          %v2425 = vadd.f32 %v2376, %v2424
          %2426 = vmatmul.bf16.gmra.mxu0 %v1745
          %v2427 = vpop.f32.mrf.mxu0
          %v2428 = vadd.f32 %v2379, %v2427
          %v2429 = vpop.f32.mrf.mxu0
          %v2430 = vadd.f32 %v2381, %v2429
          %2431 = vmatmul.bf16.gmra.mxu0 %v1751
          %v2432 = vpop.f32.mrf.mxu0
          %v2433 = vadd.f32 %v2384, %v2432
          %v2434 = vpop.f32.mrf.mxu0
          %v2435 = vadd.f32 %v2386, %v2434
          %2436 = vmatmul.bf16.gmra.mxu0 %v1757
          %v2437 = vpop.f32.mrf.mxu0
          %v2438 = vadd.f32 %v2389, %v2437
          %v2439 = vpop.f32.mrf.mxu0
          %v2440 = vadd.f32 %v2391, %v2439
          %2441 = vmatmul.bf16.gmra.mxu0 %v1763
          %v2442 = vpop.f32.mrf.mxu0
          %v2443 = vadd.f32 %v2394, %v2442
          %v2444 = vpop.f32.mrf.mxu0
          %v2445 = vadd.f32 %v2396, %v2444
          %2446 = vmatmul.bf16.gmra.mxu0 %v1769
          %v2447 = vpop.f32.mrf.mxu0
          %v2448 = vadd.f32 %v2399, %v2447
          %v2449 = vpop.f32.mrf.mxu0
          %v2450 = vadd.f32 %v2401, %v2449
          %2451 = vdwg.mxu0
          %vm2452 = vcmp.ge.f32.partialorder %v2413, 0.0
          %vm2453 = vcmp.ge.f32.partialorder %v2415, 0.0
          %vm2454 = vcmp.ge.f32.partialorder %v2418, 0.0
          %vm2455 = vcmp.ge.f32.partialorder %v2420, 0.0
          %vm2456 = vcmp.ge.f32.partialorder %v2423, 0.0
          %vm2457 = vcmp.ge.f32.partialorder %v2425, 0.0
          %vm2458 = vcmp.ge.f32.partialorder %v2428, 0.0
          %vm2459 = vcmp.ge.f32.partialorder %v2430, 0.0
          %vm2460 = vcmp.ge.f32.partialorder %v2433, 0.0
          %vm2461 = vcmp.ge.f32.partialorder %v2435, 0.0
          %vm2462 = vcmp.ge.f32.partialorder %v2438, 0.0
          %vm2463 = vcmp.ge.f32.partialorder %v2440, 0.0
          %vm2464 = vcmp.ge.f32.partialorder %v2443, 0.0
          %vm2465 = vcmp.ge.f32.partialorder %v2445, 0.0
          %vm2466 = vcmp.ge.f32.partialorder %v2448, 0.0
          %vm2467 = vcmp.ge.f32.partialorder %v2450, 0.0
          %v2468 = vmul.f32 %v2413, 0.01
          %v2469 = vmul.f32 %v2415, 0.01
          %v2470 = vmul.f32 %v2418, 0.01
          %v2471 = vmul.f32 %v2420, 0.01
          %v2472 = vmul.f32 %v2423, 0.01
          %v2473 = vmul.f32 %v2425, 0.01
          %v2474 = vmul.f32 %v2428, 0.01
          %v2475 = vmul.f32 %v2430, 0.01
          %v2476 = vmul.f32 %v2433, 0.01
          %v2477 = vmul.f32 %v2435, 0.01
          %v2478 = vmul.f32 %v2438, 0.01
          %v2479 = vmul.f32 %v2440, 0.01
          %v2480 = vmul.f32 %v2443, 0.01
          %v2481 = vmul.f32 %v2445, 0.01
          %v2482 = vmul.f32 %v2448, 0.01
          %v2483 = vmul.f32 %v2450, 0.01
          %v2484 = vsel %vm2452, %v2413, %v2468
          %v2485 = vsel %vm2453, %v2415, %v2469
          %v2486 = vsel %vm2454, %v2418, %v2470
          %v2487 = vsel %vm2455, %v2420, %v2471
          %v2488 = vsel %vm2456, %v2423, %v2472
          %v2489 = vsel %vm2457, %v2425, %v2473
          %v2490 = vsel %vm2458, %v2428, %v2474
          %v2491 = vsel %vm2459, %v2430, %v2475
          %v2492 = vsel %vm2460, %v2433, %v2476
          %v2493 = vsel %vm2461, %v2435, %v2477
          %v2494 = vsel %vm2462, %v2438, %v2478
          %v2495 = vsel %vm2463, %v2440, %v2479
          %v2496 = vsel %vm2464, %v2443, %v2480
          %v2497 = vsel %vm2465, %v2445, %v2481
          %v2498 = vsel %vm2466, %v2448, %v2482
          %v2499 = vsel %vm2467, %v2450, %v2483
          %v2500 = vmul.f32 %v1626, %v1530
          %v2501 = vmul.f32 %v1627, %v1531
          %v2502 = vmul.f32 %v1628, %v1532
          %v2503 = vmul.f32 %v1629, %v1533
          %v2504 = vmul.f32 %v1630, %v1534
          %v2505 = vmul.f32 %v1631, %v1535
          %v2506 = vmul.f32 %v1632, %v1536
          %v2507 = vmul.f32 %v1633, %v1537
          %v2508 = vmul.f32 %v1634, %v1538
          %v2509 = vmul.f32 %v1635, %v1539
          %v2510 = vmul.f32 %v1636, %v1540
          %v2511 = vmul.f32 %v1637, %v1541
          %v2512 = vmul.f32 %v1638, %v1542
          %v2513 = vmul.f32 %v1639, %v1543
          %v2514 = vmul.f32 %v1640, %v1544
          %v2515 = vmul.f32 %v1641, %v1545
          %v2516 = vmul.f32 %v1642, %v1546
          %v2517 = vmul.f32 %v1643, %v1547
          %v2518 = vmul.f32 %v1644, %v1548
          %v2519 = vmul.f32 %v1645, %v1549
          %v2520 = vmul.f32 %v1646, %v1550
          %v2521 = vmul.f32 %v1647, %v1551
          %v2522 = vmul.f32 %v1648, %v1552
          %v2523 = vmul.f32 %v1649, %v1553
          %v2524 = vmul.f32 %v1650, %v1554
          %v2525 = vmul.f32 %v1651, %v1555
          %v2526 = vmul.f32 %v1652, %v1556
          %v2527 = vmul.f32 %v1653, %v1557
          %v2528 = vmul.f32 %v1654, %v1558
          %v2529 = vmul.f32 %v1655, %v1559
          %v2530 = vmul.f32 %v1656, %v1560
          %v2531 = vmul.f32 %v1657, %v1561
          %v2532 = vmul.f32 %v1658, %v1562
          %v2533 = vmul.f32 %v1659, %v1563
          %v2534 = vmul.f32 %v1660, %v1564
          %v2535 = vmul.f32 %v1661, %v1565
          %v2536 = vmul.f32 %v1662, %v1566
          %v2537 = vmul.f32 %v1663, %v1567
          %v2538 = vmul.f32 %v1664, %v1568
          %v2539 = vmul.f32 %v1665, %v1569
          %v2540 = vmul.f32 %v1666, %v1570
          %v2541 = vmul.f32 %v1667, %v1571
          %v2542 = vmul.f32 %v1668, %v1572
          %v2543 = vmul.f32 %v1669, %v1573
          %v2544 = vmul.f32 %v1670, %v1574
          %v2545 = vmul.f32 %v1671, %v1575
          %v2546 = vmul.f32 %v1672, %v1576
          %v2547 = vmul.f32 %v1673, %v1577
          %v2548 = vmul.f32 %v1674, %v1578
          %v2549 = vmul.f32 %v1675, %v1579
          %v2550 = vmul.f32 %v1676, %v1580
          %v2551 = vmul.f32 %v1677, %v1581
          %v2552 = vmul.f32 %v1678, %v1582
          %v2553 = vmul.f32 %v1679, %v1583
          %v2554 = vmul.f32 %v1680, %v1584
          %v2555 = vmul.f32 %v1681, %v1585
          %v2556 = vmul.f32 %v1682, %v1586
          %v2557 = vmul.f32 %v1683, %v1587
          %v2558 = vmul.f32 %v1684, %v1588
          %v2559 = vmul.f32 %v1685, %v1589
          %v2560 = vmul.f32 %v1686, %v1590
          %v2561 = vmul.f32 %v1687, %v1591
          %v2562 = vmul.f32 %v1688, %v1592
          %v2563 = vmul.f32 %v1689, %v1593
          %v2564 = vmul.f32 %v1690, %v1594
          %v2565 = vmul.f32 %v1691, %v1595
          %v2566 = vmul.f32 %v1692, %v1596
          %v2567 = vmul.f32 %v1693, %v1597
          %v2568 = vmul.f32 %v1694, %v1598
          %v2569 = vmul.f32 %v1695, %v1599
          %v2570 = vmul.f32 %v1696, %v1600
          %v2571 = vmul.f32 %v1697, %v1601
          %v2572 = vmul.f32 %v1698, %v1602
          %v2573 = vmul.f32 %v1699, %v1603
          %v2574 = vmul.f32 %v1700, %v1604
          %v2575 = vmul.f32 %v1701, %v1605
          %v2576 = vmul.f32 %v1702, %v1606
          %v2577 = vmul.f32 %v1703, %v1607
          %v2578 = vmul.f32 %v1704, %v1608
          %v2579 = vmul.f32 %v1705, %v1609
          %v2580 = vmul.f32 %v1706, %v1610
          %v2581 = vmul.f32 %v1707, %v1611
          %v2582 = vmul.f32 %v1708, %v1612
          %v2583 = vmul.f32 %v1709, %v1613
          %v2584 = vmul.f32 %v1710, %v1614
          %v2585 = vmul.f32 %v1711, %v1615
          %v2586 = vmul.f32 %v1712, %v1616
          %v2587 = vmul.f32 %v1713, %v1617
          %v2588 = vmul.f32 %v1714, %v1618
          %v2589 = vmul.f32 %v1715, %v1619
          %v2590 = vmul.f32 %v1716, %v1620
          %v2591 = vmul.f32 %v1717, %v1621
          %v2592 = vmul.f32 %v1718, %v1622
          %v2593 = vmul.f32 %v1719, %v1623
          %v2594 = vmul.f32 %v1720, %v1624
          %v2595 = vmul.f32 %v1721, %v1625
          %v2596 = vpack.c.bf16 %v2506, %v2500
          %v2597 = vpack.c.bf16 %v2507, %v2501
          %v2598 = vpack.c.bf16 %v2508, %v2502
          %v2599 = vpack.c.bf16 %v2509, %v2503
          %v2600 = vpack.c.bf16 %v2510, %v2504
          %v2601 = vpack.c.bf16 %v2511, %v2505
          %v2602 = vpack.c.bf16 %v2518, %v2512
          %v2603 = vpack.c.bf16 %v2519, %v2513
          %v2604 = vpack.c.bf16 %v2520, %v2514
          %v2605 = vpack.c.bf16 %v2521, %v2515
          %v2606 = vpack.c.bf16 %v2522, %v2516
          %v2607 = vpack.c.bf16 %v2523, %v2517
          %v2608 = vpack.c.bf16 %v2530, %v2524
          %v2609 = vpack.c.bf16 %v2531, %v2525
          %v2610 = vpack.c.bf16 %v2532, %v2526
          %v2611 = vpack.c.bf16 %v2533, %v2527
          %v2612 = vpack.c.bf16 %v2534, %v2528
          %v2613 = vpack.c.bf16 %v2535, %v2529
          %v2614 = vpack.c.bf16 %v2542, %v2536
          %v2615 = vpack.c.bf16 %v2543, %v2537
          %v2616 = vpack.c.bf16 %v2544, %v2538
          %v2617 = vpack.c.bf16 %v2545, %v2539
          %v2618 = vpack.c.bf16 %v2546, %v2540
          %v2619 = vpack.c.bf16 %v2547, %v2541
          %v2620 = vpack.c.bf16 %v2554, %v2548
          %v2621 = vpack.c.bf16 %v2555, %v2549
          %v2622 = vpack.c.bf16 %v2556, %v2550
          %v2623 = vpack.c.bf16 %v2557, %v2551
          %v2624 = vpack.c.bf16 %v2558, %v2552
          %v2625 = vpack.c.bf16 %v2559, %v2553
          %v2626 = vpack.c.bf16 %v2566, %v2560
          %v2627 = vpack.c.bf16 %v2567, %v2561
          %v2628 = vpack.c.bf16 %v2568, %v2562
          %v2629 = vpack.c.bf16 %v2569, %v2563
          %v2630 = vpack.c.bf16 %v2570, %v2564
          %v2631 = vpack.c.bf16 %v2571, %v2565
          %v2632 = vpack.c.bf16 %v2578, %v2572
          %v2633 = vpack.c.bf16 %v2579, %v2573
          %v2634 = vpack.c.bf16 %v2580, %v2574
          %v2635 = vpack.c.bf16 %v2581, %v2575
          %v2636 = vpack.c.bf16 %v2582, %v2576
          %v2637 = vpack.c.bf16 %v2583, %v2577
          %v2638 = vpack.c.bf16 %v2590, %v2584
          %v2639 = vpack.c.bf16 %v2591, %v2585
          %v2640 = vpack.c.bf16 %v2592, %v2586
          %v2641 = vpack.c.bf16 %v2593, %v2587
          %v2642 = vpack.c.bf16 %v2594, %v2588
          %v2643 = vpack.c.bf16 %v2595, %v2589
          %v2644 = vld [vmem:[%s5] sm:$0xf]
          %v2645 = vld [vmem:[%s5 + $0x4] sm:$0xf]
          %v2646 = vld [vmem:[%s5 + $0x8] sm:$0xf]
          %v2647 = vld [vmem:[%s5 + $0xc] sm:$0xf]
          %v2648 = vld [vmem:[%s5 + $0x10] sm:$0xf]
          %v2649 = vld [vmem:[%s5 + $0x14] sm:$0xf]
          %v2650 = vld [vmem:[%s5 + $0x18] sm:$0xf]
          %v2651 = vld [vmem:[%s5 + $0x1c] sm:$0xf]
          %v2652 = vld [vmem:[%s5 + $0x20] sm:$0xf]
          %v2653 = vld [vmem:[%s5 + $0x24] sm:$0xf]
          %v2654 = vld [vmem:[%s5 + $0x28] sm:$0xf]
          %v2655 = vld [vmem:[%s5 + $0x2c] sm:$0xf]
          %v2656 = vld [vmem:[%s5 + $0x30] sm:$0xf]
          %v2657 = vld [vmem:[%s5 + $0x34] sm:$0xf]
          %v2658 = vld [vmem:[%s5 + $0x38] sm:$0xf]
          %v2659 = vld [vmem:[%s5 + $0x3c] sm:$0xf]
          %v2660 = vld [vmem:[%s5 + $0x40] sm:$0xf]
          %v2661 = vld [vmem:[%s5 + $0x44] sm:$0xf]
          %v2662 = vld [vmem:[%s5 + $0x48] sm:$0xf]
          %v2663 = vld [vmem:[%s5 + $0x4c] sm:$0xf]
          %v2664 = vld [vmem:[%s5 + $0x50] sm:$0xf]
          %v2665 = vld [vmem:[%s5 + $0x54] sm:$0xf]
          %v2666 = vld [vmem:[%s5 + $0x58] sm:$0xf]
          %v2667 = vld [vmem:[%s5 + $0x5c] sm:$0xf]
          %v2668 = vld [vmem:[%s5 + $0x60] sm:$0xf]
          %v2669 = vld [vmem:[%s5 + $0x64] sm:$0xf]
          %v2670 = vld [vmem:[%s5 + $0x68] sm:$0xf]
          %v2671 = vld [vmem:[%s5 + $0x6c] sm:$0xf]
          %v2672 = vld [vmem:[%s5 + $0x70] sm:$0xf]
          %v2673 = vld [vmem:[%s5 + $0x74] sm:$0xf]
          %v2674 = vld [vmem:[%s5 + $0x78] sm:$0xf]
          %v2675 = vld [vmem:[%s5 + $0x7c] sm:$0xf]
          %v2676 = vld [vmem:[%s5 + $0x80] sm:$0xf]
          %v2677 = vld [vmem:[%s5 + $0x84] sm:$0xf]
          %v2678 = vld [vmem:[%s5 + $0x88] sm:$0xf]
          %v2679 = vld [vmem:[%s5 + $0x8c] sm:$0xf]
          %v2680 = vld [vmem:[%s5 + $0x90] sm:$0xf]
          %v2681 = vld [vmem:[%s5 + $0x94] sm:$0xf]
          %v2682 = vld [vmem:[%s5 + $0x98] sm:$0xf]
          %v2683 = vld [vmem:[%s5 + $0x9c] sm:$0xf]
          %v2684 = vld [vmem:[%s5 + $0xa0] sm:$0xf]
          %v2685 = vld [vmem:[%s5 + $0xa4] sm:$0xf]
          %v2686 = vld [vmem:[%s5 + $0xa8] sm:$0xf]
          %v2687 = vld [vmem:[%s5 + $0xac] sm:$0xf]
          %v2688 = vld [vmem:[%s5 + $0xb0] sm:$0xf]
          %v2689 = vld [vmem:[%s5 + $0xb4] sm:$0xf]
          %v2690 = vld [vmem:[%s5 + $0xb8] sm:$0xf]
          %v2691 = vld [vmem:[%s5 + $0xbc] sm:$0xf]
          %v2692 = vld [vmem:[%s5 + $0xc0] sm:$0xf]
          %v2693 = vld [vmem:[%s5 + $0xc4] sm:$0xf]
          %v2694 = vld [vmem:[%s5 + $0xc8] sm:$0xf]
          %v2695 = vld [vmem:[%s5 + $0xcc] sm:$0xf]
          %v2696 = vld [vmem:[%s5 + $0xd0] sm:$0xf]
          %v2697 = vld [vmem:[%s5 + $0xd4] sm:$0xf]
          %v2698 = vld [vmem:[%s5 + $0xd8] sm:$0xf]
          %v2699 = vld [vmem:[%s5 + $0xdc] sm:$0xf]
          %v2700 = vld [vmem:[%s5 + $0xe0] sm:$0xf]
          %v2701 = vld [vmem:[%s5 + $0xe4] sm:$0xf]
          %v2702 = vld [vmem:[%s5 + $0xe8] sm:$0xf]
          %v2703 = vld [vmem:[%s5 + $0xec] sm:$0xf]
          %v2704 = vld [vmem:[%s5 + $0xf0] sm:$0xf]
          %v2705 = vld [vmem:[%s5 + $0xf4] sm:$0xf]
          %v2706 = vld [vmem:[%s5 + $0xf8] sm:$0xf]
          %v2707 = vld [vmem:[%s5 + $0xfc] sm:$0xf]
          %v2708 = vld [vmem:[%s5 + $0x100] sm:$0xf]
          %v2709 = vld [vmem:[%s5 + $0x104] sm:$0xf]
          %v2710 = vld [vmem:[%s5 + $0x108] sm:$0xf]
          %v2711 = vld [vmem:[%s5 + $0x10c] sm:$0xf]
          %v2712 = vld [vmem:[%s5 + $0x110] sm:$0xf]
          %v2713 = vld [vmem:[%s5 + $0x114] sm:$0xf]
          %v2714 = vld [vmem:[%s5 + $0x118] sm:$0xf]
          %v2715 = vld [vmem:[%s5 + $0x11c] sm:$0xf]
          %v2716 = vld [vmem:[%s5 + $0x120] sm:$0xf]
          %v2717 = vld [vmem:[%s5 + $0x124] sm:$0xf]
          %v2718 = vld [vmem:[%s5 + $0x128] sm:$0xf]
          %v2719 = vld [vmem:[%s5 + $0x12c] sm:$0xf]
          %v2720 = vld [vmem:[%s5 + $0x130] sm:$0xf]
          %v2721 = vld [vmem:[%s5 + $0x134] sm:$0xf]
          %v2722 = vld [vmem:[%s5 + $0x138] sm:$0xf]
          %v2723 = vld [vmem:[%s5 + $0x13c] sm:$0xf]
          %v2724 = vld [vmem:[%s5 + $0x140] sm:$0xf]
          %v2725 = vld [vmem:[%s5 + $0x144] sm:$0xf]
          %v2726 = vld [vmem:[%s5 + $0x148] sm:$0xf]
          %v2727 = vld [vmem:[%s5 + $0x14c] sm:$0xf]
          %v2728 = vld [vmem:[%s5 + $0x150] sm:$0xf]
          %v2729 = vld [vmem:[%s5 + $0x154] sm:$0xf]
          %v2730 = vld [vmem:[%s5 + $0x158] sm:$0xf]
          %v2731 = vld [vmem:[%s5 + $0x15c] sm:$0xf]
          %v2732 = vld [vmem:[%s5 + $0x160] sm:$0xf]
          %v2733 = vld [vmem:[%s5 + $0x164] sm:$0xf]
          %v2734 = vld [vmem:[%s5 + $0x168] sm:$0xf]
          %v2735 = vld [vmem:[%s5 + $0x16c] sm:$0xf]
          %v2736 = vld [vmem:[%s5 + $0x170] sm:$0xf]
          %v2737 = vld [vmem:[%s5 + $0x174] sm:$0xf]
          %v2738 = vld [vmem:[%s5 + $0x178] sm:$0xf]
          %v2739 = vld [vmem:[%s5 + $0x17c] sm:$0xf]
          %v2740 = vld [vmem:[%s6] sm:$0x1]
          %v2742 = vperm.slane %v2740, 0
          %v2840 = vunpack.c.l.b16 %v2644
          %v2841 = vunpack.c.l.b16 %v2645
          %v2842 = vunpack.c.l.b16 %v2646
          %v2843 = vunpack.c.l.b16 %v2647
          %v2844 = vunpack.c.l.b16 %v2648
          %v2845 = vunpack.c.l.b16 %v2649
          %v2846 = vunpack.c.l.b16 %v2650
          %v2847 = vunpack.c.l.b16 %v2651
          %v2848 = vunpack.c.l.b16 %v2652
          %v2849 = vunpack.c.l.b16 %v2653
          %v2850 = vunpack.c.l.b16 %v2654
          %v2851 = vunpack.c.l.b16 %v2655
          %v2852 = vunpack.c.l.b16 %v2656
          %v2853 = vunpack.c.l.b16 %v2657
          %v2854 = vunpack.c.l.b16 %v2658
          %v2855 = vunpack.c.l.b16 %v2659
          %v2856 = vunpack.c.l.b16 %v2660
          %v2857 = vunpack.c.l.b16 %v2661
          %v2858 = vunpack.c.l.b16 %v2662
          %v2859 = vunpack.c.l.b16 %v2663
          %v2860 = vunpack.c.l.b16 %v2664
          %v2861 = vunpack.c.l.b16 %v2665
          %v2862 = vunpack.c.l.b16 %v2666
          %v2863 = vunpack.c.l.b16 %v2667
          %v2864 = vunpack.c.l.b16 %v2668
          %v2865 = vunpack.c.l.b16 %v2669
          %v2866 = vunpack.c.l.b16 %v2670
          %v2867 = vunpack.c.l.b16 %v2671
          %v2868 = vunpack.c.l.b16 %v2672
          %v2869 = vunpack.c.l.b16 %v2673
          %v2870 = vunpack.c.l.b16 %v2674
          %v2871 = vunpack.c.l.b16 %v2675
          %v2872 = vunpack.c.l.b16 %v2676
          %v2873 = vunpack.c.l.b16 %v2677
          %v2874 = vunpack.c.l.b16 %v2678
          %v2875 = vunpack.c.l.b16 %v2679
          %v2876 = vunpack.c.l.b16 %v2680
          %v2877 = vunpack.c.l.b16 %v2681
          %v2878 = vunpack.c.l.b16 %v2682
          %v2879 = vunpack.c.l.b16 %v2683
          %v2880 = vunpack.c.l.b16 %v2684
          %v2881 = vunpack.c.l.b16 %v2685
          %v2882 = vunpack.c.l.b16 %v2686
          %v2883 = vunpack.c.l.b16 %v2687
          %v2884 = vunpack.c.l.b16 %v2688
          %v2885 = vunpack.c.l.b16 %v2689
          %v2886 = vunpack.c.l.b16 %v2690
          %v2887 = vunpack.c.l.b16 %v2691
          %v2888 = vunpack.c.l.b16 %v2692
          %v2889 = vunpack.c.l.b16 %v2693
          %v2890 = vunpack.c.l.b16 %v2694
          %v2891 = vunpack.c.l.b16 %v2695
          %v2892 = vunpack.c.l.b16 %v2696
          %v2893 = vunpack.c.l.b16 %v2697
          %v2894 = vunpack.c.l.b16 %v2698
          %v2895 = vunpack.c.l.b16 %v2699
          %v2896 = vunpack.c.l.b16 %v2700
          %v2897 = vunpack.c.l.b16 %v2701
          %v2898 = vunpack.c.l.b16 %v2702
          %v2899 = vunpack.c.l.b16 %v2703
          %v2900 = vunpack.c.l.b16 %v2704
          %v2901 = vunpack.c.l.b16 %v2705
          %v2902 = vunpack.c.l.b16 %v2706
          %v2903 = vunpack.c.l.b16 %v2707
          %v2904 = vunpack.c.l.b16 %v2708
          %v2905 = vunpack.c.l.b16 %v2709
          %v2906 = vunpack.c.l.b16 %v2710
          %v2907 = vunpack.c.l.b16 %v2711
          %v2908 = vunpack.c.l.b16 %v2712
          %v2909 = vunpack.c.l.b16 %v2713
          %v2910 = vunpack.c.l.b16 %v2714
          %v2911 = vunpack.c.l.b16 %v2715
          %v2912 = vunpack.c.l.b16 %v2716
          %v2913 = vunpack.c.l.b16 %v2717
          %v2914 = vunpack.c.l.b16 %v2718
          %v2915 = vunpack.c.l.b16 %v2719
          %v2916 = vunpack.c.l.b16 %v2720
          %v2917 = vunpack.c.l.b16 %v2721
          %v2918 = vunpack.c.l.b16 %v2722
          %v2919 = vunpack.c.l.b16 %v2723
          %v2920 = vunpack.c.l.b16 %v2724
          %v2921 = vunpack.c.l.b16 %v2725
          %v2922 = vunpack.c.l.b16 %v2726
          %v2923 = vunpack.c.l.b16 %v2727
          %v2924 = vunpack.c.l.b16 %v2728
          %v2925 = vunpack.c.l.b16 %v2729
          %v2926 = vunpack.c.l.b16 %v2730
          %v2927 = vunpack.c.l.b16 %v2731
          %v2928 = vunpack.c.l.b16 %v2732
          %v2929 = vunpack.c.l.b16 %v2733
          %v2930 = vunpack.c.l.b16 %v2734
          %v2931 = vunpack.c.l.b16 %v2735
          %v2932 = vunpack.c.l.b16 %v2736
          %v2933 = vunpack.c.l.b16 %v2737
          %v2934 = vunpack.c.l.b16 %v2738
          %v2935 = vunpack.c.l.b16 %v2739
          %v2936 = vpack.c.b16 %v2841, %v2840
          %v2937 = vpack.c.b16 %v2843, %v2842
          %v2938 = vpack.c.b16 %v2845, %v2844
          %v2939 = vpack.c.b16 %v2847, %v2846
          %v2940 = vpack.c.b16 %v2849, %v2848
          %v2941 = vpack.c.b16 %v2851, %v2850
          %v2942 = vpack.c.b16 %v2853, %v2852
          %v2943 = vpack.c.b16 %v2855, %v2854
          %v2944 = vpack.c.b16 %v2857, %v2856
          %v2945 = vpack.c.b16 %v2859, %v2858
          %v2946 = vpack.c.b16 %v2861, %v2860
          %v2947 = vpack.c.b16 %v2863, %v2862
          %v2948 = vpack.c.b16 %v2865, %v2864
          %v2949 = vpack.c.b16 %v2867, %v2866
          %v2950 = vpack.c.b16 %v2869, %v2868
          %v2951 = vpack.c.b16 %v2871, %v2870
          %v2952 = vpack.c.b16 %v2873, %v2872
          %v2953 = vpack.c.b16 %v2875, %v2874
          %v2954 = vpack.c.b16 %v2877, %v2876
          %v2955 = vpack.c.b16 %v2879, %v2878
          %v2956 = vpack.c.b16 %v2881, %v2880
          %v2957 = vpack.c.b16 %v2883, %v2882
          %v2958 = vpack.c.b16 %v2885, %v2884
          %v2959 = vpack.c.b16 %v2887, %v2886
          %v2960 = vpack.c.b16 %v2889, %v2888
          %v2961 = vpack.c.b16 %v2891, %v2890
          %v2962 = vpack.c.b16 %v2893, %v2892
          %v2963 = vpack.c.b16 %v2895, %v2894
          %v2964 = vpack.c.b16 %v2897, %v2896
          %v2965 = vpack.c.b16 %v2899, %v2898
          %v2966 = vpack.c.b16 %v2901, %v2900
          %v2967 = vpack.c.b16 %v2903, %v2902
          %v2968 = vpack.c.b16 %v2905, %v2904
          %v2969 = vpack.c.b16 %v2907, %v2906
          %v2970 = vpack.c.b16 %v2909, %v2908
          %v2971 = vpack.c.b16 %v2911, %v2910
          %v2972 = vpack.c.b16 %v2913, %v2912
          %v2973 = vpack.c.b16 %v2915, %v2914
          %v2974 = vpack.c.b16 %v2917, %v2916
          %v2975 = vpack.c.b16 %v2919, %v2918
          %v2976 = vpack.c.b16 %v2921, %v2920
          %v2977 = vpack.c.b16 %v2923, %v2922
          %v2978 = vpack.c.b16 %v2925, %v2924
          %v2979 = vpack.c.b16 %v2927, %v2926
          %v2980 = vpack.c.b16 %v2929, %v2928
          %v2981 = vpack.c.b16 %v2931, %v2930
          %v2982 = vpack.c.b16 %v2933, %v2932
          %v2983 = vpack.c.b16 %v2935, %v2934
          %3032 = vmatpush.bf16.msra.mxu0 %v2943
          %3033 = vmatpush.bf16.msra.mxu0 %v2942
          %3034 = vmatpush.bf16.msra.mxu0 %v2941
          %3035 = vmatpush.bf16.msra.mxu0 %v2940
          %3036 = vmatpush.bf16.msra.mxu0 %v2939
          %3037 = vmatpush.bf16.msra.mxu0 %v2938
          %3038 = vmatpush.bf16.msra.mxu0 %v2937
          %3039 = vmatpush.bf16.msra.mxu0 %v2936
          %3040 = vmatmul.bf16.gmra.mxu0 %v2596
          %v3041 = vpop.f32.mrf.mxu0
          %v3042 = vadd.f32 %v2742, %v3041
          %v3043 = vpop.f32.mrf.mxu0
          %v3044 = vadd.f32 %v2742, %v3043
          %3045 = vmatmul.bf16.gmra.mxu0 %v2602
          %v3046 = vpop.f32.mrf.mxu0
          %v3047 = vadd.f32 %v2742, %v3046
          %v3048 = vpop.f32.mrf.mxu0
          %v3049 = vadd.f32 %v2742, %v3048
          %3050 = vmatmul.bf16.gmra.mxu0 %v2608
          %v3051 = vpop.f32.mrf.mxu0
          %v3052 = vadd.f32 %v2742, %v3051
          %v3053 = vpop.f32.mrf.mxu0
          %v3054 = vadd.f32 %v2742, %v3053
          %3055 = vmatmul.bf16.gmra.mxu0 %v2614
          %v3056 = vpop.f32.mrf.mxu0
          %v3057 = vadd.f32 %v2742, %v3056
          %v3058 = vpop.f32.mrf.mxu0
          %v3059 = vadd.f32 %v2742, %v3058
          %3060 = vmatmul.bf16.gmra.mxu0 %v2620
          %v3061 = vpop.f32.mrf.mxu0
          %v3062 = vadd.f32 %v2742, %v3061
          %v3063 = vpop.f32.mrf.mxu0
          %v3064 = vadd.f32 %v2742, %v3063
          %3065 = vmatmul.bf16.gmra.mxu0 %v2626
          %v3066 = vpop.f32.mrf.mxu0
          %v3067 = vadd.f32 %v2742, %v3066
          %v3068 = vpop.f32.mrf.mxu0
          %v3069 = vadd.f32 %v2742, %v3068
          %3070 = vmatmul.bf16.gmra.mxu0 %v2632
          %v3071 = vpop.f32.mrf.mxu0
          %v3072 = vadd.f32 %v2742, %v3071
          %v3073 = vpop.f32.mrf.mxu0
          %v3074 = vadd.f32 %v2742, %v3073
          %3075 = vmatmul.bf16.gmra.mxu0 %v2638
          %v3076 = vpop.f32.mrf.mxu0
          %v3077 = vadd.f32 %v2742, %v3076
          %v3078 = vpop.f32.mrf.mxu0
          %v3079 = vadd.f32 %v2742, %v3078
          %3080 = vdwg.mxu0
          %3081 = vmatpush.bf16.msra.mxu0 %v2951
          %3082 = vmatpush.bf16.msra.mxu0 %v2950
          %3083 = vmatpush.bf16.msra.mxu0 %v2949
          %3084 = vmatpush.bf16.msra.mxu0 %v2948
          %3085 = vmatpush.bf16.msra.mxu0 %v2947
          %3086 = vmatpush.bf16.msra.mxu0 %v2946
          %3087 = vmatpush.bf16.msra.mxu0 %v2945
          %3088 = vmatpush.bf16.msra.mxu0 %v2944
          %3089 = vmatmul.bf16.gmra.mxu0 %v2597
          %v3090 = vpop.f32.mrf.mxu0
          %v3091 = vadd.f32 %v3042, %v3090
          %v3092 = vpop.f32.mrf.mxu0
          %v3093 = vadd.f32 %v3044, %v3092
          %3094 = vmatmul.bf16.gmra.mxu0 %v2603
          %v3095 = vpop.f32.mrf.mxu0
          %v3096 = vadd.f32 %v3047, %v3095
          %v3097 = vpop.f32.mrf.mxu0
          %v3098 = vadd.f32 %v3049, %v3097
          %3099 = vmatmul.bf16.gmra.mxu0 %v2609
          %v3100 = vpop.f32.mrf.mxu0
          %v3101 = vadd.f32 %v3052, %v3100
          %v3102 = vpop.f32.mrf.mxu0
          %v3103 = vadd.f32 %v3054, %v3102
          %3104 = vmatmul.bf16.gmra.mxu0 %v2615
          %v3105 = vpop.f32.mrf.mxu0
          %v3106 = vadd.f32 %v3057, %v3105
          %v3107 = vpop.f32.mrf.mxu0
          %v3108 = vadd.f32 %v3059, %v3107
          %3109 = vmatmul.bf16.gmra.mxu0 %v2621
          %v3110 = vpop.f32.mrf.mxu0
          %v3111 = vadd.f32 %v3062, %v3110
          %v3112 = vpop.f32.mrf.mxu0
          %v3113 = vadd.f32 %v3064, %v3112
          %3114 = vmatmul.bf16.gmra.mxu0 %v2627
          %v3115 = vpop.f32.mrf.mxu0
          %v3116 = vadd.f32 %v3067, %v3115
          %v3117 = vpop.f32.mrf.mxu0
          %v3118 = vadd.f32 %v3069, %v3117
          %3119 = vmatmul.bf16.gmra.mxu0 %v2633
          %v3120 = vpop.f32.mrf.mxu0
          %v3121 = vadd.f32 %v3072, %v3120
          %v3122 = vpop.f32.mrf.mxu0
          %v3123 = vadd.f32 %v3074, %v3122
          %3124 = vmatmul.bf16.gmra.mxu0 %v2639
          %v3125 = vpop.f32.mrf.mxu0
          %v3126 = vadd.f32 %v3077, %v3125
          %v3127 = vpop.f32.mrf.mxu0
          %v3128 = vadd.f32 %v3079, %v3127
          %3129 = vdwg.mxu0
          %3130 = vmatpush.bf16.msra.mxu0 %v2959
          %3131 = vmatpush.bf16.msra.mxu0 %v2958
          %3132 = vmatpush.bf16.msra.mxu0 %v2957
          %3133 = vmatpush.bf16.msra.mxu0 %v2956
          %3134 = vmatpush.bf16.msra.mxu0 %v2955
          %3135 = vmatpush.bf16.msra.mxu0 %v2954
          %3136 = vmatpush.bf16.msra.mxu0 %v2953
          %3137 = vmatpush.bf16.msra.mxu0 %v2952
          %3138 = vmatmul.bf16.gmra.mxu0 %v2598
          %v3139 = vpop.f32.mrf.mxu0
          %v3140 = vadd.f32 %v3091, %v3139
          %v3141 = vpop.f32.mrf.mxu0
          %v3142 = vadd.f32 %v3093, %v3141
          %3143 = vmatmul.bf16.gmra.mxu0 %v2604
          %v3144 = vpop.f32.mrf.mxu0
          %v3145 = vadd.f32 %v3096, %v3144
          %v3146 = vpop.f32.mrf.mxu0
          %v3147 = vadd.f32 %v3098, %v3146
          %3148 = vmatmul.bf16.gmra.mxu0 %v2610
          %v3149 = vpop.f32.mrf.mxu0
          %v3150 = vadd.f32 %v3101, %v3149
          %v3151 = vpop.f32.mrf.mxu0
          %v3152 = vadd.f32 %v3103, %v3151
          %3153 = vmatmul.bf16.gmra.mxu0 %v2616
          %v3154 = vpop.f32.mrf.mxu0
          %v3155 = vadd.f32 %v3106, %v3154
          %v3156 = vpop.f32.mrf.mxu0
          %v3157 = vadd.f32 %v3108, %v3156
          %3158 = vmatmul.bf16.gmra.mxu0 %v2622
          %v3159 = vpop.f32.mrf.mxu0
          %v3160 = vadd.f32 %v3111, %v3159
          %v3161 = vpop.f32.mrf.mxu0
          %v3162 = vadd.f32 %v3113, %v3161
          %3163 = vmatmul.bf16.gmra.mxu0 %v2628
          %v3164 = vpop.f32.mrf.mxu0
          %v3165 = vadd.f32 %v3116, %v3164
          %v3166 = vpop.f32.mrf.mxu0
          %v3167 = vadd.f32 %v3118, %v3166
          %3168 = vmatmul.bf16.gmra.mxu0 %v2634
          %v3169 = vpop.f32.mrf.mxu0
          %v3170 = vadd.f32 %v3121, %v3169
          %v3171 = vpop.f32.mrf.mxu0
          %v3172 = vadd.f32 %v3123, %v3171
          %3173 = vmatmul.bf16.gmra.mxu0 %v2640
          %v3174 = vpop.f32.mrf.mxu0
          %v3175 = vadd.f32 %v3126, %v3174
          %v3176 = vpop.f32.mrf.mxu0
          %v3177 = vadd.f32 %v3128, %v3176
          %3178 = vdwg.mxu0
          %3179 = vmatpush.bf16.msra.mxu0 %v2967
          %3180 = vmatpush.bf16.msra.mxu0 %v2966
          %3181 = vmatpush.bf16.msra.mxu0 %v2965
          %3182 = vmatpush.bf16.msra.mxu0 %v2964
          %3183 = vmatpush.bf16.msra.mxu0 %v2963
          %3184 = vmatpush.bf16.msra.mxu0 %v2962
          %3185 = vmatpush.bf16.msra.mxu0 %v2961
          %3186 = vmatpush.bf16.msra.mxu0 %v2960
          %3187 = vmatmul.bf16.gmra.mxu0 %v2599
          %v3188 = vpop.f32.mrf.mxu0
          %v3189 = vadd.f32 %v3140, %v3188
          %v3190 = vpop.f32.mrf.mxu0
          %v3191 = vadd.f32 %v3142, %v3190
          %3192 = vmatmul.bf16.gmra.mxu0 %v2605
          %v3193 = vpop.f32.mrf.mxu0
          %v3194 = vadd.f32 %v3145, %v3193
          %v3195 = vpop.f32.mrf.mxu0
          %v3196 = vadd.f32 %v3147, %v3195
          %3197 = vmatmul.bf16.gmra.mxu0 %v2611
          %v3198 = vpop.f32.mrf.mxu0
          %v3199 = vadd.f32 %v3150, %v3198
          %v3200 = vpop.f32.mrf.mxu0
          %v3201 = vadd.f32 %v3152, %v3200
          %3202 = vmatmul.bf16.gmra.mxu0 %v2617
          %v3203 = vpop.f32.mrf.mxu0
          %v3204 = vadd.f32 %v3155, %v3203
          %v3205 = vpop.f32.mrf.mxu0
          %v3206 = vadd.f32 %v3157, %v3205
          %3207 = vmatmul.bf16.gmra.mxu0 %v2623
          %v3208 = vpop.f32.mrf.mxu0
          %v3209 = vadd.f32 %v3160, %v3208
          %v3210 = vpop.f32.mrf.mxu0
          %v3211 = vadd.f32 %v3162, %v3210
          %3212 = vmatmul.bf16.gmra.mxu0 %v2629
          %v3213 = vpop.f32.mrf.mxu0
          %v3214 = vadd.f32 %v3165, %v3213
          %v3215 = vpop.f32.mrf.mxu0
          %v3216 = vadd.f32 %v3167, %v3215
          %3217 = vmatmul.bf16.gmra.mxu0 %v2635
          %v3218 = vpop.f32.mrf.mxu0
          %v3219 = vadd.f32 %v3170, %v3218
          %v3220 = vpop.f32.mrf.mxu0
          %v3221 = vadd.f32 %v3172, %v3220
          %3222 = vmatmul.bf16.gmra.mxu0 %v2641
          %v3223 = vpop.f32.mrf.mxu0
          %v3224 = vadd.f32 %v3175, %v3223
          %v3225 = vpop.f32.mrf.mxu0
          %v3226 = vadd.f32 %v3177, %v3225
          %3227 = vdwg.mxu0
          %3228 = vmatpush.bf16.msra.mxu0 %v2975
          %3229 = vmatpush.bf16.msra.mxu0 %v2974
          %3230 = vmatpush.bf16.msra.mxu0 %v2973
          %3231 = vmatpush.bf16.msra.mxu0 %v2972
          %3232 = vmatpush.bf16.msra.mxu0 %v2971
          %3233 = vmatpush.bf16.msra.mxu0 %v2970
          %3234 = vmatpush.bf16.msra.mxu0 %v2969
          %3235 = vmatpush.bf16.msra.mxu0 %v2968
          %3236 = vmatmul.bf16.gmra.mxu0 %v2600
          %v3237 = vpop.f32.mrf.mxu0
          %v3238 = vadd.f32 %v3189, %v3237
          %v3239 = vpop.f32.mrf.mxu0
          %v3240 = vadd.f32 %v3191, %v3239
          %3241 = vmatmul.bf16.gmra.mxu0 %v2606
          %v3242 = vpop.f32.mrf.mxu0
          %v3243 = vadd.f32 %v3194, %v3242
          %v3244 = vpop.f32.mrf.mxu0
          %v3245 = vadd.f32 %v3196, %v3244
          %3246 = vmatmul.bf16.gmra.mxu0 %v2612
          %v3247 = vpop.f32.mrf.mxu0
          %v3248 = vadd.f32 %v3199, %v3247
          %v3249 = vpop.f32.mrf.mxu0
          %v3250 = vadd.f32 %v3201, %v3249
          %3251 = vmatmul.bf16.gmra.mxu0 %v2618
          %v3252 = vpop.f32.mrf.mxu0
          %v3253 = vadd.f32 %v3204, %v3252
          %v3254 = vpop.f32.mrf.mxu0
          %v3255 = vadd.f32 %v3206, %v3254
          %3256 = vmatmul.bf16.gmra.mxu0 %v2624
          %v3257 = vpop.f32.mrf.mxu0
          %v3258 = vadd.f32 %v3209, %v3257
          %v3259 = vpop.f32.mrf.mxu0
          %v3260 = vadd.f32 %v3211, %v3259
          %3261 = vmatmul.bf16.gmra.mxu0 %v2630
          %v3262 = vpop.f32.mrf.mxu0
          %v3263 = vadd.f32 %v3214, %v3262
          %v3264 = vpop.f32.mrf.mxu0
          %v3265 = vadd.f32 %v3216, %v3264
          %3266 = vmatmul.bf16.gmra.mxu0 %v2636
          %v3267 = vpop.f32.mrf.mxu0
          %v3268 = vadd.f32 %v3219, %v3267
          %v3269 = vpop.f32.mrf.mxu0
          %v3270 = vadd.f32 %v3221, %v3269
          %3271 = vmatmul.bf16.gmra.mxu0 %v2642
          %v3272 = vpop.f32.mrf.mxu0
          %v3273 = vadd.f32 %v3224, %v3272
          %v3274 = vpop.f32.mrf.mxu0
          %v3275 = vadd.f32 %v3226, %v3274
          %3276 = vdwg.mxu0
          %3277 = vmatpush.bf16.msra.mxu0 %v2983
          %3278 = vmatpush.bf16.msra.mxu0 %v2982
          %3279 = vmatpush.bf16.msra.mxu0 %v2981
          %3280 = vmatpush.bf16.msra.mxu0 %v2980
          %3281 = vmatpush.bf16.msra.mxu0 %v2979
          %3282 = vmatpush.bf16.msra.mxu0 %v2978
          %3283 = vmatpush.bf16.msra.mxu0 %v2977
          %3284 = vmatpush.bf16.msra.mxu0 %v2976
          %3285 = vmatmul.bf16.gmra.mxu0 %v2601
          %v3286 = vpop.f32.mrf.mxu0
          %v3287 = vadd.f32 %v3238, %v3286
          %v3288 = vpop.f32.mrf.mxu0
          %v3289 = vadd.f32 %v3240, %v3288
          %3290 = vmatmul.bf16.gmra.mxu0 %v2607
          %v3291 = vpop.f32.mrf.mxu0
          %v3292 = vadd.f32 %v3243, %v3291
          %v3293 = vpop.f32.mrf.mxu0
          %v3294 = vadd.f32 %v3245, %v3293
          %3295 = vmatmul.bf16.gmra.mxu0 %v2613
          %v3296 = vpop.f32.mrf.mxu0
          %v3297 = vadd.f32 %v3248, %v3296
          %v3298 = vpop.f32.mrf.mxu0
          %v3299 = vadd.f32 %v3250, %v3298
          %3300 = vmatmul.bf16.gmra.mxu0 %v2619
          %v3301 = vpop.f32.mrf.mxu0
          %v3302 = vadd.f32 %v3253, %v3301
          %v3303 = vpop.f32.mrf.mxu0
          %v3304 = vadd.f32 %v3255, %v3303
          %3305 = vmatmul.bf16.gmra.mxu0 %v2625
          %v3306 = vpop.f32.mrf.mxu0
          %v3307 = vadd.f32 %v3258, %v3306
          %v3308 = vpop.f32.mrf.mxu0
          %v3309 = vadd.f32 %v3260, %v3308
          %3310 = vmatmul.bf16.gmra.mxu0 %v2631
          %v3311 = vpop.f32.mrf.mxu0
          %v3312 = vadd.f32 %v3263, %v3311
          %v3313 = vpop.f32.mrf.mxu0
          %v3314 = vadd.f32 %v3265, %v3313
          %3315 = vmatmul.bf16.gmra.mxu0 %v2637
          %v3316 = vpop.f32.mrf.mxu0
          %v3317 = vadd.f32 %v3268, %v3316
          %v3318 = vpop.f32.mrf.mxu0
          %v3319 = vadd.f32 %v3270, %v3318
          %3320 = vmatmul.bf16.gmra.mxu0 %v2643
          %v3321 = vpop.f32.mrf.mxu0
          %v3322 = vadd.f32 %v3273, %v3321
          %v3323 = vpop.f32.mrf.mxu0
          %v3324 = vadd.f32 %v3275, %v3323
          %3325 = vdwg.mxu0
          %vm3326 = vcmp.ge.f32.partialorder %v3287, 0.0
          %vm3327 = vcmp.ge.f32.partialorder %v3289, 0.0
          %vm3328 = vcmp.ge.f32.partialorder %v3292, 0.0
          %vm3329 = vcmp.ge.f32.partialorder %v3294, 0.0
          %vm3330 = vcmp.ge.f32.partialorder %v3297, 0.0
          %vm3331 = vcmp.ge.f32.partialorder %v3299, 0.0
          %vm3332 = vcmp.ge.f32.partialorder %v3302, 0.0
          %vm3333 = vcmp.ge.f32.partialorder %v3304, 0.0
          %vm3334 = vcmp.ge.f32.partialorder %v3307, 0.0
          %vm3335 = vcmp.ge.f32.partialorder %v3309, 0.0
          %vm3336 = vcmp.ge.f32.partialorder %v3312, 0.0
          %vm3337 = vcmp.ge.f32.partialorder %v3314, 0.0
          %vm3338 = vcmp.ge.f32.partialorder %v3317, 0.0
          %vm3339 = vcmp.ge.f32.partialorder %v3319, 0.0
          %vm3340 = vcmp.ge.f32.partialorder %v3322, 0.0
          %vm3341 = vcmp.ge.f32.partialorder %v3324, 0.0
          %v3342 = vmul.f32 %v3287, 0.01
          %v3343 = vmul.f32 %v3289, 0.01
          %v3344 = vmul.f32 %v3292, 0.01
          %v3345 = vmul.f32 %v3294, 0.01
          %v3346 = vmul.f32 %v3297, 0.01
          %v3347 = vmul.f32 %v3299, 0.01
          %v3348 = vmul.f32 %v3302, 0.01
          %v3349 = vmul.f32 %v3304, 0.01
          %v3350 = vmul.f32 %v3307, 0.01
          %v3351 = vmul.f32 %v3309, 0.01
          %v3352 = vmul.f32 %v3312, 0.01
          %v3353 = vmul.f32 %v3314, 0.01
          %v3354 = vmul.f32 %v3317, 0.01
          %v3355 = vmul.f32 %v3319, 0.01
          %v3356 = vmul.f32 %v3322, 0.01
          %v3357 = vmul.f32 %v3324, 0.01
          %v3358 = vsel %vm3326, %v3287, %v3342
          %v3359 = vsel %vm3327, %v3289, %v3343
          %v3360 = vsel %vm3328, %v3292, %v3344
          %v3361 = vsel %vm3329, %v3294, %v3345
          %v3362 = vsel %vm3330, %v3297, %v3346
          %v3363 = vsel %vm3331, %v3299, %v3347
          %v3364 = vsel %vm3332, %v3302, %v3348
          %v3365 = vsel %vm3333, %v3304, %v3349
          %v3366 = vsel %vm3334, %v3307, %v3350
          %v3367 = vsel %vm3335, %v3309, %v3351
          %v3368 = vsel %vm3336, %v3312, %v3352
          %v3369 = vsel %vm3337, %v3314, %v3353
          %v3370 = vsel %vm3338, %v3317, %v3354
          %v3371 = vsel %vm3339, %v3319, %v3355
          %v3372 = vsel %vm3340, %v3322, %v3356
          %v3373 = vsel %vm3341, %v3324, %v3357
          %v3374 = vadd.f32 %v2484, %v3358
          %v3375 = vadd.f32 %v2485, %v3359
          %v3376 = vadd.f32 %v2486, %v3360
          %v3377 = vadd.f32 %v2487, %v3361
          %v3378 = vadd.f32 %v2488, %v3362
          %v3379 = vadd.f32 %v2489, %v3363
          %v3380 = vadd.f32 %v2490, %v3364
          %v3381 = vadd.f32 %v2491, %v3365
          %v3382 = vadd.f32 %v2492, %v3366
          %v3383 = vadd.f32 %v2493, %v3367
          %v3384 = vadd.f32 %v2494, %v3368
          %v3385 = vadd.f32 %v2495, %v3369
          %v3386 = vadd.f32 %v2496, %v3370
          %v3387 = vadd.f32 %v2497, %v3371
          %v3388 = vadd.f32 %v2498, %v3372
          %v3389 = vadd.f32 %v2499, %v3373
          %v3390 = vmul.f32 %v3374, %v3374
          %v3391 = vmul.f32 %v3375, %v3375
          %v3392 = vmul.f32 %v3376, %v3376
          %v3393 = vmul.f32 %v3377, %v3377
          %v3394 = vmul.f32 %v3378, %v3378
          %v3395 = vmul.f32 %v3379, %v3379
          %v3396 = vmul.f32 %v3380, %v3380
          %v3397 = vmul.f32 %v3381, %v3381
          %v3398 = vmul.f32 %v3382, %v3382
          %v3399 = vmul.f32 %v3383, %v3383
          %v3400 = vmul.f32 %v3384, %v3384
          %v3401 = vmul.f32 %v3385, %v3385
          %v3402 = vmul.f32 %v3386, %v3386
          %v3403 = vmul.f32 %v3387, %v3387
          %v3404 = vmul.f32 %v3388, %v3388
          %v3405 = vmul.f32 %v3389, %v3389
          %3406 = vadd.xlane.f32.xlu0 %v3390
          %v3407 = vpop.xlane.xlu0 %3406
          %3408 = vadd.xlane.f32.xlu0 %v3391
          %v3409 = vpop.xlane.xlu0 %3408
          %3410 = vadd.xlane.f32.xlu0 %v3392
          %v3411 = vpop.xlane.xlu0 %3410
          %3412 = vadd.xlane.f32.xlu0 %v3393
          %v3413 = vpop.xlane.xlu0 %3412
          %3414 = vadd.xlane.f32.xlu0 %v3394
          %v3415 = vpop.xlane.xlu0 %3414
          %3416 = vadd.xlane.f32.xlu0 %v3395
          %v3417 = vpop.xlane.xlu0 %3416
          %3418 = vadd.xlane.f32.xlu0 %v3396
          %v3419 = vpop.xlane.xlu0 %3418
          %3420 = vadd.xlane.f32.xlu0 %v3397
          %v3421 = vpop.xlane.xlu0 %3420
          %3422 = vadd.xlane.f32.xlu0 %v3398
          %v3423 = vpop.xlane.xlu0 %3422
          %3424 = vadd.xlane.f32.xlu0 %v3399
          %v3425 = vpop.xlane.xlu0 %3424
          %3426 = vadd.xlane.f32.xlu0 %v3400
          %v3427 = vpop.xlane.xlu0 %3426
          %3428 = vadd.xlane.f32.xlu0 %v3401
          %v3429 = vpop.xlane.xlu0 %3428
          %3430 = vadd.xlane.f32.xlu0 %v3402
          %v3431 = vpop.xlane.xlu0 %3430
          %3432 = vadd.xlane.f32.xlu0 %v3403
          %v3433 = vpop.xlane.xlu0 %3432
          %3434 = vadd.xlane.f32.xlu0 %v3404
          %v3435 = vpop.xlane.xlu0 %3434
          %3436 = vadd.xlane.f32.xlu0 %v3405
          %v3437 = vpop.xlane.xlu0 %3436
          %v3438 = vmax.f32 %v3407, 1e-24
          %v3439 = vmax.f32 %v3409, 1e-24
          %v3440 = vmax.f32 %v3411, 1e-24
          %v3441 = vmax.f32 %v3413, 1e-24
          %v3442 = vmax.f32 %v3415, 1e-24
          %v3443 = vmax.f32 %v3417, 1e-24
          %v3444 = vmax.f32 %v3419, 1e-24
          %v3445 = vmax.f32 %v3421, 1e-24
          %v3446 = vmax.f32 %v3423, 1e-24
          %v3447 = vmax.f32 %v3425, 1e-24
          %v3448 = vmax.f32 %v3427, 1e-24
          %v3449 = vmax.f32 %v3429, 1e-24
          %v3450 = vmax.f32 %v3431, 1e-24
          %v3451 = vmax.f32 %v3433, 1e-24
          %v3452 = vmax.f32 %v3435, 1e-24
          %v3453 = vmax.f32 %v3437, 1e-24
          %v3454 = vrsqrt.pop %v3438
          %v3455 = vmul.f32 %v3454, %v3438
          %v3456 = vmul.f32 %v3455, %v3454
          %v3457 = vmul.f32 0.5, %v3456
          %v3458 = vsub.f32 1.5, %v3457
          %v3459 = vmul.f32 %v3454, %v3458
          %vm3460 = vweird.f32 %v3438
          %vm3461 = vweird.f32 %v3454
          %vm3462 = vmor %vm3460, %vm3461
          %v3463 = vsel %vm3462, %v3454, %v3459
          %v3464 = vrsqrt.pop %v3439
          %v3465 = vmul.f32 %v3464, %v3439
          %v3466 = vmul.f32 %v3465, %v3464
          %v3467 = vmul.f32 0.5, %v3466
          %v3468 = vsub.f32 1.5, %v3467
          %v3469 = vmul.f32 %v3464, %v3468
          %vm3470 = vweird.f32 %v3439
          %vm3471 = vweird.f32 %v3464
          %vm3472 = vmor %vm3470, %vm3471
          %v3473 = vsel %vm3472, %v3464, %v3469
          %v3474 = vrsqrt.pop %v3440
          %v3475 = vmul.f32 %v3474, %v3440
          %v3476 = vmul.f32 %v3475, %v3474
          %v3477 = vmul.f32 0.5, %v3476
          %v3478 = vsub.f32 1.5, %v3477
          %v3479 = vmul.f32 %v3474, %v3478
          %vm3480 = vweird.f32 %v3440
          %vm3481 = vweird.f32 %v3474
          %vm3482 = vmor %vm3480, %vm3481
          %v3483 = vsel %vm3482, %v3474, %v3479
          %v3484 = vrsqrt.pop %v3441
          %v3485 = vmul.f32 %v3484, %v3441
          %v3486 = vmul.f32 %v3485, %v3484
          %v3487 = vmul.f32 0.5, %v3486
          %v3488 = vsub.f32 1.5, %v3487
          %v3489 = vmul.f32 %v3484, %v3488
          %vm3490 = vweird.f32 %v3441
          %vm3491 = vweird.f32 %v3484
          %vm3492 = vmor %vm3490, %vm3491
          %v3493 = vsel %vm3492, %v3484, %v3489
          %v3494 = vrsqrt.pop %v3442
          %v3495 = vmul.f32 %v3494, %v3442
          %v3496 = vmul.f32 %v3495, %v3494
          %v3497 = vmul.f32 0.5, %v3496
          %v3498 = vsub.f32 1.5, %v3497
          %v3499 = vmul.f32 %v3494, %v3498
          %vm3500 = vweird.f32 %v3442
          %vm3501 = vweird.f32 %v3494
          %vm3502 = vmor %vm3500, %vm3501
          %v3503 = vsel %vm3502, %v3494, %v3499
          %v3504 = vrsqrt.pop %v3443
          %v3505 = vmul.f32 %v3504, %v3443
          %v3506 = vmul.f32 %v3505, %v3504
          %v3507 = vmul.f32 0.5, %v3506
          %v3508 = vsub.f32 1.5, %v3507
          %v3509 = vmul.f32 %v3504, %v3508
          %vm3510 = vweird.f32 %v3443
          %vm3511 = vweird.f32 %v3504
          %vm3512 = vmor %vm3510, %vm3511
          %v3513 = vsel %vm3512, %v3504, %v3509
          %v3514 = vrsqrt.pop %v3444
          %v3515 = vmul.f32 %v3514, %v3444
          %v3516 = vmul.f32 %v3515, %v3514
          %v3517 = vmul.f32 0.5, %v3516
          %v3518 = vsub.f32 1.5, %v3517
          %v3519 = vmul.f32 %v3514, %v3518
          %vm3520 = vweird.f32 %v3444
          %vm3521 = vweird.f32 %v3514
          %vm3522 = vmor %vm3520, %vm3521
          %v3523 = vsel %vm3522, %v3514, %v3519
          %v3524 = vrsqrt.pop %v3445
          %v3525 = vmul.f32 %v3524, %v3445
          %v3526 = vmul.f32 %v3525, %v3524
          %v3527 = vmul.f32 0.5, %v3526
          %v3528 = vsub.f32 1.5, %v3527
          %v3529 = vmul.f32 %v3524, %v3528
          %vm3530 = vweird.f32 %v3445
          %vm3531 = vweird.f32 %v3524
          %vm3532 = vmor %vm3530, %vm3531
          %v3533 = vsel %vm3532, %v3524, %v3529
          %v3534 = vrsqrt.pop %v3446
          %v3535 = vmul.f32 %v3534, %v3446
          %v3536 = vmul.f32 %v3535, %v3534
          %v3537 = vmul.f32 0.5, %v3536
          %v3538 = vsub.f32 1.5, %v3537
          %v3539 = vmul.f32 %v3534, %v3538
          %vm3540 = vweird.f32 %v3446
          %vm3541 = vweird.f32 %v3534
          %vm3542 = vmor %vm3540, %vm3541
          %v3543 = vsel %vm3542, %v3534, %v3539
          %v3544 = vrsqrt.pop %v3447
          %v3545 = vmul.f32 %v3544, %v3447
          %v3546 = vmul.f32 %v3545, %v3544
          %v3547 = vmul.f32 0.5, %v3546
          %v3548 = vsub.f32 1.5, %v3547
          %v3549 = vmul.f32 %v3544, %v3548
          %vm3550 = vweird.f32 %v3447
          %vm3551 = vweird.f32 %v3544
          %vm3552 = vmor %vm3550, %vm3551
          %v3553 = vsel %vm3552, %v3544, %v3549
          %v3554 = vrsqrt.pop %v3448
          %v3555 = vmul.f32 %v3554, %v3448
          %v3556 = vmul.f32 %v3555, %v3554
          %v3557 = vmul.f32 0.5, %v3556
          %v3558 = vsub.f32 1.5, %v3557
          %v3559 = vmul.f32 %v3554, %v3558
          %vm3560 = vweird.f32 %v3448
          %vm3561 = vweird.f32 %v3554
          %vm3562 = vmor %vm3560, %vm3561
          %v3563 = vsel %vm3562, %v3554, %v3559
          %v3564 = vrsqrt.pop %v3449
          %v3565 = vmul.f32 %v3564, %v3449
          %v3566 = vmul.f32 %v3565, %v3564
          %v3567 = vmul.f32 0.5, %v3566
          %v3568 = vsub.f32 1.5, %v3567
          %v3569 = vmul.f32 %v3564, %v3568
          %vm3570 = vweird.f32 %v3449
          %vm3571 = vweird.f32 %v3564
          %vm3572 = vmor %vm3570, %vm3571
          %v3573 = vsel %vm3572, %v3564, %v3569
          %v3574 = vrsqrt.pop %v3450
          %v3575 = vmul.f32 %v3574, %v3450
          %v3576 = vmul.f32 %v3575, %v3574
          %v3577 = vmul.f32 0.5, %v3576
          %v3578 = vsub.f32 1.5, %v3577
          %v3579 = vmul.f32 %v3574, %v3578
          %vm3580 = vweird.f32 %v3450
          %vm3581 = vweird.f32 %v3574
          %vm3582 = vmor %vm3580, %vm3581
          %v3583 = vsel %vm3582, %v3574, %v3579
          %v3584 = vrsqrt.pop %v3451
          %v3585 = vmul.f32 %v3584, %v3451
          %v3586 = vmul.f32 %v3585, %v3584
          %v3587 = vmul.f32 0.5, %v3586
          %v3588 = vsub.f32 1.5, %v3587
          %v3589 = vmul.f32 %v3584, %v3588
          %vm3590 = vweird.f32 %v3451
          %vm3591 = vweird.f32 %v3584
          %vm3592 = vmor %vm3590, %vm3591
          %v3593 = vsel %vm3592, %v3584, %v3589
          %v3594 = vrsqrt.pop %v3452
          %v3595 = vmul.f32 %v3594, %v3452
          %v3596 = vmul.f32 %v3595, %v3594
          %v3597 = vmul.f32 0.5, %v3596
          %v3598 = vsub.f32 1.5, %v3597
          %v3599 = vmul.f32 %v3594, %v3598
          %vm3600 = vweird.f32 %v3452
          %vm3601 = vweird.f32 %v3594
          %vm3602 = vmor %vm3600, %vm3601
          %v3603 = vsel %vm3602, %v3594, %v3599
          %v3604 = vrsqrt.pop %v3453
          %v3605 = vmul.f32 %v3604, %v3453
          %v3606 = vmul.f32 %v3605, %v3604
          %v3607 = vmul.f32 0.5, %v3606
          %v3608 = vsub.f32 1.5, %v3607
          %v3609 = vmul.f32 %v3604, %v3608
          %vm3610 = vweird.f32 %v3453
          %vm3611 = vweird.f32 %v3604
          %vm3612 = vmor %vm3610, %vm3611
          %v3613 = vsel %vm3612, %v3604, %v3609
          %3614 = vst [vmem:[%s484] sm:$0xff] %v3374
          %3615 = vst [vmem:[%s484 + $0x8] sm:$0xff] %v3375
          %3616 = vst [vmem:[%s484 + $0x10] sm:$0xff] %v3376
          %3617 = vst [vmem:[%s484 + $0x18] sm:$0xff] %v3377
          %3618 = vst [vmem:[%s484 + $0x20] sm:$0xff] %v3378
          %3619 = vst [vmem:[%s484 + $0x28] sm:$0xff] %v3379
          %3620 = vst [vmem:[%s484 + $0x30] sm:$0xff] %v3380
          %3621 = vst [vmem:[%s484 + $0x38] sm:$0xff] %v3381
          %3622 = vst [vmem:[%s484 + $0x40] sm:$0xff] %v3382
          %3623 = vst [vmem:[%s484 + $0x48] sm:$0xff] %v3383
          %3624 = vst [vmem:[%s484 + $0x50] sm:$0xff] %v3384
          %3625 = vst [vmem:[%s484 + $0x58] sm:$0xff] %v3385
          %3626 = vst [vmem:[%s484 + $0x60] sm:$0xff] %v3386
          %3627 = vst [vmem:[%s484 + $0x68] sm:$0xff] %v3387
          %3628 = vst [vmem:[%s484 + $0x70] sm:$0xff] %v3388
          %3629 = vst [vmem:[%s484 + $0x78] sm:$0xff] %v3389
          %v3630 = vmul.f32 %v3374, %v3463
          %v3631 = vmul.f32 %v3375, %v3473
          %v3632 = vmul.f32 %v3376, %v3483
          %v3633 = vmul.f32 %v3377, %v3493
          %v3634 = vmul.f32 %v3378, %v3503
          %v3635 = vmul.f32 %v3379, %v3513
          %v3636 = vmul.f32 %v3380, %v3523
          %v3637 = vmul.f32 %v3381, %v3533
          %v3638 = vmul.f32 %v3382, %v3543
          %v3639 = vmul.f32 %v3383, %v3553
          %v3640 = vmul.f32 %v3384, %v3563
          %v3641 = vmul.f32 %v3385, %v3573
          %v3642 = vmul.f32 %v3386, %v3583
          %v3643 = vmul.f32 %v3387, %v3593
          %v3644 = vmul.f32 %v3388, %v3603
          %v3645 = vmul.f32 %v3389, %v3613
          %3646 = vst [vmem:[%s490] sm:$0xff] %v3630
          %3647 = vst [vmem:[%s490 + $0x8] sm:$0xff] %v3631
          %3648 = vst [vmem:[%s490 + $0x10] sm:$0xff] %v3632
          %3649 = vst [vmem:[%s490 + $0x18] sm:$0xff] %v3633
          %3650 = vst [vmem:[%s490 + $0x20] sm:$0xff] %v3634
          %3651 = vst [vmem:[%s490 + $0x28] sm:$0xff] %v3635
          %3652 = vst [vmem:[%s490 + $0x30] sm:$0xff] %v3636
          %3653 = vst [vmem:[%s490 + $0x38] sm:$0xff] %v3637
          %3654 = vst [vmem:[%s490 + $0x40] sm:$0xff] %v3638
          %3655 = vst [vmem:[%s490 + $0x48] sm:$0xff] %v3639
          %3656 = vst [vmem:[%s490 + $0x50] sm:$0xff] %v3640
          %3657 = vst [vmem:[%s490 + $0x58] sm:$0xff] %v3641
          %3658 = vst [vmem:[%s490 + $0x60] sm:$0xff] %v3642
          %3659 = vst [vmem:[%s490 + $0x68] sm:$0xff] %v3643
          %3660 = vst [vmem:[%s490 + $0x70] sm:$0xff] %v3644
          %3661 = vst [vmem:[%s490 + $0x78] sm:$0xff] %v3645
        $region97: #{ngcf_forward.2} parent=84 // pred_fallthru
          _
        %s3662 = smul.u32 16, %s24
        %p3663 = scmp.lt.s32.totalorder %s3662, 63
        %s3664 = scalar_select %p3663, %s3662, 63
        %s3665 = smul.addr %s3664, 8
        %s3666 = scalar_lea.vmem %s7, %s3665
        %s3667 = smul.u32 16, %s24
        %p3668 = scmp.lt.s32.totalorder %s3667, 63
        %s3669 = scalar_select %p3668, %s3667, 63
        %s3670 = smul.addr %s3669, 8
        %s3671 = scalar_lea.vmem %s8, %s3670
        // Predicated region
        $region98: #{ngcf_forward.2} parent=84 // pred_check
          %p3672 = pneg %p214
        $region99: #{ngcf_forward.2} parent=84 // pred_check_branch
          %3674 = sbr.rel (%p3672) target = $region101
        $region100: #{ngcf_forward.2} parent=84 // pred_region
          %s3675 = smul.u32 16, %s24
        $region101: #{ngcf_forward.2} parent=84 // pred_fallthru
          _
        // Predicated region
        $region102: #{ngcf_forward.2} parent=84 // pred_check
          %p3676 = pneg %p240
        $region103: #{ngcf_forward.2} parent=84 // pred_check_branch
          %3678 = sbr.rel (%p3676) target = $region105
        $region104: #{ngcf_forward.2} parent=84 // pred_region
          %s3679 = smul.u32 16, %s24
        $region105: #{ngcf_forward.2} parent=84 // pred_fallthru
          _
      $region85: #{ngcf_forward.2} parent=5 // pred_fallthru
        _
      %p3680 = scmp.le.s32.totalorder 2, %s15
      // Predicated region
      $region106: #{ngcf_forward.2} parent=5 // pred_check
        %p3681 = pneg %p3680
      $region107: #{ngcf_forward.2} parent=5 // pred_check_branch
        %3683 = sbr.rel (%p3681) target = $region109
      $region108: #{ngcf_forward.2} parent=5 // pred_region
        %s3684 = ssub.s32 %s15, 2
        // Predicated region
        $region110: #{ngcf_forward.2} parent=108 // pred_check
          %p3685 = pneg %p220
        $region111: #{ngcf_forward.2} parent=108 // pred_check_branch
          %3687 = sbr.rel (%p3685) target = $region113
        $region112: #{ngcf_forward.2} parent=108 // pred_region
          %s3688 = smul.u32 16, %s26
          %p3689 = scmp.lt.s32.totalorder %s3688, 63
          %s3690 = scalar_select %p3689, %s3688, 63
          %s3691 = smul.addr %s3690, 8
          %s3692 = scalar_lea.vmem %s7, %s3691
        $region113: #{ngcf_forward.2} parent=108 // pred_fallthru
          _
        // Predicated region
        $region114: #{ngcf_forward.2} parent=108 // pred_check
          %p3693 = pneg %p246
        $region115: #{ngcf_forward.2} parent=108 // pred_check_branch
          %3695 = sbr.rel (%p3693) target = $region117
        $region116: #{ngcf_forward.2} parent=108 // pred_region
          %s3696 = smul.u32 16, %s26
          %p3697 = scmp.lt.s32.totalorder %s3696, 63
          %s3698 = scalar_select %p3697, %s3696, 63
          %s3699 = smul.addr %s3698, 8
          %s3700 = scalar_lea.vmem %s8, %s3699
        $region117: #{ngcf_forward.2} parent=108 // pred_fallthru
          _
      $region109: #{ngcf_forward.2} parent=5 // pred_fallthru
        _
    $region6: #{ngcf_forward.2} parent=1 // loop_footer
      %s19 = sadd.s32 1, %s15
    $region7: #{ngcf_forward.2} parent=1 // loop_footer_branch
      %14 = sbr.rel target = $region3
    $region8: #{ngcf_forward.2} parent=1 // loop_exit
      _

</llo_original>
